<compile_context>
chip_gen: v7x
topology: tpu7x:2x2x1
jax: 0.10.0
libtpu: 0.0.40
codegen_flags: <defaults>
</compile_context>

<pallas_src>
import jax
import jax.numpy as jnp
from jax.experimental import pallas as pl
from jax.experimental.pallas import tpu as pltpu

DROPOUT = 0.0
HIDDEN_DIM_GCN_CRITIC = 32
LINEAR_CRITIC_Q1 = [256, 256]
LINEAR_CRITIC_Q2 = [256, 256]

Q_LANES = 128   # lane-dense output width (column 0 = q1, column 1 = q2)


def _round_up(n, m):
    return (n + m - 1) // m * m


def _cdiv(a, b):
    return -(-a // b)


# ----------------------------------------------------------------------------
# Kernel: one grid step = one batch tile.  Five MXU matmuls, twin heads fused.
# ----------------------------------------------------------------------------
def _critic_kernel(x_ref, act_ref,
                   m1_ref, b1_ref, m2_ref, b2_ref,
                   wg_ref, wa_ref, bl1_ref,
                   wl2_ref, bl2_ref, wl3_ref, bl3_ref,
                   q_ref):
    f32 = jnp.float32
    x = x_ref[...]          # (bt, J*F)   compute dtype
    act = act_ref[...]      # (bt, A)     compute dtype

    m1 = m1_ref[...]
    m2 = m2_ref[...]
    wg = wg_ref[...]
    wa = wa_ref[...]
    wl2 = wl2_ref[...]
    wl3 = wl3_ref[...]
    cdt = m1.dtype

    # GCN layer 1 (adj folded into m1):   (bt, J*F) @ (J*F, J*2H)
    s = jnp.dot(x, m1, preferred_element_type=f32) + b1_ref[...]
    s = jnp.maximum(s, 0.0)

    # GCN layer 2 (adj folded into m2):   (bt, J*2H) @ (J*2H, J*2H)
    h = jnp.dot(s.astype(cdt), m2, preferred_element_type=f32) + b2_ref[...]
    h = jnp.maximum(h, 0.0)

    # Head linear 1: split matmul over [flatten(gcn) | action], heads fused on N.
    # TODO(synk): low priority — fold the K=A action matmul into wg to save one
    # MXU push / DMA stream per step.
    z = (jnp.dot(h.astype(cdt), wg, preferred_element_type=f32)
         + jnp.dot(act, wa, preferred_element_type=f32)
         + bl1_ref[...])
    z = jnp.maximum(z, 0.0)

    # Head linear 2 (block-diagonal across the two heads).
    z = jnp.dot(z.astype(cdt), wl2, preferred_element_type=f32) + bl2_ref[...]
    z = jnp.maximum(z, 0.0)

    # Head linear 3 -> (bt, 128): column 0 = q1, column 1 = q2, rest zero.
    q = jnp.dot(z.astype(cdt), wl3, preferred_element_type=f32) + bl3_ref[...]
    q_ref[...] = q.astype(q_ref.dtype)


# ----------------------------------------------------------------------------
# Host-side weight packing: fold adj into the GCN weights and fuse the two Q
# heads along the output (N) dimension.  Pure XLA, run once per call.
# ----------------------------------------------------------------------------
def _pack_weights(params, adj, num_joint, feature_dim, action_dim, compute_dtype):
    H = HIDDEN_DIM_GCN_CRITIC
    J, F = num_joint, feature_dim
    H2 = 2 * H
    JH = J * H
    d11, d12 = LINEAR_CRITIC_Q1
    d21, d22 = LINEAR_CRITIC_Q2
    p1, p2 = params["q1"], params["q2"]
    adj = adj.astype(jnp.float32)

    # GCN layer 1: M1[(k,f),(j,hh)] = adj[j,k] * [gw1_q1 | gw1_q2][f,hh]
    w1cat = jnp.concatenate([p1["gw1"], p2["gw1"]], axis=1)            # (F, 2H)
    m1 = jnp.einsum("jk,fh->kfjh", adj, w1cat).reshape(J * F, J * H2)
    b1 = jnp.tile(jnp.concatenate([p1["gb1"], p2["gb1"]], axis=1), (1, J))

    # GCN layer 2: block-diag over heads, adj folded in the same way.
    w2bd = jnp.block([[p1["gw2"], jnp.zeros((H, H), jnp.float32)],
                      [jnp.zeros((H, H), jnp.float32), p2["gw2"]]])    # (2H, 2H)
    m2 = jnp.einsum("jk,gh->kgjh", adj, w2bd).reshape(J * H2, J * H2)
    b2 = jnp.tile(jnp.concatenate([p1["gb2"], p2["gb2"]], axis=1), (1, J))

    # Head linear 1 over concat([flatten(gcn), action]); heads fused along N.
    wg1 = p1["w1"][:JH].reshape(J, H, d11)
    wg2 = p2["w1"][:JH].reshape(J, H, d21)
    wg = jnp.zeros((J, H2, d11 + d21), jnp.float32)
    wg = wg.at[:, :H, :d11].set(wg1)
    wg = wg.at[:, H:, d11:].set(wg2)
    wg = wg.reshape(J * H2, d11 + d21)
    wa = jnp.concatenate([p1["w1"][JH:], p2["w1"][JH:]], axis=1)       # (A, d11+d21)
    bl1 = jnp.concatenate([p1["b1"], p2["b1"]], axis=1)

    # Head linear 2 (block-diagonal).
    wl2 = jnp.block([[p1["w2"], jnp.zeros((d11, d22), jnp.float32)],
                     [jnp.zeros((d21, d12), jnp.float32), p2["w2"]]])  # (512, 512)
    bl2 = jnp.concatenate([p1["b2"], p2["b2"]], axis=1)

    # Head linear 3, padded to 128 lanes so the output store is lane-dense.
    wl3 = jnp.zeros((d12 + d22, Q_LANES), jnp.float32)
    wl3 = wl3.at[:d12, 0].set(p1["w3"][:, 0])
    wl3 = wl3.at[d12:, 1].set(p2["w3"][:, 0])
    bl3 = jnp.zeros((1, Q_LANES), jnp.float32)
    bl3 = bl3.at[0, 0].set(p1["b3"][0, 0])
    bl3 = bl3.at[0, 1].set(p2["b3"][0, 0])

    cast = lambda w: w.astype(compute_dtype)
    # Matmul operands in compute dtype; biases stay f32 (added to f32 accumulators).
    return [cast(m1), b1, cast(m2), b2, cast(wg), cast(wa), bl1,
            cast(wl2), bl2, cast(wl3), bl3]


def _const_spec(arr):
    # Grid-invariant block: fetched once; single-buffered (no block-index change).
    zeros = (0,) * arr.ndim
    return pl.BlockSpec(arr.shape, lambda i, _z=zeros: _z,
                        pipeline_mode=pl.Buffered(1))


def _choose_batch_tile(B, batch_tile, align):
    """Pick (bt, Bp): `align`-aligned tile, >=2 grid steps when the batch allows
    it (v7x megacore), padding waste bounded even when B is just past a tile
    boundary, 128-multiple tiles once batches are big enough to care."""
    full = _round_up(max(B, 1), align)
    batch_tile = _round_up(max(batch_tile, align), align)
    if full <= 2 * align:                       # tiny batch: one minimal tile
        return full, full
    n_steps = max(2, _cdiv(full, batch_tile))
    sub = 128 if full >= 1024 else align        # MXU-friendly for large tiles
    bt = min(_round_up(_cdiv(full, n_steps), sub), batch_tile)
    Bp = _round_up(full, bt)
    return bt, Bp


def _vmem_limit_bytes(weights, bt, jf, a, compute_dtype):
    itemsize = lambda dt: jnp.dtype(dt).itemsize
    wbytes = sum(int(w.size) * itemsize(w.dtype) for w in weights)
    cb = itemsize(compute_dtype)
    io = 2 * (bt * jf * cb + bt * a * cb + bt * Q_LANES * 4)   # double-buffered slabs
    widest = max(int(w.shape[-1]) for w in weights)
    interm = 8 * bt * widest * 4                               # f32 activation headroom
    need = 2 * wbytes + io + interm + (4 << 20)                # 2x weights: safe even if
                                                               # Buffered(1) were ignored
    return int(min(max(need, 32 << 20), 128 << 20))


def _critic_forward(params, x, adj, action, *, batch_tile=512,
                    compute_dtype=jnp.bfloat16):
    """Returns (q1, q2), each (B, 1) float32."""
    B, J, F = x.shape
    A = action.shape[1]
    weights = _pack_weights(params, adj, J, F, A, compute_dtype)

    # bf16 sublane packing wants 16-row alignment; f32 wants 8.
    align = max(8, 32 // jnp.dtype(compute_dtype).itemsize)
    bt, Bp = _choose_batch_tile(B, batch_tile, align)

    xf = x.reshape(B, J * F).astype(compute_dtype)
    af = action.astype(compute_dtype)
    if Bp != B:
        xf = jnp.pad(xf, ((0, Bp - B), (0, 0)))
        af = jnp.pad(af, ((0, Bp - B), (0, 0)))

    in_specs = [pl.BlockSpec((bt, J * F), lambda i: (i, 0)),
                pl.BlockSpec((bt, A), lambda i: (i, 0))]
    in_specs += [_const_spec(w) for w in weights]
    out_specs = pl.BlockSpec((bt, Q_LANES), lambda i: (i, 0))

    q = pl.pallas_call(
        _critic_kernel,
        out_shape=jax.ShapeDtypeStruct((Bp, Q_LANES), jnp.float32),
        grid=(Bp // bt,),
        in_specs=in_specs,
        out_specs=out_specs,
        compiler_params=pltpu.CompilerParams(
            dimension_semantics=("parallel",),
            vmem_limit_bytes=_vmem_limit_bytes(weights, bt, J * F, A,
                                               compute_dtype)),
    )(xf, af, *weights)
    q = q[:B]
    return q[:, 0:1], q[:, 1:2]


critic_forward = jax.jit(_critic_forward,
                         static_argnames=("batch_tile", "compute_dtype"))


# ----------------------------------------------------------------------------
# Deterministic parameter init (PyTorch nn.Linear style uniform(-1/sqrt(in), .))
# Weights stored as (in, out) so y = x @ W + b.
# ----------------------------------------------------------------------------
def init_params(key, num_joint, feature_dim, action_dim):
    H = HIDDEN_DIM_GCN_CRITIC
    JH = num_joint * H
    keys = iter(jax.random.split(key, 32))

    def linear(in_dim, out_dim):
        bound = float(in_dim) ** -0.5
        w = jax.random.uniform(next(keys), (in_dim, out_dim),
                               jnp.float32, -bound, bound)
        b = jax.random.uniform(next(keys), (1, out_dim),
                               jnp.float32, -bound, bound)
        return w, b

    params = {}
    for name, widths in (("q1", LINEAR_CRITIC_Q1), ("q2", LINEAR_CRITIC_Q2)):
        gw1, gb1 = linear(feature_dim, H)
        gw2, gb2 = linear(H, H)
        w1, b1 = linear(JH + action_dim, widths[0])
        w2, b2 = linear(widths[0], widths[1])
        w3, b3 = linear(widths[1], 1)
        params[name] = dict(gw1=gw1, gb1=gb1, gw2=gw2, gb2=gb2,
                            w1=w1, b1=b1, w2=w2, b2=b2, w3=w3, b3=b3)
    return params


# Pure-JAX reference (mirrors the PyTorch forward) for a correctness check.
def reference_forward(params, x, adj, action):
    B, J, _ = x.shape
    H = HIDDEN_DIM_GCN_CRITIC

    def one_head(p):
        ax = jnp.einsum("jk,bkf->bjf", adj, x)
        s = jax.nn.relu(ax @ p["gw1"] + p["gb1"])
        t = jax.nn.relu(jnp.einsum("jk,bkh->bjh", adj, s @ p["gw2"]) + p["gb2"])
        flat = t.reshape(B, J * H)
        z = jnp.concatenate([flat, action], axis=1)        # torch.cat(dim=1)
        z = jax.nn.relu(z @ p["w1"] + p["b1"])
        z = jax.nn.relu(z @ p["w2"] + p["b2"])
        return z @ p["w3"] + p["b3"]

    return one_head(params["q1"]), one_head(params["q2"])


if __name__ == "__main__":
    J, F, A = 8, 4, 6   # num_joint, feature_dim, action_dim
    key = jax.random.PRNGKey(0)
    kx, ka, kp, kx2, ka2 = jax.random.split(key, 5)
    params = init_params(kp, J, F, A)
    adj = jnp.eye(J, dtype=jnp.float32) + 0.1 * jnp.ones((J, J), jnp.float32)

    # Small batch, default bf16 operands (f32 accumulation) — loose tolerance.
    B = 2
    x = jax.random.normal(kx, (B, J, F), jnp.float32)
    action = jax.random.normal(ka, (B, A), jnp.float32)
    q1, q2 = critic_forward(params, x, adj, action)
    jax.block_until_ready((q1, q2))
    r1, r2 = reference_forward(params, x, adj, action)
    assert q1.shape == (B, 1) and q2.shape == (B, 1)
    assert jnp.allclose(q1, r1, atol=1e-1, rtol=1e-1)
    assert jnp.allclose(q2, r2, atol=1e-1, rtol=1e-1)

    # Non-tile-aligned batch: exercises the multi-step grid + padded rows.
    B2 = 37
    x2 = jax.random.normal(kx2, (B2, J, F), jnp.float32)
    action2 = jax.random.normal(ka2, (B2, A), jnp.float32)

    # f32 operand path — tight check against the JAX reference.
    q1f, q2f = critic_forward(params, x2, adj, action2, compute_dtype=jnp.float32)
    jax.block_until_ready((q1f, q2f))
    r1f, r2f = reference_forward(params, x2, adj, action2)
    assert q1f.shape == (B2, 1) and q2f.shape == (B2, 1)
    assert jnp.allclose(q1f, r1f, atol=1e-3, rtol=1e-3)
    assert jnp.allclose(q2f, r2f, atol=1e-3, rtol=1e-3)

    # Default bf16 path on the same batch — validated against the f32 reference.
    q1b, q2b = critic_forward(params, x2, adj, action2)
    jax.block_until_ready((q1b, q2b))
    assert q1b.shape == (B2, 1) and q2b.shape == (B2, 1)
    assert jnp.allclose(q1b, r1f, atol=1e-1, rtol=1e-1)
    assert jnp.allclose(q2b, r2f, atol=1e-1, rtol=1e-1)

    print("KERNEL_OK")
</pallas_src>

<mosaic_0001>
module attributes {stable_mosaic.version = 11 : i64} {
  func.func @_critic_kernel(%arg0: i32, %arg1: memref<16x32xbf16, #tpu.memory_space<vmem>>, %arg2: memref<16x6xbf16, #tpu.memory_space<vmem>>, %arg3: memref<32x512xbf16, #tpu.memory_space<vmem>>, %arg4: memref<1x512xf32, #tpu.memory_space<vmem>>, %arg5: memref<512x512xbf16, #tpu.memory_space<vmem>>, %arg6: memref<1x512xf32, #tpu.memory_space<vmem>>, %arg7: memref<512x512xbf16, #tpu.memory_space<vmem>>, %arg8: memref<6x512xbf16, #tpu.memory_space<vmem>>, %arg9: memref<1x512xf32, #tpu.memory_space<vmem>>, %arg10: memref<512x512xbf16, #tpu.memory_space<vmem>>, %arg11: memref<1x512xf32, #tpu.memory_space<vmem>>, %arg12: memref<512x128xbf16, #tpu.memory_space<vmem>>, %arg13: memref<1x128xf32, #tpu.memory_space<vmem>>, %arg14: memref<16x128xf32, #tpu.memory_space<vmem>>) attributes {dimension_semantics = [#tpu.dimension_semantics<parallel>], iteration_bounds = array<i64: 1>, scalar_prefetch = 0 : i64, scratch_operands = 0 : i64, tpu.core_type = #tpu.core_type<tc>, window_params = [{transform_indices = @transform_0, window_bounds = array<i64: 16, 32>}, {transform_indices = @transform_1, window_bounds = array<i64: 16, 6>}, {pipeline_mode = #tpu.pipeline_mode<synchronous>, transform_indices = @transform_2, window_bounds = array<i64: 32, 512>}, {pipeline_mode = #tpu.pipeline_mode<synchronous>, transform_indices = @transform_3, window_bounds = array<i64: 1, 512>}, {pipeline_mode = #tpu.pipeline_mode<synchronous>, transform_indices = @transform_4, window_bounds = array<i64: 512, 512>}, {pipeline_mode = #tpu.pipeline_mode<synchronous>, transform_indices = @transform_5, window_bounds = array<i64: 1, 512>}, {pipeline_mode = #tpu.pipeline_mode<synchronous>, transform_indices = @transform_6, window_bounds = array<i64: 512, 512>}, {pipeline_mode = #tpu.pipeline_mode<synchronous>, transform_indices = @transform_7, window_bounds = array<i64: 6, 512>}, {pipeline_mode = #tpu.pipeline_mode<synchronous>, transform_indices = @transform_8, window_bounds = array<i64: 1, 512>}, {pipeline_mode = #tpu.pipeline_mode<synchronous>, transform_indices = @transform_9, window_bounds = array<i64: 512, 512>}, {pipeline_mode = #tpu.pipeline_mode<synchronous>, transform_indices = @transform_10, window_bounds = array<i64: 1, 512>}, {pipeline_mode = #tpu.pipeline_mode<synchronous>, transform_indices = @transform_11, window_bounds = array<i64: 512, 128>}, {pipeline_mode = #tpu.pipeline_mode<synchronous>, transform_indices = @transform_12, window_bounds = array<i64: 1, 128>}, {transform_indices = @transform_13, window_bounds = array<i64: 16, 128>}]} {
    %c0 = arith.constant 0 : index
    %c0_0 = arith.constant 0 : index
    %0 = vector.load %arg1[%c0, %c0_0] : memref<16x32xbf16, #tpu.memory_space<vmem>>, vector<16x32xbf16>
    %c0_1 = arith.constant 0 : index
    %c0_2 = arith.constant 0 : index
    %1 = vector.load %arg2[%c0_1, %c0_2] : memref<16x6xbf16, #tpu.memory_space<vmem>>, vector<16x6xbf16>
    %c0_3 = arith.constant 0 : index
    %c0_4 = arith.constant 0 : index
    %2 = vector.load %arg3[%c0_3, %c0_4] : memref<32x512xbf16, #tpu.memory_space<vmem>>, vector<32x512xbf16>
    %c0_5 = arith.constant 0 : index
    %c0_6 = arith.constant 0 : index
    %3 = vector.load %arg5[%c0_5, %c0_6] : memref<512x512xbf16, #tpu.memory_space<vmem>>, vector<512x512xbf16>
    %c0_7 = arith.constant 0 : index
    %c0_8 = arith.constant 0 : index
    %4 = vector.load %arg7[%c0_7, %c0_8] : memref<512x512xbf16, #tpu.memory_space<vmem>>, vector<512x512xbf16>
    %c0_9 = arith.constant 0 : index
    %c0_10 = arith.constant 0 : index
    %5 = vector.load %arg8[%c0_9, %c0_10] : memref<6x512xbf16, #tpu.memory_space<vmem>>, vector<6x512xbf16>
    %c0_11 = arith.constant 0 : index
    %c0_12 = arith.constant 0 : index
    %6 = vector.load %arg10[%c0_11, %c0_12] : memref<512x512xbf16, #tpu.memory_space<vmem>>, vector<512x512xbf16>
    %c0_13 = arith.constant 0 : index
    %c0_14 = arith.constant 0 : index
    %7 = vector.load %arg12[%c0_13, %c0_14] : memref<512x128xbf16, #tpu.memory_space<vmem>>, vector<512x128xbf16>
    %cst = arith.constant dense<0.000000e+00> : vector<16x512xf32>
    %8 = tpu.matmul %0, %2, %cst {dimension_numbers = #tpu.dot_dimension_numbers<[1], [0], [0], [1], [0, 0, 1, 1], [], []>} : vector<16x32xbf16>, vector<32x512xbf16>, vector<16x512xf32> -> vector<16x512xf32>
    %c0_15 = arith.constant 0 : index
    %c0_16 = arith.constant 0 : index
    %9 = vector.load %arg4[%c0_15, %c0_16] : memref<1x512xf32, #tpu.memory_space<vmem>>, vector<1x512xf32>
    %10 = vector.broadcast %9 : vector<1x512xf32> to vector<16x512xf32>
    %11 = arith.addf %8, %10 : vector<16x512xf32>
    %cst_17 = arith.constant 0.000000e+00 : f32
    %12 = vector.broadcast %cst_17 : f32 to vector<16x512xf32>
    %13 = arith.maximumf %11, %12 : vector<16x512xf32>
    %14 = arith.truncf %13 : vector<16x512xf32> to vector<16x512xbf16>
    %cst_18 = arith.constant dense<0.000000e+00> : vector<16x512xf32>
    %15 = tpu.matmul %14, %3, %cst_18 {dimension_numbers = #tpu.dot_dimension_numbers<[1], [0], [0], [1], [0, 0, 1, 1], [], []>} : vector<16x512xbf16>, vector<512x512xbf16>, vector<16x512xf32> -> vector<16x512xf32>
    %c0_19 = arith.constant 0 : index
    %c0_20 = arith.constant 0 : index
    %16 = vector.load %arg6[%c0_19, %c0_20] : memref<1x512xf32, #tpu.memory_space<vmem>>, vector<1x512xf32>
    %17 = vector.broadcast %16 : vector<1x512xf32> to vector<16x512xf32>
    %18 = arith.addf %15, %17 : vector<16x512xf32>
    %cst_21 = arith.constant 0.000000e+00 : f32
    %19 = vector.broadcast %cst_21 : f32 to vector<16x512xf32>
    %20 = arith.maximumf %18, %19 : vector<16x512xf32>
    %21 = arith.truncf %20 : vector<16x512xf32> to vector<16x512xbf16>
    %cst_22 = arith.constant dense<0.000000e+00> : vector<16x512xf32>
    %22 = tpu.matmul %21, %4, %cst_22 {dimension_numbers = #tpu.dot_dimension_numbers<[1], [0], [0], [1], [0, 0, 1, 1], [], []>} : vector<16x512xbf16>, vector<512x512xbf16>, vector<16x512xf32> -> vector<16x512xf32>
    %cst_23 = arith.constant dense<0.000000e+00> : vector<16x512xf32>
    %23 = tpu.matmul %1, %5, %cst_23 {dimension_numbers = #tpu.dot_dimension_numbers<[1], [0], [0], [1], [0, 0, 1, 1], [], []>} : vector<16x6xbf16>, vector<6x512xbf16>, vector<16x512xf32> -> vector<16x512xf32>
    %24 = arith.addf %22, %23 : vector<16x512xf32>
    %c0_24 = arith.constant 0 : index
    %c0_25 = arith.constant 0 : index
    %25 = vector.load %arg9[%c0_24, %c0_25] : memref<1x512xf32, #tpu.memory_space<vmem>>, vector<1x512xf32>
    %26 = vector.broadcast %25 : vector<1x512xf32> to vector<16x512xf32>
    %27 = arith.addf %24, %26 : vector<16x512xf32>
    %cst_26 = arith.constant 0.000000e+00 : f32
    %28 = vector.broadcast %cst_26 : f32 to vector<16x512xf32>
    %29 = arith.maximumf %27, %28 : vector<16x512xf32>
    %30 = arith.truncf %29 : vector<16x512xf32> to vector<16x512xbf16>
    %cst_27 = arith.constant dense<0.000000e+00> : vector<16x512xf32>
    %31 = tpu.matmul %30, %6, %cst_27 {dimension_numbers = #tpu.dot_dimension_numbers<[1], [0], [0], [1], [0, 0, 1, 1], [], []>} : vector<16x512xbf16>, vector<512x512xbf16>, vector<16x512xf32> -> vector<16x512xf32>
    %c0_28 = arith.constant 0 : index
    %c0_29 = arith.constant 0 : index
    %32 = vector.load %arg11[%c0_28, %c0_29] : memref<1x512xf32, #tpu.memory_space<vmem>>, vector<1x512xf32>
    %33 = vector.broadcast %32 : vector<1x512xf32> to vector<16x512xf32>
    %34 = arith.addf %31, %33 : vector<16x512xf32>
    %cst_30 = arith.constant 0.000000e+00 : f32
    %35 = vector.broadcast %cst_30 : f32 to vector<16x512xf32>
    %36 = arith.maximumf %34, %35 : vector<16x512xf32>
    %37 = arith.truncf %36 : vector<16x512xf32> to vector<16x512xbf16>
    %cst_31 = arith.constant dense<0.000000e+00> : vector<16x128xf32>
    %38 = tpu.matmul %37, %7, %cst_31 {dimension_numbers = #tpu.dot_dimension_numbers<[1], [0], [0], [1], [0, 0, 1, 1], [], []>} : vector<16x512xbf16>, vector<512x128xbf16>, vector<16x128xf32> -> vector<16x128xf32>
    %c0_32 = arith.constant 0 : index
    %c0_33 = arith.constant 0 : index
    %39 = vector.load %arg13[%c0_32, %c0_33] : memref<1x128xf32, #tpu.memory_space<vmem>>, vector<1x128xf32>
    %40 = vector.broadcast %39 : vector<1x128xf32> to vector<16x128xf32>
    %41 = arith.addf %38, %40 : vector<16x128xf32>
    %c0_34 = arith.constant 0 : index
    %c0_35 = arith.constant 0 : index
    %42 = vector.load %arg14[%c0_34, %c0_35] : memref<16x128xf32, #tpu.memory_space<vmem>>, vector<16x128xf32>
    tpu.vector_store %arg14[%c0_34, %c0_35], %41 {strides = array<i32>} : memref<16x128xf32, #tpu.memory_space<vmem>>, vector<16x128xf32>,
    return
  }
  func.func @transform_0(%arg0: i32) -> (i32, i32) {
    %c0_i32 = arith.constant 0 : i32
    %c0_i32_0 = arith.constant 0 : i32
    return %arg0, %c0_i32 : i32, i32
  }
  func.func @transform_1(%arg0: i32) -> (i32, i32) {
    %c0_i32 = arith.constant 0 : i32
    %c0_i32_0 = arith.constant 0 : i32
    return %arg0, %c0_i32 : i32, i32
  }
  func.func @transform_2(%arg0: i32) -> (i32, i32) {
    %c0_i32 = arith.constant 0 : i32
    %c0_i32_0 = arith.constant 0 : i32
    %c0_i32_1 = arith.constant 0 : i32
    return %c0_i32, %c0_i32_0 : i32, i32
  }
  func.func @transform_3(%arg0: i32) -> (i32, i32) {
    %c0_i32 = arith.constant 0 : i32
    %c0_i32_0 = arith.constant 0 : i32
    %c0_i32_1 = arith.constant 0 : i32
    return %c0_i32, %c0_i32_0 : i32, i32
  }
  func.func @transform_4(%arg0: i32) -> (i32, i32) {
    %c0_i32 = arith.constant 0 : i32
    %c0_i32_0 = arith.constant 0 : i32
    %c0_i32_1 = arith.constant 0 : i32
    return %c0_i32, %c0_i32_0 : i32, i32
  }
  func.func @transform_5(%arg0: i32) -> (i32, i32) {
    %c0_i32 = arith.constant 0 : i32
    %c0_i32_0 = arith.constant 0 : i32
    %c0_i32_1 = arith.constant 0 : i32
    return %c0_i32, %c0_i32_0 : i32, i32
  }
  func.func @transform_6(%arg0: i32) -> (i32, i32) {
    %c0_i32 = arith.constant 0 : i32
    %c0_i32_0 = arith.constant 0 : i32
    %c0_i32_1 = arith.constant 0 : i32
    return %c0_i32, %c0_i32_0 : i32, i32
  }
  func.func @transform_7(%arg0: i32) -> (i32, i32) {
    %c0_i32 = arith.constant 0 : i32
    %c0_i32_0 = arith.constant 0 : i32
    %c0_i32_1 = arith.constant 0 : i32
    return %c0_i32, %c0_i32_0 : i32, i32
  }
  func.func @transform_8(%arg0: i32) -> (i32, i32) {
    %c0_i32 = arith.constant 0 : i32
    %c0_i32_0 = arith.constant 0 : i32
    %c0_i32_1 = arith.constant 0 : i32
    return %c0_i32, %c0_i32_0 : i32, i32
  }
  func.func @transform_9(%arg0: i32) -> (i32, i32) {
    %c0_i32 = arith.constant 0 : i32
    %c0_i32_0 = arith.constant 0 : i32
    %c0_i32_1 = arith.constant 0 : i32
    return %c0_i32, %c0_i32_0 : i32, i32
  }
  func.func @transform_10(%arg0: i32) -> (i32, i32) {
    %c0_i32 = arith.constant 0 : i32
    %c0_i32_0 = arith.constant 0 : i32
    %c0_i32_1 = arith.constant 0 : i32
    return %c0_i32, %c0_i32_0 : i32, i32
  }
  func.func @transform_11(%arg0: i32) -> (i32, i32) {
    %c0_i32 = arith.constant 0 : i32
    %c0_i32_0 = arith.constant 0 : i32
    %c0_i32_1 = arith.constant 0 : i32
    return %c0_i32, %c0_i32_0 : i32, i32
  }
  func.func @transform_12(%arg0: i32) -> (i32, i32) {
    %c0_i32 = arith.constant 0 : i32
    %c0_i32_0 = arith.constant 0 : i32
    %c0_i32_1 = arith.constant 0 : i32
    return %c0_i32, %c0_i32_0 : i32, i32
  }
  func.func @transform_13(%arg0: i32) -> (i32, i32) {
    %c0_i32 = arith.constant 0 : i32
    %c0_i32_0 = arith.constant 0 : i32
    return %arg0, %c0_i32 : i32, i32
  }
}

</mosaic_0001>

<llo_original>
// kernel: _critic_forward.1
$region0: #{_critic_forward.1}
  #allocation0 [shape = 'u32[]', space=smem, size = 0x4, offset = 0x4, fixed_abs, tag = 'smem constant byte address 0x4 - core index']
  #allocation1 [shape = 'u32[144,128]{1,0:T(1,128)}', space=vmem, size = 0x12000, scoped, tag = 'internal scratch']
  %s0 = inlined_call_operand.vmem [shape: bf16[16,32], index: 0, kind: input, shape index: {}]
  %s1 = inlined_call_operand.vmem [shape: bf16[16,6], index: 1, kind: input, shape index: {}]
  %s2 = inlined_call_operand.vmem [shape: bf16[32,512], index: 2, kind: input, shape index: {}]
  %s3 = inlined_call_operand.vmem [shape: f32[1,512], index: 3, kind: input, shape index: {}]
  %s4 = inlined_call_operand.vmem [shape: bf16[512,512], index: 4, kind: input, shape index: {}]
  %s5 = inlined_call_operand.vmem [shape: f32[1,512], index: 5, kind: input, shape index: {}]
  %s6 = inlined_call_operand.vmem [shape: bf16[512,512], index: 6, kind: input, shape index: {}]
  %s7 = inlined_call_operand.vmem [shape: bf16[6,512], index: 7, kind: input, shape index: {}]
  %s8 = inlined_call_operand.vmem [shape: f32[1,512], index: 8, kind: input, shape index: {}]
  %s9 = inlined_call_operand.vmem [shape: bf16[512,512], index: 9, kind: input, shape index: {}]
  %s10 = inlined_call_operand.vmem [shape: f32[1,512], index: 10, kind: input, shape index: {}]
  %s11 = inlined_call_operand.vmem [shape: bf16[512,128], index: 11, kind: input, shape index: {}]
  %s12 = inlined_call_operand.vmem [shape: f32[1,128], index: 12, kind: input, shape index: {}]
  %s13 = inlined_call_operand.vmem [shape: f32[16,128], index: 13, kind: output, shape index: {}]
  %s14 = sld [smem:[#allocation0]]
  $region62: #{_critic_forward.1} parent=0
    _
  %s16 = ssub.s32 1, %s14
  %s17 = scalar_select 0, %s16, %s14
  // Predicated region
  $region2: #{_critic_forward.1} parent=0 // pred_check
    _
  $region3: #{_critic_forward.1} parent=0 // pred_check_branch
    %19 = sbr.rel (0) target = $region5
  $region4: #{_critic_forward.1} parent=0 // pred_region
    _
  $region5: #{_critic_forward.1} parent=0 // pred_fallthru
    _
  // Predicated region
  $region6: #{_critic_forward.1} parent=0 // pred_check
    _
  $region7: #{_critic_forward.1} parent=0 // pred_check_branch
    %21 = sbr.rel (0) target = $region9
  $region8: #{_critic_forward.1} parent=0 // pred_region
    _
  $region9: #{_critic_forward.1} parent=0 // pred_fallthru
    _
  // Predicated region
  $region10: #{_critic_forward.1} parent=0 // pred_check
    _
  $region11: #{_critic_forward.1} parent=0 // pred_check_branch
    %23 = sbr.rel (0) target = $region13
  $region12: #{_critic_forward.1} parent=0 // pred_region
    _
  $region13: #{_critic_forward.1} parent=0 // pred_fallthru
    _
  // Predicated region
  $region14: #{_critic_forward.1} parent=0 // pred_check
    _
  $region15: #{_critic_forward.1} parent=0 // pred_check_branch
    %25 = sbr.rel (0) target = $region17
  $region16: #{_critic_forward.1} parent=0 // pred_region
    _
  $region17: #{_critic_forward.1} parent=0 // pred_fallthru
    _
  // Predicated region
  $region18: #{_critic_forward.1} parent=0 // pred_check
    _
  $region19: #{_critic_forward.1} parent=0 // pred_check_branch
    %27 = sbr.rel (0) target = $region21
  $region20: #{_critic_forward.1} parent=0 // pred_region
    _
  $region21: #{_critic_forward.1} parent=0 // pred_fallthru
    _
  // Predicated region
  $region22: #{_critic_forward.1} parent=0 // pred_check
    _
  $region23: #{_critic_forward.1} parent=0 // pred_check_branch
    %29 = sbr.rel (0) target = $region25
  $region24: #{_critic_forward.1} parent=0 // pred_region
    _
  $region25: #{_critic_forward.1} parent=0 // pred_fallthru
    _
  // Predicated region
  $region26: #{_critic_forward.1} parent=0 // pred_check
    _
  $region27: #{_critic_forward.1} parent=0 // pred_check_branch
    %31 = sbr.rel (0) target = $region29
  $region28: #{_critic_forward.1} parent=0 // pred_region
    _
  $region29: #{_critic_forward.1} parent=0 // pred_fallthru
    _
  // Predicated region
  $region30: #{_critic_forward.1} parent=0 // pred_check
    _
  $region31: #{_critic_forward.1} parent=0 // pred_check_branch
    %33 = sbr.rel (0) target = $region33
  $region32: #{_critic_forward.1} parent=0 // pred_region
    _
  $region33: #{_critic_forward.1} parent=0 // pred_fallthru
    _
  // Predicated region
  $region34: #{_critic_forward.1} parent=0 // pred_check
    _
  $region35: #{_critic_forward.1} parent=0 // pred_check_branch
    %35 = sbr.rel (0) target = $region37
  $region36: #{_critic_forward.1} parent=0 // pred_region
    _
  $region37: #{_critic_forward.1} parent=0 // pred_fallthru
    _
  // Predicated region
  $region38: #{_critic_forward.1} parent=0 // pred_check
    _
  $region39: #{_critic_forward.1} parent=0 // pred_check_branch
    %37 = sbr.rel (0) target = $region41
  $region40: #{_critic_forward.1} parent=0 // pred_region
    _
  $region41: #{_critic_forward.1} parent=0 // pred_fallthru
    _
  // Predicated region
  $region42: #{_critic_forward.1} parent=0 // pred_check
    _
  $region43: #{_critic_forward.1} parent=0 // pred_check_branch
    %39 = sbr.rel (0) target = $region45
  $region44: #{_critic_forward.1} parent=0 // pred_region
    _
  $region45: #{_critic_forward.1} parent=0 // pred_fallthru
    _
  // Predicated region
  $region46: #{_critic_forward.1} parent=0 // pred_check
    _
  $region47: #{_critic_forward.1} parent=0 // pred_check_branch
    %41 = sbr.rel (0) target = $region49
  $region48: #{_critic_forward.1} parent=0 // pred_region
    _
  $region49: #{_critic_forward.1} parent=0 // pred_fallthru
    _
  // Predicated region
  $region50: #{_critic_forward.1} parent=0 // pred_check
    _
  $region51: #{_critic_forward.1} parent=0 // pred_check_branch
    %43 = sbr.rel (0) target = $region53
  $region52: #{_critic_forward.1} parent=0 // pred_region
    _
  $region53: #{_critic_forward.1} parent=0 // pred_fallthru
    _
  %v45 = vld [vmem:[%s0] sm:$0xf]
  %v46 = vld [vmem:[%s0 + $0x4] sm:$0xf]
  %v47 = vld [vmem:[%s1] sm:$0xf]
  %v48 = vld [vmem:[%s1 + $0x4] sm:$0xf]
  %v49 = vld [vmem:[%s2] sm:$0xff]
  %v50 = vld [vmem:[%s2 + $0x8] sm:$0xff]
  %v51 = vld [vmem:[%s2 + $0x10] sm:$0xff]
  %v52 = vld [vmem:[%s2 + $0x18] sm:$0xff]
  %v53 = vld [vmem:[%s2 + $0x20] sm:$0xff]
  %v54 = vld [vmem:[%s2 + $0x28] sm:$0xff]
  %v55 = vld [vmem:[%s2 + $0x30] sm:$0xff]
  %v56 = vld [vmem:[%s2 + $0x38] sm:$0xff]
  %v57 = vld [vmem:[%s4] sm:$0xff]
  %v58 = vld [vmem:[%s4 + $0x8] sm:$0xff]
  %v59 = vld [vmem:[%s4 + $0x10] sm:$0xff]
  %v60 = vld [vmem:[%s4 + $0x18] sm:$0xff]
  %v61 = vld [vmem:[%s4 + $0x20] sm:$0xff]
  %v62 = vld [vmem:[%s4 + $0x28] sm:$0xff]
  %v63 = vld [vmem:[%s4 + $0x30] sm:$0xff]
  %v64 = vld [vmem:[%s4 + $0x38] sm:$0xff]
  %v65 = vld [vmem:[%s4 + $0x40] sm:$0xff]
  %v66 = vld [vmem:[%s4 + $0x48] sm:$0xff]
  %v67 = vld [vmem:[%s4 + $0x50] sm:$0xff]
  %v68 = vld [vmem:[%s4 + $0x58] sm:$0xff]
  %v69 = vld [vmem:[%s4 + $0x60] sm:$0xff]
  %v70 = vld [vmem:[%s4 + $0x68] sm:$0xff]
  %v71 = vld [vmem:[%s4 + $0x70] sm:$0xff]
  %v72 = vld [vmem:[%s4 + $0x78] sm:$0xff]
  %v73 = vld [vmem:[%s4 + $0x80] sm:$0xff]
  %v74 = vld [vmem:[%s4 + $0x88] sm:$0xff]
  %v75 = vld [vmem:[%s4 + $0x90] sm:$0xff]
  %v76 = vld [vmem:[%s4 + $0x98] sm:$0xff]
  %v77 = vld [vmem:[%s4 + $0xa0] sm:$0xff]
  %v78 = vld [vmem:[%s4 + $0xa8] sm:$0xff]
  %v79 = vld [vmem:[%s4 + $0xb0] sm:$0xff]
  %v80 = vld [vmem:[%s4 + $0xb8] sm:$0xff]
  %v81 = vld [vmem:[%s4 + $0xc0] sm:$0xff]
  %v82 = vld [vmem:[%s4 + $0xc8] sm:$0xff]
  %v83 = vld [vmem:[%s4 + $0xd0] sm:$0xff]
  %v84 = vld [vmem:[%s4 + $0xd8] sm:$0xff]
  %v85 = vld [vmem:[%s4 + $0xe0] sm:$0xff]
  %v86 = vld [vmem:[%s4 + $0xe8] sm:$0xff]
  %v87 = vld [vmem:[%s4 + $0xf0] sm:$0xff]
  %v88 = vld [vmem:[%s4 + $0xf8] sm:$0xff]
  %v89 = vld [vmem:[%s4 + $0x100] sm:$0xff]
  %v90 = vld [vmem:[%s4 + $0x108] sm:$0xff]
  %v91 = vld [vmem:[%s4 + $0x110] sm:$0xff]
  %v92 = vld [vmem:[%s4 + $0x118] sm:$0xff]
  %v93 = vld [vmem:[%s4 + $0x120] sm:$0xff]
  %v94 = vld [vmem:[%s4 + $0x128] sm:$0xff]
  %v95 = vld [vmem:[%s4 + $0x130] sm:$0xff]
  %v96 = vld [vmem:[%s4 + $0x138] sm:$0xff]
  %v97 = vld [vmem:[%s4 + $0x140] sm:$0xff]
  %v98 = vld [vmem:[%s4 + $0x148] sm:$0xff]
  %v99 = vld [vmem:[%s4 + $0x150] sm:$0xff]
  %v100 = vld [vmem:[%s4 + $0x158] sm:$0xff]
  %v101 = vld [vmem:[%s4 + $0x160] sm:$0xff]
  %v102 = vld [vmem:[%s4 + $0x168] sm:$0xff]
  %v103 = vld [vmem:[%s4 + $0x170] sm:$0xff]
  %v104 = vld [vmem:[%s4 + $0x178] sm:$0xff]
  %v105 = vld [vmem:[%s4 + $0x180] sm:$0xff]
  %v106 = vld [vmem:[%s4 + $0x188] sm:$0xff]
  %v107 = vld [vmem:[%s4 + $0x190] sm:$0xff]
  %v108 = vld [vmem:[%s4 + $0x198] sm:$0xff]
  %v109 = vld [vmem:[%s4 + $0x1a0] sm:$0xff]
  %v110 = vld [vmem:[%s4 + $0x1a8] sm:$0xff]
  %v111 = vld [vmem:[%s4 + $0x1b0] sm:$0xff]
  %v112 = vld [vmem:[%s4 + $0x1b8] sm:$0xff]
  %v113 = vld [vmem:[%s4 + $0x1c0] sm:$0xff]
  %v114 = vld [vmem:[%s4 + $0x1c8] sm:$0xff]
  %v115 = vld [vmem:[%s4 + $0x1d0] sm:$0xff]
  %v116 = vld [vmem:[%s4 + $0x1d8] sm:$0xff]
  %v117 = vld [vmem:[%s4 + $0x1e0] sm:$0xff]
  %v118 = vld [vmem:[%s4 + $0x1e8] sm:$0xff]
  %v119 = vld [vmem:[%s4 + $0x1f0] sm:$0xff]
  %v120 = vld [vmem:[%s4 + $0x1f8] sm:$0xff]
  %v121 = vld [vmem:[%s4 + $0x200] sm:$0xff]
  %v122 = vld [vmem:[%s4 + $0x208] sm:$0xff]
  %v123 = vld [vmem:[%s4 + $0x210] sm:$0xff]
  %v124 = vld [vmem:[%s4 + $0x218] sm:$0xff]
  %v125 = vld [vmem:[%s4 + $0x220] sm:$0xff]
  %v126 = vld [vmem:[%s4 + $0x228] sm:$0xff]
  %v127 = vld [vmem:[%s4 + $0x230] sm:$0xff]
  %v128 = vld [vmem:[%s4 + $0x238] sm:$0xff]
  %v129 = vld [vmem:[%s4 + $0x240] sm:$0xff]
  %v130 = vld [vmem:[%s4 + $0x248] sm:$0xff]
  %v131 = vld [vmem:[%s4 + $0x250] sm:$0xff]
  %v132 = vld [vmem:[%s4 + $0x258] sm:$0xff]
  %v133 = vld [vmem:[%s4 + $0x260] sm:$0xff]
  %v134 = vld [vmem:[%s4 + $0x268] sm:$0xff]
  %v135 = vld [vmem:[%s4 + $0x270] sm:$0xff]
  %v136 = vld [vmem:[%s4 + $0x278] sm:$0xff]
  %v137 = vld [vmem:[%s4 + $0x280] sm:$0xff]
  %v138 = vld [vmem:[%s4 + $0x288] sm:$0xff]
  %v139 = vld [vmem:[%s4 + $0x290] sm:$0xff]
  %v140 = vld [vmem:[%s4 + $0x298] sm:$0xff]
  %v141 = vld [vmem:[%s4 + $0x2a0] sm:$0xff]
  %v142 = vld [vmem:[%s4 + $0x2a8] sm:$0xff]
  %v143 = vld [vmem:[%s4 + $0x2b0] sm:$0xff]
  %v144 = vld [vmem:[%s4 + $0x2b8] sm:$0xff]
  %v145 = vld [vmem:[%s4 + $0x2c0] sm:$0xff]
  %v146 = vld [vmem:[%s4 + $0x2c8] sm:$0xff]
  %v147 = vld [vmem:[%s4 + $0x2d0] sm:$0xff]
  %v148 = vld [vmem:[%s4 + $0x2d8] sm:$0xff]
  %v149 = vld [vmem:[%s4 + $0x2e0] sm:$0xff]
  %v150 = vld [vmem:[%s4 + $0x2e8] sm:$0xff]
  %v151 = vld [vmem:[%s4 + $0x2f0] sm:$0xff]
  %v152 = vld [vmem:[%s4 + $0x2f8] sm:$0xff]
  %v153 = vld [vmem:[%s4 + $0x300] sm:$0xff]
  %v154 = vld [vmem:[%s4 + $0x308] sm:$0xff]
  %v155 = vld [vmem:[%s4 + $0x310] sm:$0xff]
  %v156 = vld [vmem:[%s4 + $0x318] sm:$0xff]
  %v157 = vld [vmem:[%s4 + $0x320] sm:$0xff]
  %v158 = vld [vmem:[%s4 + $0x328] sm:$0xff]
  %v159 = vld [vmem:[%s4 + $0x330] sm:$0xff]
  %v160 = vld [vmem:[%s4 + $0x338] sm:$0xff]
  %v161 = vld [vmem:[%s4 + $0x340] sm:$0xff]
  %v162 = vld [vmem:[%s4 + $0x348] sm:$0xff]
  %v163 = vld [vmem:[%s4 + $0x350] sm:$0xff]
  %v164 = vld [vmem:[%s4 + $0x358] sm:$0xff]
  %v165 = vld [vmem:[%s4 + $0x360] sm:$0xff]
  %v166 = vld [vmem:[%s4 + $0x368] sm:$0xff]
  %v167 = vld [vmem:[%s4 + $0x370] sm:$0xff]
  %v168 = vld [vmem:[%s4 + $0x378] sm:$0xff]
  %v169 = vld [vmem:[%s4 + $0x380] sm:$0xff]
  %v170 = vld [vmem:[%s4 + $0x388] sm:$0xff]
  %v171 = vld [vmem:[%s4 + $0x390] sm:$0xff]
  %v172 = vld [vmem:[%s4 + $0x398] sm:$0xff]
  %v173 = vld [vmem:[%s4 + $0x3a0] sm:$0xff]
  %v174 = vld [vmem:[%s4 + $0x3a8] sm:$0xff]
  %v175 = vld [vmem:[%s4 + $0x3b0] sm:$0xff]
  %v176 = vld [vmem:[%s4 + $0x3b8] sm:$0xff]
  %v177 = vld [vmem:[%s4 + $0x3c0] sm:$0xff]
  %v178 = vld [vmem:[%s4 + $0x3c8] sm:$0xff]
  %v179 = vld [vmem:[%s4 + $0x3d0] sm:$0xff]
  %v180 = vld [vmem:[%s4 + $0x3d8] sm:$0xff]
  %v181 = vld [vmem:[%s4 + $0x3e0] sm:$0xff]
  %v182 = vld [vmem:[%s4 + $0x3e8] sm:$0xff]
  %v183 = vld [vmem:[%s4 + $0x3f0] sm:$0xff]
  %v184 = vld [vmem:[%s4 + $0x3f8] sm:$0xff]
  %v185 = vld [vmem:[%s6] sm:$0xff]
  %v186 = vld [vmem:[%s6 + $0x8] sm:$0xff]
  %v187 = vld [vmem:[%s6 + $0x10] sm:$0xff]
  %v188 = vld [vmem:[%s6 + $0x18] sm:$0xff]
  %v189 = vld [vmem:[%s6 + $0x20] sm:$0xff]
  %v190 = vld [vmem:[%s6 + $0x28] sm:$0xff]
  %v191 = vld [vmem:[%s6 + $0x30] sm:$0xff]
  %v192 = vld [vmem:[%s6 + $0x38] sm:$0xff]
  %v193 = vld [vmem:[%s6 + $0x40] sm:$0xff]
  %v194 = vld [vmem:[%s6 + $0x48] sm:$0xff]
  %v195 = vld [vmem:[%s6 + $0x50] sm:$0xff]
  %v196 = vld [vmem:[%s6 + $0x58] sm:$0xff]
  %v197 = vld [vmem:[%s6 + $0x60] sm:$0xff]
  %v198 = vld [vmem:[%s6 + $0x68] sm:$0xff]
  %v199 = vld [vmem:[%s6 + $0x70] sm:$0xff]
  %v200 = vld [vmem:[%s6 + $0x78] sm:$0xff]
  %v201 = vld [vmem:[%s6 + $0x80] sm:$0xff]
  %v202 = vld [vmem:[%s6 + $0x88] sm:$0xff]
  %v203 = vld [vmem:[%s6 + $0x90] sm:$0xff]
  %v204 = vld [vmem:[%s6 + $0x98] sm:$0xff]
  %v205 = vld [vmem:[%s6 + $0xa0] sm:$0xff]
  %v206 = vld [vmem:[%s6 + $0xa8] sm:$0xff]
  %v207 = vld [vmem:[%s6 + $0xb0] sm:$0xff]
  %v208 = vld [vmem:[%s6 + $0xb8] sm:$0xff]
  %v209 = vld [vmem:[%s6 + $0xc0] sm:$0xff]
  %v210 = vld [vmem:[%s6 + $0xc8] sm:$0xff]
  %v211 = vld [vmem:[%s6 + $0xd0] sm:$0xff]
  %v212 = vld [vmem:[%s6 + $0xd8] sm:$0xff]
  %v213 = vld [vmem:[%s6 + $0xe0] sm:$0xff]
  %v214 = vld [vmem:[%s6 + $0xe8] sm:$0xff]
  %v215 = vld [vmem:[%s6 + $0xf0] sm:$0xff]
  %v216 = vld [vmem:[%s6 + $0xf8] sm:$0xff]
  %v217 = vld [vmem:[%s6 + $0x100] sm:$0xff]
  %v218 = vld [vmem:[%s6 + $0x108] sm:$0xff]
  %v219 = vld [vmem:[%s6 + $0x110] sm:$0xff]
  %v220 = vld [vmem:[%s6 + $0x118] sm:$0xff]
  %v221 = vld [vmem:[%s6 + $0x120] sm:$0xff]
  %v222 = vld [vmem:[%s6 + $0x128] sm:$0xff]
  %v223 = vld [vmem:[%s6 + $0x130] sm:$0xff]
  %v224 = vld [vmem:[%s6 + $0x138] sm:$0xff]
  %v225 = vld [vmem:[%s6 + $0x140] sm:$0xff]
  %v226 = vld [vmem:[%s6 + $0x148] sm:$0xff]
  %v227 = vld [vmem:[%s6 + $0x150] sm:$0xff]
  %v228 = vld [vmem:[%s6 + $0x158] sm:$0xff]
  %v229 = vld [vmem:[%s6 + $0x160] sm:$0xff]
  %v230 = vld [vmem:[%s6 + $0x168] sm:$0xff]
  %v231 = vld [vmem:[%s6 + $0x170] sm:$0xff]
  %v232 = vld [vmem:[%s6 + $0x178] sm:$0xff]
  %v233 = vld [vmem:[%s6 + $0x180] sm:$0xff]
  %v234 = vld [vmem:[%s6 + $0x188] sm:$0xff]
  %v235 = vld [vmem:[%s6 + $0x190] sm:$0xff]
  %v236 = vld [vmem:[%s6 + $0x198] sm:$0xff]
  %v237 = vld [vmem:[%s6 + $0x1a0] sm:$0xff]
  %v238 = vld [vmem:[%s6 + $0x1a8] sm:$0xff]
  %v239 = vld [vmem:[%s6 + $0x1b0] sm:$0xff]
  %v240 = vld [vmem:[%s6 + $0x1b8] sm:$0xff]
  %v241 = vld [vmem:[%s6 + $0x1c0] sm:$0xff]
  %v242 = vld [vmem:[%s6 + $0x1c8] sm:$0xff]
  %v243 = vld [vmem:[%s6 + $0x1d0] sm:$0xff]
  %v244 = vld [vmem:[%s6 + $0x1d8] sm:$0xff]
  %v245 = vld [vmem:[%s6 + $0x1e0] sm:$0xff]
  %v246 = vld [vmem:[%s6 + $0x1e8] sm:$0xff]
  %v247 = vld [vmem:[%s6 + $0x1f0] sm:$0xff]
  %v248 = vld [vmem:[%s6 + $0x1f8] sm:$0xff]
  %v249 = vld [vmem:[%s6 + $0x200] sm:$0xff]
  %v250 = vld [vmem:[%s6 + $0x208] sm:$0xff]
  %v251 = vld [vmem:[%s6 + $0x210] sm:$0xff]
  %v252 = vld [vmem:[%s6 + $0x218] sm:$0xff]
  %v253 = vld [vmem:[%s6 + $0x220] sm:$0xff]
  %v254 = vld [vmem:[%s6 + $0x228] sm:$0xff]
  %v255 = vld [vmem:[%s6 + $0x230] sm:$0xff]
  %v256 = vld [vmem:[%s6 + $0x238] sm:$0xff]
  %v257 = vld [vmem:[%s6 + $0x240] sm:$0xff]
  %v258 = vld [vmem:[%s6 + $0x248] sm:$0xff]
  %v259 = vld [vmem:[%s6 + $0x250] sm:$0xff]
  %v260 = vld [vmem:[%s6 + $0x258] sm:$0xff]
  %v261 = vld [vmem:[%s6 + $0x260] sm:$0xff]
  %v262 = vld [vmem:[%s6 + $0x268] sm:$0xff]
  %v263 = vld [vmem:[%s6 + $0x270] sm:$0xff]
  %v264 = vld [vmem:[%s6 + $0x278] sm:$0xff]
  %v265 = vld [vmem:[%s6 + $0x280] sm:$0xff]
  %v266 = vld [vmem:[%s6 + $0x288] sm:$0xff]
  %v267 = vld [vmem:[%s6 + $0x290] sm:$0xff]
  %v268 = vld [vmem:[%s6 + $0x298] sm:$0xff]
  %v269 = vld [vmem:[%s6 + $0x2a0] sm:$0xff]
  %v270 = vld [vmem:[%s6 + $0x2a8] sm:$0xff]
  %v271 = vld [vmem:[%s6 + $0x2b0] sm:$0xff]
  %v272 = vld [vmem:[%s6 + $0x2b8] sm:$0xff]
  %v273 = vld [vmem:[%s6 + $0x2c0] sm:$0xff]
  %v274 = vld [vmem:[%s6 + $0x2c8] sm:$0xff]
  %v275 = vld [vmem:[%s6 + $0x2d0] sm:$0xff]
  %v276 = vld [vmem:[%s6 + $0x2d8] sm:$0xff]
  %v277 = vld [vmem:[%s6 + $0x2e0] sm:$0xff]
  %v278 = vld [vmem:[%s6 + $0x2e8] sm:$0xff]
  %v279 = vld [vmem:[%s6 + $0x2f0] sm:$0xff]
  %v280 = vld [vmem:[%s6 + $0x2f8] sm:$0xff]
  %v281 = vld [vmem:[%s6 + $0x300] sm:$0xff]
  %v282 = vld [vmem:[%s6 + $0x308] sm:$0xff]
  %v283 = vld [vmem:[%s6 + $0x310] sm:$0xff]
  %v284 = vld [vmem:[%s6 + $0x318] sm:$0xff]
  %v285 = vld [vmem:[%s6 + $0x320] sm:$0xff]
  %v286 = vld [vmem:[%s6 + $0x328] sm:$0xff]
  %v287 = vld [vmem:[%s6 + $0x330] sm:$0xff]
  %v288 = vld [vmem:[%s6 + $0x338] sm:$0xff]
  %v289 = vld [vmem:[%s6 + $0x340] sm:$0xff]
  %v290 = vld [vmem:[%s6 + $0x348] sm:$0xff]
  %v291 = vld [vmem:[%s6 + $0x350] sm:$0xff]
  %v292 = vld [vmem:[%s6 + $0x358] sm:$0xff]
  %v293 = vld [vmem:[%s6 + $0x360] sm:$0xff]
  %v294 = vld [vmem:[%s6 + $0x368] sm:$0xff]
  %v295 = vld [vmem:[%s6 + $0x370] sm:$0xff]
  %v296 = vld [vmem:[%s6 + $0x378] sm:$0xff]
  %v297 = vld [vmem:[%s6 + $0x380] sm:$0xff]
  %v298 = vld [vmem:[%s6 + $0x388] sm:$0xff]
  %v299 = vld [vmem:[%s6 + $0x390] sm:$0xff]
  %v300 = vld [vmem:[%s6 + $0x398] sm:$0xff]
  %v301 = vld [vmem:[%s6 + $0x3a0] sm:$0xff]
  %v302 = vld [vmem:[%s6 + $0x3a8] sm:$0xff]
  %v303 = vld [vmem:[%s6 + $0x3b0] sm:$0xff]
  %v304 = vld [vmem:[%s6 + $0x3b8] sm:$0xff]
  %v305 = vld [vmem:[%s6 + $0x3c0] sm:$0xff]
  %v306 = vld [vmem:[%s6 + $0x3c8] sm:$0xff]
  %v307 = vld [vmem:[%s6 + $0x3d0] sm:$0xff]
  %v308 = vld [vmem:[%s6 + $0x3d8] sm:$0xff]
  %v309 = vld [vmem:[%s6 + $0x3e0] sm:$0xff]
  %v310 = vld [vmem:[%s6 + $0x3e8] sm:$0xff]
  %v311 = vld [vmem:[%s6 + $0x3f0] sm:$0xff]
  %v312 = vld [vmem:[%s6 + $0x3f8] sm:$0xff]
  %v313 = vld [vmem:[%s7] sm:$0x77]
  %v314 = vld [vmem:[%s7 + $0x8] sm:$0x77]
  %v315 = vld [vmem:[%s9] sm:$0xff]
  %v316 = vld [vmem:[%s9 + $0x8] sm:$0xff]
  %v317 = vld [vmem:[%s9 + $0x10] sm:$0xff]
  %v318 = vld [vmem:[%s9 + $0x18] sm:$0xff]
  %v319 = vld [vmem:[%s9 + $0x20] sm:$0xff]
  %v320 = vld [vmem:[%s9 + $0x28] sm:$0xff]
  %v321 = vld [vmem:[%s9 + $0x30] sm:$0xff]
  %v322 = vld [vmem:[%s9 + $0x38] sm:$0xff]
  %v323 = vld [vmem:[%s9 + $0x40] sm:$0xff]
  %v324 = vld [vmem:[%s9 + $0x48] sm:$0xff]
  %v325 = vld [vmem:[%s9 + $0x50] sm:$0xff]
  %v326 = vld [vmem:[%s9 + $0x58] sm:$0xff]
  %v327 = vld [vmem:[%s9 + $0x60] sm:$0xff]
  %v328 = vld [vmem:[%s9 + $0x68] sm:$0xff]
  %v329 = vld [vmem:[%s9 + $0x70] sm:$0xff]
  %v330 = vld [vmem:[%s9 + $0x78] sm:$0xff]
  %v331 = vld [vmem:[%s9 + $0x80] sm:$0xff]
  %v332 = vld [vmem:[%s9 + $0x88] sm:$0xff]
  %v333 = vld [vmem:[%s9 + $0x90] sm:$0xff]
  %v334 = vld [vmem:[%s9 + $0x98] sm:$0xff]
  %v335 = vld [vmem:[%s9 + $0xa0] sm:$0xff]
  %v336 = vld [vmem:[%s9 + $0xa8] sm:$0xff]
  %v337 = vld [vmem:[%s9 + $0xb0] sm:$0xff]
  %v338 = vld [vmem:[%s9 + $0xb8] sm:$0xff]
  %v339 = vld [vmem:[%s9 + $0xc0] sm:$0xff]
  %v340 = vld [vmem:[%s9 + $0xc8] sm:$0xff]
  %v341 = vld [vmem:[%s9 + $0xd0] sm:$0xff]
  %v342 = vld [vmem:[%s9 + $0xd8] sm:$0xff]
  %v343 = vld [vmem:[%s9 + $0xe0] sm:$0xff]
  %v344 = vld [vmem:[%s9 + $0xe8] sm:$0xff]
  %v345 = vld [vmem:[%s9 + $0xf0] sm:$0xff]
  %v346 = vld [vmem:[%s9 + $0xf8] sm:$0xff]
  %v347 = vld [vmem:[%s9 + $0x100] sm:$0xff]
  %v348 = vld [vmem:[%s9 + $0x108] sm:$0xff]
  %v349 = vld [vmem:[%s9 + $0x110] sm:$0xff]
  %v350 = vld [vmem:[%s9 + $0x118] sm:$0xff]
  %v351 = vld [vmem:[%s9 + $0x120] sm:$0xff]
  %v352 = vld [vmem:[%s9 + $0x128] sm:$0xff]
  %v353 = vld [vmem:[%s9 + $0x130] sm:$0xff]
  %v354 = vld [vmem:[%s9 + $0x138] sm:$0xff]
  %v355 = vld [vmem:[%s9 + $0x140] sm:$0xff]
  %v356 = vld [vmem:[%s9 + $0x148] sm:$0xff]
  %v357 = vld [vmem:[%s9 + $0x150] sm:$0xff]
  %v358 = vld [vmem:[%s9 + $0x158] sm:$0xff]
  %v359 = vld [vmem:[%s9 + $0x160] sm:$0xff]
  %v360 = vld [vmem:[%s9 + $0x168] sm:$0xff]
  %v361 = vld [vmem:[%s9 + $0x170] sm:$0xff]
  %v362 = vld [vmem:[%s9 + $0x178] sm:$0xff]
  %v363 = vld [vmem:[%s9 + $0x180] sm:$0xff]
  %v364 = vld [vmem:[%s9 + $0x188] sm:$0xff]
  %v365 = vld [vmem:[%s9 + $0x190] sm:$0xff]
  %v366 = vld [vmem:[%s9 + $0x198] sm:$0xff]
  %v367 = vld [vmem:[%s9 + $0x1a0] sm:$0xff]
  %v368 = vld [vmem:[%s9 + $0x1a8] sm:$0xff]
  %v369 = vld [vmem:[%s9 + $0x1b0] sm:$0xff]
  %v370 = vld [vmem:[%s9 + $0x1b8] sm:$0xff]
  %v371 = vld [vmem:[%s9 + $0x1c0] sm:$0xff]
  %v372 = vld [vmem:[%s9 + $0x1c8] sm:$0xff]
  %v373 = vld [vmem:[%s9 + $0x1d0] sm:$0xff]
  %v374 = vld [vmem:[%s9 + $0x1d8] sm:$0xff]
  %v375 = vld [vmem:[%s9 + $0x1e0] sm:$0xff]
  %v376 = vld [vmem:[%s9 + $0x1e8] sm:$0xff]
  %v377 = vld [vmem:[%s9 + $0x1f0] sm:$0xff]
  %v378 = vld [vmem:[%s9 + $0x1f8] sm:$0xff]
  %v379 = vld [vmem:[%s9 + $0x200] sm:$0xff]
  %v380 = vld [vmem:[%s9 + $0x208] sm:$0xff]
  %v381 = vld [vmem:[%s9 + $0x210] sm:$0xff]
  %v382 = vld [vmem:[%s9 + $0x218] sm:$0xff]
  %v383 = vld [vmem:[%s9 + $0x220] sm:$0xff]
  %v384 = vld [vmem:[%s9 + $0x228] sm:$0xff]
  %v385 = vld [vmem:[%s9 + $0x230] sm:$0xff]
  %v386 = vld [vmem:[%s9 + $0x238] sm:$0xff]
  %v387 = vld [vmem:[%s9 + $0x240] sm:$0xff]
  %v388 = vld [vmem:[%s9 + $0x248] sm:$0xff]
  %v389 = vld [vmem:[%s9 + $0x250] sm:$0xff]
  %v390 = vld [vmem:[%s9 + $0x258] sm:$0xff]
  %v391 = vld [vmem:[%s9 + $0x260] sm:$0xff]
  %v392 = vld [vmem:[%s9 + $0x268] sm:$0xff]
  %v393 = vld [vmem:[%s9 + $0x270] sm:$0xff]
  %v394 = vld [vmem:[%s9 + $0x278] sm:$0xff]
  %v395 = vld [vmem:[%s9 + $0x280] sm:$0xff]
  %v396 = vld [vmem:[%s9 + $0x288] sm:$0xff]
  %v397 = vld [vmem:[%s9 + $0x290] sm:$0xff]
  %v398 = vld [vmem:[%s9 + $0x298] sm:$0xff]
  %v399 = vld [vmem:[%s9 + $0x2a0] sm:$0xff]
  %v400 = vld [vmem:[%s9 + $0x2a8] sm:$0xff]
  %v401 = vld [vmem:[%s9 + $0x2b0] sm:$0xff]
  %v402 = vld [vmem:[%s9 + $0x2b8] sm:$0xff]
  %v403 = vld [vmem:[%s9 + $0x2c0] sm:$0xff]
  %v404 = vld [vmem:[%s9 + $0x2c8] sm:$0xff]
  %v405 = vld [vmem:[%s9 + $0x2d0] sm:$0xff]
  %v406 = vld [vmem:[%s9 + $0x2d8] sm:$0xff]
  %v407 = vld [vmem:[%s9 + $0x2e0] sm:$0xff]
  %v408 = vld [vmem:[%s9 + $0x2e8] sm:$0xff]
  %v409 = vld [vmem:[%s9 + $0x2f0] sm:$0xff]
  %v410 = vld [vmem:[%s9 + $0x2f8] sm:$0xff]
  %v411 = vld [vmem:[%s9 + $0x300] sm:$0xff]
  %v412 = vld [vmem:[%s9 + $0x308] sm:$0xff]
  %v413 = vld [vmem:[%s9 + $0x310] sm:$0xff]
  %v414 = vld [vmem:[%s9 + $0x318] sm:$0xff]
  %v415 = vld [vmem:[%s9 + $0x320] sm:$0xff]
  %v416 = vld [vmem:[%s9 + $0x328] sm:$0xff]
  %v417 = vld [vmem:[%s9 + $0x330] sm:$0xff]
  %v418 = vld [vmem:[%s9 + $0x338] sm:$0xff]
  %v419 = vld [vmem:[%s9 + $0x340] sm:$0xff]
  %v420 = vld [vmem:[%s9 + $0x348] sm:$0xff]
  %v421 = vld [vmem:[%s9 + $0x350] sm:$0xff]
  %v422 = vld [vmem:[%s9 + $0x358] sm:$0xff]
  %v423 = vld [vmem:[%s9 + $0x360] sm:$0xff]
  %v424 = vld [vmem:[%s9 + $0x368] sm:$0xff]
  %v425 = vld [vmem:[%s9 + $0x370] sm:$0xff]
  %v426 = vld [vmem:[%s9 + $0x378] sm:$0xff]
  %v427 = vld [vmem:[%s9 + $0x380] sm:$0xff]
  %v428 = vld [vmem:[%s9 + $0x388] sm:$0xff]
  %v429 = vld [vmem:[%s9 + $0x390] sm:$0xff]
  %v430 = vld [vmem:[%s9 + $0x398] sm:$0xff]
  %v431 = vld [vmem:[%s9 + $0x3a0] sm:$0xff]
  %v432 = vld [vmem:[%s9 + $0x3a8] sm:$0xff]
  %v433 = vld [vmem:[%s9 + $0x3b0] sm:$0xff]
  %v434 = vld [vmem:[%s9 + $0x3b8] sm:$0xff]
  %v435 = vld [vmem:[%s9 + $0x3c0] sm:$0xff]
  %v436 = vld [vmem:[%s9 + $0x3c8] sm:$0xff]
  %v437 = vld [vmem:[%s9 + $0x3d0] sm:$0xff]
  %v438 = vld [vmem:[%s9 + $0x3d8] sm:$0xff]
  %v439 = vld [vmem:[%s9 + $0x3e0] sm:$0xff]
  %v440 = vld [vmem:[%s9 + $0x3e8] sm:$0xff]
  %v441 = vld [vmem:[%s9 + $0x3f0] sm:$0xff]
  %v442 = vld [vmem:[%s9 + $0x3f8] sm:$0xff]
  %v443 = vld [vmem:[%s11] sm:$0xf]
  %v444 = vld [vmem:[%s11 + $0x4] sm:$0xf]
  %v445 = vld [vmem:[%s11 + $0x8] sm:$0xf]
  %v446 = vld [vmem:[%s11 + $0xc] sm:$0xf]
  %v447 = vld [vmem:[%s11 + $0x10] sm:$0xf]
  %v448 = vld [vmem:[%s11 + $0x14] sm:$0xf]
  %v449 = vld [vmem:[%s11 + $0x18] sm:$0xf]
  %v450 = vld [vmem:[%s11 + $0x1c] sm:$0xf]
  %v451 = vld [vmem:[%s11 + $0x20] sm:$0xf]
  %v452 = vld [vmem:[%s11 + $0x24] sm:$0xf]
  %v453 = vld [vmem:[%s11 + $0x28] sm:$0xf]
  %v454 = vld [vmem:[%s11 + $0x2c] sm:$0xf]
  %v455 = vld [vmem:[%s11 + $0x30] sm:$0xf]
  %v456 = vld [vmem:[%s11 + $0x34] sm:$0xf]
  %v457 = vld [vmem:[%s11 + $0x38] sm:$0xf]
  %v458 = vld [vmem:[%s11 + $0x3c] sm:$0xf]
  %v459 = vld [vmem:[%s11 + $0x40] sm:$0xf]
  %v460 = vld [vmem:[%s11 + $0x44] sm:$0xf]
  %v461 = vld [vmem:[%s11 + $0x48] sm:$0xf]
  %v462 = vld [vmem:[%s11 + $0x4c] sm:$0xf]
  %v463 = vld [vmem:[%s11 + $0x50] sm:$0xf]
  %v464 = vld [vmem:[%s11 + $0x54] sm:$0xf]
  %v465 = vld [vmem:[%s11 + $0x58] sm:$0xf]
  %v466 = vld [vmem:[%s11 + $0x5c] sm:$0xf]
  %v467 = vld [vmem:[%s11 + $0x60] sm:$0xf]
  %v468 = vld [vmem:[%s11 + $0x64] sm:$0xf]
  %v469 = vld [vmem:[%s11 + $0x68] sm:$0xf]
  %v470 = vld [vmem:[%s11 + $0x6c] sm:$0xf]
  %v471 = vld [vmem:[%s11 + $0x70] sm:$0xf]
  %v472 = vld [vmem:[%s11 + $0x74] sm:$0xf]
  %v473 = vld [vmem:[%s11 + $0x78] sm:$0xf]
  %v474 = vld [vmem:[%s11 + $0x7c] sm:$0xf]
  %v475 = vld [vmem:[%s11 + $0x80] sm:$0xf]
  %v476 = vld [vmem:[%s11 + $0x84] sm:$0xf]
  %v477 = vld [vmem:[%s11 + $0x88] sm:$0xf]
  %v478 = vld [vmem:[%s11 + $0x8c] sm:$0xf]
  %v479 = vld [vmem:[%s11 + $0x90] sm:$0xf]
  %v480 = vld [vmem:[%s11 + $0x94] sm:$0xf]
  %v481 = vld [vmem:[%s11 + $0x98] sm:$0xf]
  %v482 = vld [vmem:[%s11 + $0x9c] sm:$0xf]
  %v483 = vld [vmem:[%s11 + $0xa0] sm:$0xf]
  %v484 = vld [vmem:[%s11 + $0xa4] sm:$0xf]
  %v485 = vld [vmem:[%s11 + $0xa8] sm:$0xf]
  %v486 = vld [vmem:[%s11 + $0xac] sm:$0xf]
  %v487 = vld [vmem:[%s11 + $0xb0] sm:$0xf]
  %v488 = vld [vmem:[%s11 + $0xb4] sm:$0xf]
  %v489 = vld [vmem:[%s11 + $0xb8] sm:$0xf]
  %v490 = vld [vmem:[%s11 + $0xbc] sm:$0xf]
  %v491 = vld [vmem:[%s11 + $0xc0] sm:$0xf]
  %v492 = vld [vmem:[%s11 + $0xc4] sm:$0xf]
  %v493 = vld [vmem:[%s11 + $0xc8] sm:$0xf]
  %v494 = vld [vmem:[%s11 + $0xcc] sm:$0xf]
  %v495 = vld [vmem:[%s11 + $0xd0] sm:$0xf]
  %v496 = vld [vmem:[%s11 + $0xd4] sm:$0xf]
  %v497 = vld [vmem:[%s11 + $0xd8] sm:$0xf]
  %v498 = vld [vmem:[%s11 + $0xdc] sm:$0xf]
  %v499 = vld [vmem:[%s11 + $0xe0] sm:$0xf]
  %v500 = vld [vmem:[%s11 + $0xe4] sm:$0xf]
  %v501 = vld [vmem:[%s11 + $0xe8] sm:$0xf]
  %v502 = vld [vmem:[%s11 + $0xec] sm:$0xf]
  %v503 = vld [vmem:[%s11 + $0xf0] sm:$0xf]
  %v504 = vld [vmem:[%s11 + $0xf4] sm:$0xf]
  %v505 = vld [vmem:[%s11 + $0xf8] sm:$0xf]
  %v506 = vld [vmem:[%s11 + $0xfc] sm:$0xf]
  %v507 = vld [vmem:[%s3] sm:$0xf]
  %v509 = vlaneseq
  %v510 = vshrl.u32 %v509, 7
  %v511 = vsub.s32 0, %v510
  %v512 = vrot.slane %v507, %v511
  %v513 = vlaneseq
  %v514 = vshrl.u32 %v513, 7
  %v515 = vsub.s32 1, %v514
  %v516 = vrot.slane %v507, %v515
  %v517 = vlaneseq
  %v518 = vshrl.u32 %v517, 7
  %v519 = vsub.s32 2, %v518
  %v520 = vrot.slane %v507, %v519
  %v521 = vlaneseq
  %v522 = vshrl.u32 %v521, 7
  %v523 = vsub.s32 3, %v522
  %v524 = vrot.slane %v507, %v523
  %v531 = vunpack.c.l.b16 %v45
  %v532 = vunpack.c.l.b16 %v46
  %v533 = vpack.c.b16 %v532, %v531
  %v542 = vunpack.c.l.b16 %v49
  %v543 = vunpack.c.h.b16 %v49
  %v544 = vunpack.c.l.b16 %v50
  %v545 = vunpack.c.h.b16 %v50
  %v546 = vunpack.c.l.b16 %v51
  %v547 = vunpack.c.h.b16 %v51
  %v548 = vunpack.c.l.b16 %v52
  %v549 = vunpack.c.h.b16 %v52
  %v550 = vunpack.c.l.b16 %v53
  %v551 = vunpack.c.h.b16 %v53
  %v552 = vunpack.c.l.b16 %v54
  %v553 = vunpack.c.h.b16 %v54
  %v554 = vunpack.c.l.b16 %v55
  %v555 = vunpack.c.h.b16 %v55
  %v556 = vunpack.c.l.b16 %v56
  %v557 = vunpack.c.h.b16 %v56
  %v558 = vpack.c.b16 %v546, %v542
  %v559 = vpack.c.b16 %v547, %v543
  %v560 = vpack.c.b16 %v548, %v544
  %v561 = vpack.c.b16 %v549, %v545
  %v562 = vpack.c.b16 %v554, %v550
  %v563 = vpack.c.b16 %v555, %v551
  %v564 = vpack.c.b16 %v556, %v552
  %v565 = vpack.c.b16 %v557, %v553
  %vm574 = vcmask 261120
  %v576 = vsel %vm574, %v533, 0
  %578 = vmatprep.subr.bf16.mxu0 %v559
  %579 = vmatpush1.bf16.msra.mxu0 %v558
  %580 = vmatprep.subr.bf16.mxu0 %v563
  %581 = vmatpush1.bf16.msra.mxu0 %v562
  %582 = vmatprep.subr.bf16.mxu0 0
  %583 = vmatpush1.bf16.msra.mxu0 0
  %584 = vmatprep.subr.bf16.mxu0 0
  %585 = vmatpush1.bf16.msra.mxu0 0
  %586 = vmatprep.subr.bf16.mxu0 0
  %587 = vmatpush1.bf16.msra.mxu0 0
  %588 = vmatprep.subr.bf16.mxu0 0
  %589 = vmatpush1.bf16.msra.mxu0 0
  %590 = vmatprep.subr.bf16.mxu0 0
  %591 = vmatpush1.bf16.msra.mxu0 0
  %592 = vmatprep.subr.bf16.mxu0 0
  %593 = vmatpush1.bf16.msra.mxu0 0
  %594 = vmatprep.subr.bf16.mxu0 0
  %595 = vmatpush1.bf16.msra.mxu0 0
  %596 = vmatprep.subr.bf16.mxu0 0
  %597 = vmatpush1.bf16.msra.mxu0 0
  %598 = vmatprep.subr.bf16.mxu0 0
  %599 = vmatpush1.bf16.msra.mxu0 0
  %600 = vmatprep.subr.bf16.mxu0 0
  %601 = vmatpush1.bf16.msra.mxu0 0
  %602 = vmatprep.subr.bf16.mxu0 0
  %603 = vmatpush1.bf16.msra.mxu0 0
  %604 = vmatprep.subr.bf16.mxu0 0
  %605 = vmatpush1.bf16.msra.mxu0 0
  %606 = vmatprep.subr.bf16.mxu0 0
  %607 = vmatpush1.bf16.msra.mxu0 0
  %608 = vmatprep.subr.bf16.mxu0 0
  %609 = vmatpush1.bf16.msra.mxu0 0
  %610 = vmatprep.mubr.bf16.mxu0 0
  %611 = vmatmul.mubr.bf16.gmra.mrb[0].mxu0 %v576
  %v612 = vpop.f32.mrb[0].mxu0
  %v613 = vadd.f32 %v512, %v612
  %v614 = vpop.f32.mrb[0].mxu0
  %v615 = vadd.f32 %v516, %v614
  %v616 = vpop.f32.mrb[0].mxu0
  %v617 = vadd.f32 %v512, %v616
  %v618 = vpop.f32.mrb[0].mxu0
  %v619 = vadd.f32 %v516, %v618
  %620 = vdwg.mxu0
  %621 = vmatprep.subr.bf16.mxu0 %v561
  %622 = vmatpush1.bf16.msra.mxu0 %v560
  %623 = vmatprep.subr.bf16.mxu0 %v565
  %624 = vmatpush1.bf16.msra.mxu0 %v564
  %625 = vmatprep.subr.bf16.mxu0 0
  %626 = vmatpush1.bf16.msra.mxu0 0
  %627 = vmatprep.subr.bf16.mxu0 0
  %628 = vmatpush1.bf16.msra.mxu0 0
  %629 = vmatprep.subr.bf16.mxu0 0
  %630 = vmatpush1.bf16.msra.mxu0 0
  %631 = vmatprep.subr.bf16.mxu0 0
  %632 = vmatpush1.bf16.msra.mxu0 0
  %633 = vmatprep.subr.bf16.mxu0 0
  %634 = vmatpush1.bf16.msra.mxu0 0
  %635 = vmatprep.subr.bf16.mxu0 0
  %636 = vmatpush1.bf16.msra.mxu0 0
  %637 = vmatprep.subr.bf16.mxu0 0
  %638 = vmatpush1.bf16.msra.mxu0 0
  %639 = vmatprep.subr.bf16.mxu0 0
  %640 = vmatpush1.bf16.msra.mxu0 0
  %641 = vmatprep.subr.bf16.mxu0 0
  %642 = vmatpush1.bf16.msra.mxu0 0
  %643 = vmatprep.subr.bf16.mxu0 0
  %644 = vmatpush1.bf16.msra.mxu0 0
  %645 = vmatprep.subr.bf16.mxu0 0
  %646 = vmatpush1.bf16.msra.mxu0 0
  %647 = vmatprep.subr.bf16.mxu0 0
  %648 = vmatpush1.bf16.msra.mxu0 0
  %649 = vmatprep.subr.bf16.mxu0 0
  %650 = vmatpush1.bf16.msra.mxu0 0
  %651 = vmatprep.subr.bf16.mxu0 0
  %652 = vmatpush1.bf16.msra.mxu0 0
  %653 = vmatprep.mubr.bf16.mxu0 0
  %654 = vmatmul.mubr.bf16.gmra.mrb[0].mxu0 %v576
  %v655 = vpop.f32.mrb[0].mxu0
  %v656 = vadd.f32 %v520, %v655
  %v657 = vpop.f32.mrb[0].mxu0
  %v658 = vadd.f32 %v524, %v657
  %v659 = vpop.f32.mrb[0].mxu0
  %v660 = vadd.f32 %v520, %v659
  %v661 = vpop.f32.mrb[0].mxu0
  %v662 = vadd.f32 %v524, %v661
  %663 = vdwg.mxu0
  %v664 = vmax.f32 %v613, 0.0
  %v665 = vmax.f32 %v615, 0.0
  %v666 = vmax.f32 %v656, 0.0
  %v667 = vmax.f32 %v658, 0.0
  %v668 = vmax.f32 %v617, 0.0
  %v669 = vmax.f32 %v619, 0.0
  %v670 = vmax.f32 %v660, 0.0
  %v671 = vmax.f32 %v662, 0.0
  %v672 = vpack.c.bf16 %v668, %v664
  %v673 = vpack.c.bf16 %v669, %v665
  %v674 = vpack.c.bf16 %v670, %v666
  %v675 = vpack.c.bf16 %v671, %v667
  %v676 = vld [vmem:[%s5] sm:$0xf]
  %v678 = vlaneseq
  %v679 = vshrl.u32 %v678, 7
  %v680 = vsub.s32 0, %v679
  %v681 = vrot.slane %v676, %v680
  %v682 = vlaneseq
  %v683 = vshrl.u32 %v682, 7
  %v684 = vsub.s32 1, %v683
  %v685 = vrot.slane %v676, %v684
  %v686 = vlaneseq
  %v687 = vshrl.u32 %v686, 7
  %v688 = vsub.s32 2, %v687
  %v689 = vrot.slane %v676, %v688
  %v690 = vlaneseq
  %v691 = vshrl.u32 %v690, 7
  %v692 = vsub.s32 3, %v691
  %v693 = vrot.slane %v676, %v692
  %v826 = vunpack.c.l.b16 %v57
  %v827 = vunpack.c.h.b16 %v57
  %v828 = vunpack.c.l.b16 %v58
  %v829 = vunpack.c.h.b16 %v58
  %v830 = vunpack.c.l.b16 %v59
  %v831 = vunpack.c.h.b16 %v59
  %v832 = vunpack.c.l.b16 %v60
  %v833 = vunpack.c.h.b16 %v60
  %v834 = vunpack.c.l.b16 %v61
  %v835 = vunpack.c.h.b16 %v61
  %v836 = vunpack.c.l.b16 %v62
  %v837 = vunpack.c.h.b16 %v62
  %v838 = vunpack.c.l.b16 %v63
  %v839 = vunpack.c.h.b16 %v63
  %v840 = vunpack.c.l.b16 %v64
  %v841 = vunpack.c.h.b16 %v64
  %v842 = vunpack.c.l.b16 %v65
  %v843 = vunpack.c.h.b16 %v65
  %v844 = vunpack.c.l.b16 %v66
  %v845 = vunpack.c.h.b16 %v66
  %v846 = vunpack.c.l.b16 %v67
  %v847 = vunpack.c.h.b16 %v67
  %v848 = vunpack.c.l.b16 %v68
  %v849 = vunpack.c.h.b16 %v68
  %v850 = vunpack.c.l.b16 %v69
  %v851 = vunpack.c.h.b16 %v69
  %v852 = vunpack.c.l.b16 %v70
  %v853 = vunpack.c.h.b16 %v70
  %v854 = vunpack.c.l.b16 %v71
  %v855 = vunpack.c.h.b16 %v71
  %v856 = vunpack.c.l.b16 %v72
  %v857 = vunpack.c.h.b16 %v72
  %v858 = vunpack.c.l.b16 %v73
  %v859 = vunpack.c.h.b16 %v73
  %v860 = vunpack.c.l.b16 %v74
  %v861 = vunpack.c.h.b16 %v74
  %v862 = vunpack.c.l.b16 %v75
  %v863 = vunpack.c.h.b16 %v75
  %v864 = vunpack.c.l.b16 %v76
  %v865 = vunpack.c.h.b16 %v76
  %v866 = vunpack.c.l.b16 %v77
  %v867 = vunpack.c.h.b16 %v77
  %v868 = vunpack.c.l.b16 %v78
  %v869 = vunpack.c.h.b16 %v78
  %v870 = vunpack.c.l.b16 %v79
  %v871 = vunpack.c.h.b16 %v79
  %v872 = vunpack.c.l.b16 %v80
  %v873 = vunpack.c.h.b16 %v80
  %v874 = vunpack.c.l.b16 %v81
  %v875 = vunpack.c.h.b16 %v81
  %v876 = vunpack.c.l.b16 %v82
  %v877 = vunpack.c.h.b16 %v82
  %v878 = vunpack.c.l.b16 %v83
  %v879 = vunpack.c.h.b16 %v83
  %v880 = vunpack.c.l.b16 %v84
  %v881 = vunpack.c.h.b16 %v84
  %v882 = vunpack.c.l.b16 %v85
  %v883 = vunpack.c.h.b16 %v85
  %v884 = vunpack.c.l.b16 %v86
  %v885 = vunpack.c.h.b16 %v86
  %v886 = vunpack.c.l.b16 %v87
  %v887 = vunpack.c.h.b16 %v87
  %v888 = vunpack.c.l.b16 %v88
  %v889 = vunpack.c.h.b16 %v88
  %v890 = vunpack.c.l.b16 %v89
  %v891 = vunpack.c.h.b16 %v89
  %v892 = vunpack.c.l.b16 %v90
  %v893 = vunpack.c.h.b16 %v90
  %v894 = vunpack.c.l.b16 %v91
  %v895 = vunpack.c.h.b16 %v91
  %v896 = vunpack.c.l.b16 %v92
  %v897 = vunpack.c.h.b16 %v92
  %v898 = vunpack.c.l.b16 %v93
  %v899 = vunpack.c.h.b16 %v93
  %v900 = vunpack.c.l.b16 %v94
  %v901 = vunpack.c.h.b16 %v94
  %v902 = vunpack.c.l.b16 %v95
  %v903 = vunpack.c.h.b16 %v95
  %v904 = vunpack.c.l.b16 %v96
  %v905 = vunpack.c.h.b16 %v96
  %v906 = vunpack.c.l.b16 %v97
  %v907 = vunpack.c.h.b16 %v97
  %v908 = vunpack.c.l.b16 %v98
  %v909 = vunpack.c.h.b16 %v98
  %v910 = vunpack.c.l.b16 %v99
  %v911 = vunpack.c.h.b16 %v99
  %v912 = vunpack.c.l.b16 %v100
  %v913 = vunpack.c.h.b16 %v100
  %v914 = vunpack.c.l.b16 %v101
  %v915 = vunpack.c.h.b16 %v101
  %v916 = vunpack.c.l.b16 %v102
  %v917 = vunpack.c.h.b16 %v102
  %v918 = vunpack.c.l.b16 %v103
  %v919 = vunpack.c.h.b16 %v103
  %v920 = vunpack.c.l.b16 %v104
  %v921 = vunpack.c.h.b16 %v104
  %v922 = vunpack.c.l.b16 %v105
  %v923 = vunpack.c.h.b16 %v105
  %v924 = vunpack.c.l.b16 %v106
  %v925 = vunpack.c.h.b16 %v106
  %v926 = vunpack.c.l.b16 %v107
  %v927 = vunpack.c.h.b16 %v107
  %v928 = vunpack.c.l.b16 %v108
  %v929 = vunpack.c.h.b16 %v108
  %v930 = vunpack.c.l.b16 %v109
  %v931 = vunpack.c.h.b16 %v109
  %v932 = vunpack.c.l.b16 %v110
  %v933 = vunpack.c.h.b16 %v110
  %v934 = vunpack.c.l.b16 %v111
  %v935 = vunpack.c.h.b16 %v111
  %v936 = vunpack.c.l.b16 %v112
  %v937 = vunpack.c.h.b16 %v112
  %v938 = vunpack.c.l.b16 %v113
  %v939 = vunpack.c.h.b16 %v113
  %v940 = vunpack.c.l.b16 %v114
  %v941 = vunpack.c.h.b16 %v114
  %v942 = vunpack.c.l.b16 %v115
  %v943 = vunpack.c.h.b16 %v115
  %v944 = vunpack.c.l.b16 %v116
  %v945 = vunpack.c.h.b16 %v116
  %v946 = vunpack.c.l.b16 %v117
  %v947 = vunpack.c.h.b16 %v117
  %v948 = vunpack.c.l.b16 %v118
  %v949 = vunpack.c.h.b16 %v118
  %v950 = vunpack.c.l.b16 %v119
  %v951 = vunpack.c.h.b16 %v119
  %v952 = vunpack.c.l.b16 %v120
  %v953 = vunpack.c.h.b16 %v120
  %v954 = vunpack.c.l.b16 %v121
  %v955 = vunpack.c.h.b16 %v121
  %v956 = vunpack.c.l.b16 %v122
  %v957 = vunpack.c.h.b16 %v122
  %v958 = vunpack.c.l.b16 %v123
  %v959 = vunpack.c.h.b16 %v123
  %v960 = vunpack.c.l.b16 %v124
  %v961 = vunpack.c.h.b16 %v124
  %v962 = vunpack.c.l.b16 %v125
  %v963 = vunpack.c.h.b16 %v125
  %v964 = vunpack.c.l.b16 %v126
  %v965 = vunpack.c.h.b16 %v126
  %v966 = vunpack.c.l.b16 %v127
  %v967 = vunpack.c.h.b16 %v127
  %v968 = vunpack.c.l.b16 %v128
  %v969 = vunpack.c.h.b16 %v128
  %v970 = vunpack.c.l.b16 %v129
  %v971 = vunpack.c.h.b16 %v129
  %v972 = vunpack.c.l.b16 %v130
  %v973 = vunpack.c.h.b16 %v130
  %v974 = vunpack.c.l.b16 %v131
  %v975 = vunpack.c.h.b16 %v131
  %v976 = vunpack.c.l.b16 %v132
  %v977 = vunpack.c.h.b16 %v132
  %v978 = vunpack.c.l.b16 %v133
  %v979 = vunpack.c.h.b16 %v133
  %v980 = vunpack.c.l.b16 %v134
  %v981 = vunpack.c.h.b16 %v134
  %v982 = vunpack.c.l.b16 %v135
  %v983 = vunpack.c.h.b16 %v135
  %v984 = vunpack.c.l.b16 %v136
  %v985 = vunpack.c.h.b16 %v136
  %v986 = vunpack.c.l.b16 %v137
  %v987 = vunpack.c.h.b16 %v137
  %v988 = vunpack.c.l.b16 %v138
  %v989 = vunpack.c.h.b16 %v138
  %v990 = vunpack.c.l.b16 %v139
  %v991 = vunpack.c.h.b16 %v139
  %v992 = vunpack.c.l.b16 %v140
  %v993 = vunpack.c.h.b16 %v140
  %v994 = vunpack.c.l.b16 %v141
  %v995 = vunpack.c.h.b16 %v141
  %v996 = vunpack.c.l.b16 %v142
  %v997 = vunpack.c.h.b16 %v142
  %v998 = vunpack.c.l.b16 %v143
  %v999 = vunpack.c.h.b16 %v143
  %v1000 = vunpack.c.l.b16 %v144
  %v1001 = vunpack.c.h.b16 %v144
  %v1002 = vunpack.c.l.b16 %v145
  %v1003 = vunpack.c.h.b16 %v145
  %v1004 = vunpack.c.l.b16 %v146
  %v1005 = vunpack.c.h.b16 %v146
  %v1006 = vunpack.c.l.b16 %v147
  %v1007 = vunpack.c.h.b16 %v147
  %v1008 = vunpack.c.l.b16 %v148
  %v1009 = vunpack.c.h.b16 %v148
  %v1010 = vunpack.c.l.b16 %v149
  %v1011 = vunpack.c.h.b16 %v149
  %v1012 = vunpack.c.l.b16 %v150
  %v1013 = vunpack.c.h.b16 %v150
  %v1014 = vunpack.c.l.b16 %v151
  %v1015 = vunpack.c.h.b16 %v151
  %v1016 = vunpack.c.l.b16 %v152
  %v1017 = vunpack.c.h.b16 %v152
  %v1018 = vunpack.c.l.b16 %v153
  %v1019 = vunpack.c.h.b16 %v153
  %v1020 = vunpack.c.l.b16 %v154
  %v1021 = vunpack.c.h.b16 %v154
  %v1022 = vunpack.c.l.b16 %v155
  %v1023 = vunpack.c.h.b16 %v155
  %v1024 = vunpack.c.l.b16 %v156
  %v1025 = vunpack.c.h.b16 %v156
  %v1026 = vunpack.c.l.b16 %v157
  %v1027 = vunpack.c.h.b16 %v157
  %v1028 = vunpack.c.l.b16 %v158
  %v1029 = vunpack.c.h.b16 %v158
  %v1030 = vunpack.c.l.b16 %v159
  %v1031 = vunpack.c.h.b16 %v159
  %v1032 = vunpack.c.l.b16 %v160
  %v1033 = vunpack.c.h.b16 %v160
  %v1034 = vunpack.c.l.b16 %v161
  %v1035 = vunpack.c.h.b16 %v161
  %v1036 = vunpack.c.l.b16 %v162
  %v1037 = vunpack.c.h.b16 %v162
  %v1038 = vunpack.c.l.b16 %v163
  %v1039 = vunpack.c.h.b16 %v163
  %v1040 = vunpack.c.l.b16 %v164
  %v1041 = vunpack.c.h.b16 %v164
  %v1042 = vunpack.c.l.b16 %v165
  %v1043 = vunpack.c.h.b16 %v165
  %v1044 = vunpack.c.l.b16 %v166
  %v1045 = vunpack.c.h.b16 %v166
  %v1046 = vunpack.c.l.b16 %v167
  %v1047 = vunpack.c.h.b16 %v167
  %v1048 = vunpack.c.l.b16 %v168
  %v1049 = vunpack.c.h.b16 %v168
  %v1050 = vunpack.c.l.b16 %v169
  %v1051 = vunpack.c.h.b16 %v169
  %v1052 = vunpack.c.l.b16 %v170
  %v1053 = vunpack.c.h.b16 %v170
  %v1054 = vunpack.c.l.b16 %v171
  %v1055 = vunpack.c.h.b16 %v171
  %v1056 = vunpack.c.l.b16 %v172
  %v1057 = vunpack.c.h.b16 %v172
  %v1058 = vunpack.c.l.b16 %v173
  %v1059 = vunpack.c.h.b16 %v173
  %v1060 = vunpack.c.l.b16 %v174
  %v1061 = vunpack.c.h.b16 %v174
  %v1062 = vunpack.c.l.b16 %v175
  %v1063 = vunpack.c.h.b16 %v175
  %v1064 = vunpack.c.l.b16 %v176
  %v1065 = vunpack.c.h.b16 %v176
  %v1066 = vunpack.c.l.b16 %v177
  %v1067 = vunpack.c.h.b16 %v177
  %v1068 = vunpack.c.l.b16 %v178
  %v1069 = vunpack.c.h.b16 %v178
  %v1070 = vunpack.c.l.b16 %v179
  %v1071 = vunpack.c.h.b16 %v179
  %v1072 = vunpack.c.l.b16 %v180
  %v1073 = vunpack.c.h.b16 %v180
  %v1074 = vunpack.c.l.b16 %v181
  %v1075 = vunpack.c.h.b16 %v181
  %v1076 = vunpack.c.l.b16 %v182
  %v1077 = vunpack.c.h.b16 %v182
  %v1078 = vunpack.c.l.b16 %v183
  %v1079 = vunpack.c.h.b16 %v183
  %v1080 = vunpack.c.l.b16 %v184
  %v1081 = vunpack.c.h.b16 %v184
  %v1082 = vpack.c.b16 %v830, %v826
  %v1083 = vpack.c.b16 %v831, %v827
  %v1084 = vpack.c.b16 %v832, %v828
  %v1085 = vpack.c.b16 %v833, %v829
  %v1086 = vpack.c.b16 %v838, %v834
  %v1087 = vpack.c.b16 %v839, %v835
  %v1088 = vpack.c.b16 %v840, %v836
  %v1089 = vpack.c.b16 %v841, %v837
  %v1090 = vpack.c.b16 %v846, %v842
  %v1091 = vpack.c.b16 %v847, %v843
  %v1092 = vpack.c.b16 %v848, %v844
  %v1093 = vpack.c.b16 %v849, %v845
  %v1094 = vpack.c.b16 %v854, %v850
  %v1095 = vpack.c.b16 %v855, %v851
  %v1096 = vpack.c.b16 %v856, %v852
  %v1097 = vpack.c.b16 %v857, %v853
  %v1098 = vpack.c.b16 %v862, %v858
  %v1099 = vpack.c.b16 %v863, %v859
  %v1100 = vpack.c.b16 %v864, %v860
  %v1101 = vpack.c.b16 %v865, %v861
  %v1102 = vpack.c.b16 %v870, %v866
  %v1103 = vpack.c.b16 %v871, %v867
  %v1104 = vpack.c.b16 %v872, %v868
  %v1105 = vpack.c.b16 %v873, %v869
  %v1106 = vpack.c.b16 %v878, %v874
  %v1107 = vpack.c.b16 %v879, %v875
  %v1108 = vpack.c.b16 %v880, %v876
  %v1109 = vpack.c.b16 %v881, %v877
  %v1110 = vpack.c.b16 %v886, %v882
  %v1111 = vpack.c.b16 %v887, %v883
  %v1112 = vpack.c.b16 %v888, %v884
  %v1113 = vpack.c.b16 %v889, %v885
  %v1114 = vpack.c.b16 %v894, %v890
  %v1115 = vpack.c.b16 %v895, %v891
  %v1116 = vpack.c.b16 %v896, %v892
  %v1117 = vpack.c.b16 %v897, %v893
  %v1118 = vpack.c.b16 %v902, %v898
  %v1119 = vpack.c.b16 %v903, %v899
  %v1120 = vpack.c.b16 %v904, %v900
  %v1121 = vpack.c.b16 %v905, %v901
  %v1122 = vpack.c.b16 %v910, %v906
  %v1123 = vpack.c.b16 %v911, %v907
  %v1124 = vpack.c.b16 %v912, %v908
  %v1125 = vpack.c.b16 %v913, %v909
  %v1126 = vpack.c.b16 %v918, %v914
  %v1127 = vpack.c.b16 %v919, %v915
  %v1128 = vpack.c.b16 %v920, %v916
  %v1129 = vpack.c.b16 %v921, %v917
  %v1130 = vpack.c.b16 %v926, %v922
  %v1131 = vpack.c.b16 %v927, %v923
  %v1132 = vpack.c.b16 %v928, %v924
  %v1133 = vpack.c.b16 %v929, %v925
  %v1134 = vpack.c.b16 %v934, %v930
  %v1135 = vpack.c.b16 %v935, %v931
  %v1136 = vpack.c.b16 %v936, %v932
  %v1137 = vpack.c.b16 %v937, %v933
  %v1138 = vpack.c.b16 %v942, %v938
  %v1139 = vpack.c.b16 %v943, %v939
  %v1140 = vpack.c.b16 %v944, %v940
  %v1141 = vpack.c.b16 %v945, %v941
  %v1142 = vpack.c.b16 %v950, %v946
  %v1143 = vpack.c.b16 %v951, %v947
  %v1144 = vpack.c.b16 %v952, %v948
  %v1145 = vpack.c.b16 %v953, %v949
  %v1146 = vpack.c.b16 %v958, %v954
  %v1147 = vpack.c.b16 %v959, %v955
  %v1148 = vpack.c.b16 %v960, %v956
  %v1149 = vpack.c.b16 %v961, %v957
  %v1150 = vpack.c.b16 %v966, %v962
  %v1151 = vpack.c.b16 %v967, %v963
  %v1152 = vpack.c.b16 %v968, %v964
  %v1153 = vpack.c.b16 %v969, %v965
  %v1154 = vpack.c.b16 %v974, %v970
  %v1155 = vpack.c.b16 %v975, %v971
  %v1156 = vpack.c.b16 %v976, %v972
  %v1157 = vpack.c.b16 %v977, %v973
  %v1158 = vpack.c.b16 %v982, %v978
  %v1159 = vpack.c.b16 %v983, %v979
  %v1160 = vpack.c.b16 %v984, %v980
  %v1161 = vpack.c.b16 %v985, %v981
  %v1162 = vpack.c.b16 %v990, %v986
  %v1163 = vpack.c.b16 %v991, %v987
  %v1164 = vpack.c.b16 %v992, %v988
  %v1165 = vpack.c.b16 %v993, %v989
  %v1166 = vpack.c.b16 %v998, %v994
  %v1167 = vpack.c.b16 %v999, %v995
  %v1168 = vpack.c.b16 %v1000, %v996
  %v1169 = vpack.c.b16 %v1001, %v997
  %v1170 = vpack.c.b16 %v1006, %v1002
  %v1171 = vpack.c.b16 %v1007, %v1003
  %v1172 = vpack.c.b16 %v1008, %v1004
  %v1173 = vpack.c.b16 %v1009, %v1005
  %v1174 = vpack.c.b16 %v1014, %v1010
  %v1175 = vpack.c.b16 %v1015, %v1011
  %v1176 = vpack.c.b16 %v1016, %v1012
  %v1177 = vpack.c.b16 %v1017, %v1013
  %v1178 = vpack.c.b16 %v1022, %v1018
  %v1179 = vpack.c.b16 %v1023, %v1019
  %v1180 = vpack.c.b16 %v1024, %v1020
  %v1181 = vpack.c.b16 %v1025, %v1021
  %v1182 = vpack.c.b16 %v1030, %v1026
  %v1183 = vpack.c.b16 %v1031, %v1027
  %v1184 = vpack.c.b16 %v1032, %v1028
  %v1185 = vpack.c.b16 %v1033, %v1029
  %v1186 = vpack.c.b16 %v1038, %v1034
  %v1187 = vpack.c.b16 %v1039, %v1035
  %v1188 = vpack.c.b16 %v1040, %v1036
  %v1189 = vpack.c.b16 %v1041, %v1037
  %v1190 = vpack.c.b16 %v1046, %v1042
  %v1191 = vpack.c.b16 %v1047, %v1043
  %v1192 = vpack.c.b16 %v1048, %v1044
  %v1193 = vpack.c.b16 %v1049, %v1045
  %v1194 = vpack.c.b16 %v1054, %v1050
  %v1195 = vpack.c.b16 %v1055, %v1051
  %v1196 = vpack.c.b16 %v1056, %v1052
  %v1197 = vpack.c.b16 %v1057, %v1053
  %v1198 = vpack.c.b16 %v1062, %v1058
  %v1199 = vpack.c.b16 %v1063, %v1059
  %v1200 = vpack.c.b16 %v1064, %v1060
  %v1201 = vpack.c.b16 %v1065, %v1061
  %v1202 = vpack.c.b16 %v1070, %v1066
  %v1203 = vpack.c.b16 %v1071, %v1067
  %v1204 = vpack.c.b16 %v1072, %v1068
  %v1205 = vpack.c.b16 %v1073, %v1069
  %v1206 = vpack.c.b16 %v1078, %v1074
  %v1207 = vpack.c.b16 %v1079, %v1075
  %v1208 = vpack.c.b16 %v1080, %v1076
  %v1209 = vpack.c.b16 %v1081, %v1077
  %1338 = vmatprep.subr.bf16.mxu0 %v1083
  %1339 = vmatpush1.bf16.msra.mxu0 %v1082
  %1340 = vmatprep.subr.bf16.mxu0 %v1087
  %1341 = vmatpush1.bf16.msra.mxu0 %v1086
  %1342 = vmatprep.subr.bf16.mxu0 %v1091
  %1343 = vmatpush1.bf16.msra.mxu0 %v1090
  %1344 = vmatprep.subr.bf16.mxu0 %v1095
  %1345 = vmatpush1.bf16.msra.mxu0 %v1094
  %1346 = vmatprep.subr.bf16.mxu0 %v1099
  %1347 = vmatpush1.bf16.msra.mxu0 %v1098
  %1348 = vmatprep.subr.bf16.mxu0 %v1103
  %1349 = vmatpush1.bf16.msra.mxu0 %v1102
  %1350 = vmatprep.subr.bf16.mxu0 %v1107
  %1351 = vmatpush1.bf16.msra.mxu0 %v1106
  %1352 = vmatprep.subr.bf16.mxu0 %v1111
  %1353 = vmatpush1.bf16.msra.mxu0 %v1110
  %1354 = vmatprep.subr.bf16.mxu0 %v1115
  %1355 = vmatpush1.bf16.msra.mxu0 %v1114
  %1356 = vmatprep.subr.bf16.mxu0 %v1119
  %1357 = vmatpush1.bf16.msra.mxu0 %v1118
  %1358 = vmatprep.subr.bf16.mxu0 %v1123
  %1359 = vmatpush1.bf16.msra.mxu0 %v1122
  %1360 = vmatprep.subr.bf16.mxu0 %v1127
  %1361 = vmatpush1.bf16.msra.mxu0 %v1126
  %1362 = vmatprep.subr.bf16.mxu0 %v1131
  %1363 = vmatpush1.bf16.msra.mxu0 %v1130
  %1364 = vmatprep.subr.bf16.mxu0 %v1135
  %1365 = vmatpush1.bf16.msra.mxu0 %v1134
  %1366 = vmatprep.subr.bf16.mxu0 %v1139
  %1367 = vmatpush1.bf16.msra.mxu0 %v1138
  %1368 = vmatprep.subr.bf16.mxu0 %v1143
  %1369 = vmatpush1.bf16.msra.mxu0 %v1142
  %1370 = vmatprep.mubr.bf16.mxu0 %v673
  %1371 = vmatmul.mubr.bf16.gmra.mrb[0].mxu0 %v672
  %v1372 = vpop.f32.mrb[0].mxu0
  %v1373 = vadd.f32 %v681, %v1372
  %v1374 = vpop.f32.mrb[0].mxu0
  %v1375 = vadd.f32 %v685, %v1374
  %v1376 = vpop.f32.mrb[0].mxu0
  %v1377 = vadd.f32 %v681, %v1376
  %v1378 = vpop.f32.mrb[0].mxu0
  %v1379 = vadd.f32 %v685, %v1378
  %1380 = vdwg.mxu0
  %1381 = vmatprep.subr.bf16.mxu0 %v1147
  %1382 = vmatpush1.bf16.msra.mxu0 %v1146
  %1383 = vmatprep.subr.bf16.mxu0 %v1151
  %1384 = vmatpush1.bf16.msra.mxu0 %v1150
  %1385 = vmatprep.subr.bf16.mxu0 %v1155
  %1386 = vmatpush1.bf16.msra.mxu0 %v1154
  %1387 = vmatprep.subr.bf16.mxu0 %v1159
  %1388 = vmatpush1.bf16.msra.mxu0 %v1158
  %1389 = vmatprep.subr.bf16.mxu0 %v1163
  %1390 = vmatpush1.bf16.msra.mxu0 %v1162
  %1391 = vmatprep.subr.bf16.mxu0 %v1167
  %1392 = vmatpush1.bf16.msra.mxu0 %v1166
  %1393 = vmatprep.subr.bf16.mxu0 %v1171
  %1394 = vmatpush1.bf16.msra.mxu0 %v1170
  %1395 = vmatprep.subr.bf16.mxu0 %v1175
  %1396 = vmatpush1.bf16.msra.mxu0 %v1174
  %1397 = vmatprep.subr.bf16.mxu0 %v1179
  %1398 = vmatpush1.bf16.msra.mxu0 %v1178
  %1399 = vmatprep.subr.bf16.mxu0 %v1183
  %1400 = vmatpush1.bf16.msra.mxu0 %v1182
  %1401 = vmatprep.subr.bf16.mxu0 %v1187
  %1402 = vmatpush1.bf16.msra.mxu0 %v1186
  %1403 = vmatprep.subr.bf16.mxu0 %v1191
  %1404 = vmatpush1.bf16.msra.mxu0 %v1190
  %1405 = vmatprep.subr.bf16.mxu0 %v1195
  %1406 = vmatpush1.bf16.msra.mxu0 %v1194
  %1407 = vmatprep.subr.bf16.mxu0 %v1199
  %1408 = vmatpush1.bf16.msra.mxu0 %v1198
  %1409 = vmatprep.subr.bf16.mxu0 %v1203
  %1410 = vmatpush1.bf16.msra.mxu0 %v1202
  %1411 = vmatprep.subr.bf16.mxu0 %v1207
  %1412 = vmatpush1.bf16.msra.mxu0 %v1206
  %1413 = vmatprep.mubr.bf16.mxu0 %v675
  %1414 = vmatmul.mubr.bf16.gmra.mrb[0].mxu0 %v674
  %v1415 = vpop.f32.mrb[0].mxu0
  %v1416 = vadd.f32 %v1373, %v1415
  %v1417 = vpop.f32.mrb[0].mxu0
  %v1418 = vadd.f32 %v1375, %v1417
  %v1419 = vpop.f32.mrb[0].mxu0
  %v1420 = vadd.f32 %v1377, %v1419
  %v1421 = vpop.f32.mrb[0].mxu0
  %v1422 = vadd.f32 %v1379, %v1421
  %1423 = vdwg.mxu0
  %1424 = vmatprep.subr.bf16.mxu0 %v1085
  %1425 = vmatpush1.bf16.msra.mxu0 %v1084
  %1426 = vmatprep.subr.bf16.mxu0 %v1089
  %1427 = vmatpush1.bf16.msra.mxu0 %v1088
  %1428 = vmatprep.subr.bf16.mxu0 %v1093
  %1429 = vmatpush1.bf16.msra.mxu0 %v1092
  %1430 = vmatprep.subr.bf16.mxu0 %v1097
  %1431 = vmatpush1.bf16.msra.mxu0 %v1096
  %1432 = vmatprep.subr.bf16.mxu0 %v1101
  %1433 = vmatpush1.bf16.msra.mxu0 %v1100
  %1434 = vmatprep.subr.bf16.mxu0 %v1105
  %1435 = vmatpush1.bf16.msra.mxu0 %v1104
  %1436 = vmatprep.subr.bf16.mxu0 %v1109
  %1437 = vmatpush1.bf16.msra.mxu0 %v1108
  %1438 = vmatprep.subr.bf16.mxu0 %v1113
  %1439 = vmatpush1.bf16.msra.mxu0 %v1112
  %1440 = vmatprep.subr.bf16.mxu0 %v1117
  %1441 = vmatpush1.bf16.msra.mxu0 %v1116
  %1442 = vmatprep.subr.bf16.mxu0 %v1121
  %1443 = vmatpush1.bf16.msra.mxu0 %v1120
  %1444 = vmatprep.subr.bf16.mxu0 %v1125
  %1445 = vmatpush1.bf16.msra.mxu0 %v1124
  %1446 = vmatprep.subr.bf16.mxu0 %v1129
  %1447 = vmatpush1.bf16.msra.mxu0 %v1128
  %1448 = vmatprep.subr.bf16.mxu0 %v1133
  %1449 = vmatpush1.bf16.msra.mxu0 %v1132
  %1450 = vmatprep.subr.bf16.mxu0 %v1137
  %1451 = vmatpush1.bf16.msra.mxu0 %v1136
  %1452 = vmatprep.subr.bf16.mxu0 %v1141
  %1453 = vmatpush1.bf16.msra.mxu0 %v1140
  %1454 = vmatprep.subr.bf16.mxu0 %v1145
  %1455 = vmatpush1.bf16.msra.mxu0 %v1144
  %1456 = vmatprep.mubr.bf16.mxu0 %v673
  %1457 = vmatmul.mubr.bf16.gmra.mrb[0].mxu0 %v672
  %v1458 = vpop.f32.mrb[0].mxu0
  %v1459 = vadd.f32 %v689, %v1458
  %v1460 = vpop.f32.mrb[0].mxu0
  %v1461 = vadd.f32 %v693, %v1460
  %v1462 = vpop.f32.mrb[0].mxu0
  %v1463 = vadd.f32 %v689, %v1462
  %v1464 = vpop.f32.mrb[0].mxu0
  %v1465 = vadd.f32 %v693, %v1464
  %1466 = vdwg.mxu0
  %1467 = vmatprep.subr.bf16.mxu0 %v1149
  %1468 = vmatpush1.bf16.msra.mxu0 %v1148
  %1469 = vmatprep.subr.bf16.mxu0 %v1153
  %1470 = vmatpush1.bf16.msra.mxu0 %v1152
  %1471 = vmatprep.subr.bf16.mxu0 %v1157
  %1472 = vmatpush1.bf16.msra.mxu0 %v1156
  %1473 = vmatprep.subr.bf16.mxu0 %v1161
  %1474 = vmatpush1.bf16.msra.mxu0 %v1160
  %1475 = vmatprep.subr.bf16.mxu0 %v1165
  %1476 = vmatpush1.bf16.msra.mxu0 %v1164
  %1477 = vmatprep.subr.bf16.mxu0 %v1169
  %1478 = vmatpush1.bf16.msra.mxu0 %v1168
  %1479 = vmatprep.subr.bf16.mxu0 %v1173
  %1480 = vmatpush1.bf16.msra.mxu0 %v1172
  %1481 = vmatprep.subr.bf16.mxu0 %v1177
  %1482 = vmatpush1.bf16.msra.mxu0 %v1176
  %1483 = vmatprep.subr.bf16.mxu0 %v1181
  %1484 = vmatpush1.bf16.msra.mxu0 %v1180
  %1485 = vmatprep.subr.bf16.mxu0 %v1185
  %1486 = vmatpush1.bf16.msra.mxu0 %v1184
  %1487 = vmatprep.subr.bf16.mxu0 %v1189
  %1488 = vmatpush1.bf16.msra.mxu0 %v1188
  %1489 = vmatprep.subr.bf16.mxu0 %v1193
  %1490 = vmatpush1.bf16.msra.mxu0 %v1192
  %1491 = vmatprep.subr.bf16.mxu0 %v1197
  %1492 = vmatpush1.bf16.msra.mxu0 %v1196
  %1493 = vmatprep.subr.bf16.mxu0 %v1201
  %1494 = vmatpush1.bf16.msra.mxu0 %v1200
  %1495 = vmatprep.subr.bf16.mxu0 %v1205
  %1496 = vmatpush1.bf16.msra.mxu0 %v1204
  %1497 = vmatprep.subr.bf16.mxu0 %v1209
  %1498 = vmatpush1.bf16.msra.mxu0 %v1208
  %1499 = vmatprep.mubr.bf16.mxu0 %v675
  %1500 = vmatmul.mubr.bf16.gmra.mrb[0].mxu0 %v674
  %v1501 = vpop.f32.mrb[0].mxu0
  %v1502 = vadd.f32 %v1459, %v1501
  %v1503 = vpop.f32.mrb[0].mxu0
  %v1504 = vadd.f32 %v1461, %v1503
  %v1505 = vpop.f32.mrb[0].mxu0
  %v1506 = vadd.f32 %v1463, %v1505
  %v1507 = vpop.f32.mrb[0].mxu0
  %v1508 = vadd.f32 %v1465, %v1507
  %1509 = vdwg.mxu0
  %v1510 = vmax.f32 %v1416, 0.0
  %v1511 = vmax.f32 %v1418, 0.0
  %v1512 = vmax.f32 %v1502, 0.0
  %v1513 = vmax.f32 %v1504, 0.0
  %v1514 = vmax.f32 %v1420, 0.0
  %v1515 = vmax.f32 %v1422, 0.0
  %v1516 = vmax.f32 %v1506, 0.0
  %v1517 = vmax.f32 %v1508, 0.0
  %v1518 = vpack.c.bf16 %v1514, %v1510
  %v1519 = vpack.c.bf16 %v1515, %v1511
  %v1520 = vpack.c.bf16 %v1516, %v1512
  %v1521 = vpack.c.bf16 %v1517, %v1513
  %v1524 = vunpack.c.l.b16 %v47
  %v1525 = vunpack.c.l.b16 %v48
  %v1526 = vpack.c.b16 %v1525, %v1524
  %v1529 = vunpack.c.l.b16 %v313
  %v1530 = vunpack.c.h.b16 %v313
  %v1531 = vunpack.c.l.b16 %v314
  %v1532 = vunpack.c.h.b16 %v314
  %v1533 = vpack.c.b16 %v1529, %v1529
  %v1534 = vpack.c.b16 %v1530, %v1530
  %v1535 = vpack.c.b16 %v1531, %v1531
  %v1536 = vpack.c.b16 %v1532, %v1532
  %vm1537 = vcmask 48128
  %v1539 = vsel %vm1537, %v1526, 0
  %vm1541 = vcmask 1042432
  %v1543 = vsel %vm1541, %v1533, 0
  %v1546 = vsel %vm1541, %v1534, 0
  %v1549 = vsel %vm1541, %v1535, 0
  %v1552 = vsel %vm1541, %v1536, 0
  %1554 = vmatprep.subr.bf16.mxu0 %v1546
  %1555 = vmatpush1.bf16.msra.mxu0 %v1543
  %1556 = vmatprep.subr.bf16.mxu0 0
  %1557 = vmatpush1.bf16.msra.mxu0 0
  %1558 = vmatprep.subr.bf16.mxu0 0
  %1559 = vmatpush1.bf16.msra.mxu0 0
  %1560 = vmatprep.subr.bf16.mxu0 0
  %1561 = vmatpush1.bf16.msra.mxu0 0
  %1562 = vmatprep.subr.bf16.mxu0 0
  %1563 = vmatpush1.bf16.msra.mxu0 0
  %1564 = vmatprep.subr.bf16.mxu0 0
  %1565 = vmatpush1.bf16.msra.mxu0 0
  %1566 = vmatprep.subr.bf16.mxu0 0
  %1567 = vmatpush1.bf16.msra.mxu0 0
  %1568 = vmatprep.subr.bf16.mxu0 0
  %1569 = vmatpush1.bf16.msra.mxu0 0
  %1570 = vmatprep.subr.bf16.mxu0 0
  %1571 = vmatpush1.bf16.msra.mxu0 0
  %1572 = vmatprep.subr.bf16.mxu0 0
  %1573 = vmatpush1.bf16.msra.mxu0 0
  %1574 = vmatprep.subr.bf16.mxu0 0
  %1575 = vmatpush1.bf16.msra.mxu0 0
  %1576 = vmatprep.subr.bf16.mxu0 0
  %1577 = vmatpush1.bf16.msra.mxu0 0
  %1578 = vmatprep.subr.bf16.mxu0 0
  %1579 = vmatpush1.bf16.msra.mxu0 0
  %1580 = vmatprep.subr.bf16.mxu0 0
  %1581 = vmatpush1.bf16.msra.mxu0 0
  %1582 = vmatprep.subr.bf16.mxu0 0
  %1583 = vmatpush1.bf16.msra.mxu0 0
  %1584 = vmatprep.subr.bf16.mxu0 0
  %1585 = vmatpush1.bf16.msra.mxu0 0
  %1586 = vmatprep.mubr.bf16.mxu0 0
  %1587 = vmatmul.mubr.bf16.gmra.mrb[0].mxu0 %v1539
  %v1588 = vpop.f32.mrb[0].mxu0
  %v1589 = vadd.f32 0.0, %v1588
  %v1590 = vpop.f32.mrb[0].mxu0
  %v1591 = vadd.f32 0.0, %v1590
  %v1592 = vpop.f32.mrb[0].mxu0
  %v1593 = vadd.f32 0.0, %v1592
  %v1594 = vpop.f32.mrb[0].mxu0
  %v1595 = vadd.f32 0.0, %v1594
  %1596 = vdwg.mxu0
  %1597 = vmatprep.subr.bf16.mxu0 %v1552
  %1598 = vmatpush1.bf16.msra.mxu0 %v1549
  %1599 = vmatprep.subr.bf16.mxu0 0
  %1600 = vmatpush1.bf16.msra.mxu0 0
  %1601 = vmatprep.subr.bf16.mxu0 0
  %1602 = vmatpush1.bf16.msra.mxu0 0
  %1603 = vmatprep.subr.bf16.mxu0 0
  %1604 = vmatpush1.bf16.msra.mxu0 0
  %1605 = vmatprep.subr.bf16.mxu0 0
  %1606 = vmatpush1.bf16.msra.mxu0 0
  %1607 = vmatprep.subr.bf16.mxu0 0
  %1608 = vmatpush1.bf16.msra.mxu0 0
  %1609 = vmatprep.subr.bf16.mxu0 0
  %1610 = vmatpush1.bf16.msra.mxu0 0
  %1611 = vmatprep.subr.bf16.mxu0 0
  %1612 = vmatpush1.bf16.msra.mxu0 0
  %1613 = vmatprep.subr.bf16.mxu0 0
  %1614 = vmatpush1.bf16.msra.mxu0 0
  %1615 = vmatprep.subr.bf16.mxu0 0
  %1616 = vmatpush1.bf16.msra.mxu0 0
  %1617 = vmatprep.subr.bf16.mxu0 0
  %1618 = vmatpush1.bf16.msra.mxu0 0
  %1619 = vmatprep.subr.bf16.mxu0 0
  %1620 = vmatpush1.bf16.msra.mxu0 0
  %1621 = vmatprep.subr.bf16.mxu0 0
  %1622 = vmatpush1.bf16.msra.mxu0 0
  %1623 = vmatprep.subr.bf16.mxu0 0
  %1624 = vmatpush1.bf16.msra.mxu0 0
  %1625 = vmatprep.subr.bf16.mxu0 0
  %1626 = vmatpush1.bf16.msra.mxu0 0
  %1627 = vmatprep.subr.bf16.mxu0 0
  %1628 = vmatpush1.bf16.msra.mxu0 0
  %1629 = vmatprep.mubr.bf16.mxu0 0
  %1630 = vmatmul.mubr.bf16.gmra.mrb[0].mxu0 %v1539
  %v1631 = vpop.f32.mrb[0].mxu0
  %v1632 = vadd.f32 0.0, %v1631
  %v1633 = vpop.f32.mrb[0].mxu0
  %v1634 = vadd.f32 0.0, %v1633
  %v1635 = vpop.f32.mrb[0].mxu0
  %v1636 = vadd.f32 0.0, %v1635
  %v1637 = vpop.f32.mrb[0].mxu0
  %v1638 = vadd.f32 0.0, %v1637
  %1639 = vdwg.mxu0
  %v1768 = vunpack.c.l.b16 %v185
  %v1769 = vunpack.c.h.b16 %v185
  %v1770 = vunpack.c.l.b16 %v186
  %v1771 = vunpack.c.h.b16 %v186
  %v1772 = vunpack.c.l.b16 %v187
  %v1773 = vunpack.c.h.b16 %v187
  %v1774 = vunpack.c.l.b16 %v188
  %v1775 = vunpack.c.h.b16 %v188
  %v1776 = vunpack.c.l.b16 %v189
  %v1777 = vunpack.c.h.b16 %v189
  %v1778 = vunpack.c.l.b16 %v190
  %v1779 = vunpack.c.h.b16 %v190
  %v1780 = vunpack.c.l.b16 %v191
  %v1781 = vunpack.c.h.b16 %v191
  %v1782 = vunpack.c.l.b16 %v192
  %v1783 = vunpack.c.h.b16 %v192
  %v1784 = vunpack.c.l.b16 %v193
  %v1785 = vunpack.c.h.b16 %v193
  %v1786 = vunpack.c.l.b16 %v194
  %v1787 = vunpack.c.h.b16 %v194
  %v1788 = vunpack.c.l.b16 %v195
  %v1789 = vunpack.c.h.b16 %v195
  %v1790 = vunpack.c.l.b16 %v196
  %v1791 = vunpack.c.h.b16 %v196
  %v1792 = vunpack.c.l.b16 %v197
  %v1793 = vunpack.c.h.b16 %v197
  %v1794 = vunpack.c.l.b16 %v198
  %v1795 = vunpack.c.h.b16 %v198
  %v1796 = vunpack.c.l.b16 %v199
  %v1797 = vunpack.c.h.b16 %v199
  %v1798 = vunpack.c.l.b16 %v200
  %v1799 = vunpack.c.h.b16 %v200
  %v1800 = vunpack.c.l.b16 %v201
  %v1801 = vunpack.c.h.b16 %v201
  %v1802 = vunpack.c.l.b16 %v202
  %v1803 = vunpack.c.h.b16 %v202
  %v1804 = vunpack.c.l.b16 %v203
  %v1805 = vunpack.c.h.b16 %v203
  %v1806 = vunpack.c.l.b16 %v204
  %v1807 = vunpack.c.h.b16 %v204
  %v1808 = vunpack.c.l.b16 %v205
  %v1809 = vunpack.c.h.b16 %v205
  %v1810 = vunpack.c.l.b16 %v206
  %v1811 = vunpack.c.h.b16 %v206
  %v1812 = vunpack.c.l.b16 %v207
  %v1813 = vunpack.c.h.b16 %v207
  %v1814 = vunpack.c.l.b16 %v208
  %v1815 = vunpack.c.h.b16 %v208
  %v1816 = vunpack.c.l.b16 %v209
  %v1817 = vunpack.c.h.b16 %v209
  %v1818 = vunpack.c.l.b16 %v210
  %v1819 = vunpack.c.h.b16 %v210
  %v1820 = vunpack.c.l.b16 %v211
  %v1821 = vunpack.c.h.b16 %v211
  %v1822 = vunpack.c.l.b16 %v212
  %v1823 = vunpack.c.h.b16 %v212
  %v1824 = vunpack.c.l.b16 %v213
  %v1825 = vunpack.c.h.b16 %v213
  %v1826 = vunpack.c.l.b16 %v214
  %v1827 = vunpack.c.h.b16 %v214
  %v1828 = vunpack.c.l.b16 %v215
  %v1829 = vunpack.c.h.b16 %v215
  %v1830 = vunpack.c.l.b16 %v216
  %v1831 = vunpack.c.h.b16 %v216
  %v1832 = vunpack.c.l.b16 %v217
  %v1833 = vunpack.c.h.b16 %v217
  %v1834 = vunpack.c.l.b16 %v218
  %v1835 = vunpack.c.h.b16 %v218
  %v1836 = vunpack.c.l.b16 %v219
  %v1837 = vunpack.c.h.b16 %v219
  %v1838 = vunpack.c.l.b16 %v220
  %v1839 = vunpack.c.h.b16 %v220
  %v1840 = vunpack.c.l.b16 %v221
  %v1841 = vunpack.c.h.b16 %v221
  %v1842 = vunpack.c.l.b16 %v222
  %v1843 = vunpack.c.h.b16 %v222
  %v1844 = vunpack.c.l.b16 %v223
  %v1845 = vunpack.c.h.b16 %v223
  %v1846 = vunpack.c.l.b16 %v224
  %v1847 = vunpack.c.h.b16 %v224
  %v1848 = vunpack.c.l.b16 %v225
  %v1849 = vunpack.c.h.b16 %v225
  %v1850 = vunpack.c.l.b16 %v226
  %v1851 = vunpack.c.h.b16 %v226
  %v1852 = vunpack.c.l.b16 %v227
  %v1853 = vunpack.c.h.b16 %v227
  %v1854 = vunpack.c.l.b16 %v228
  %v1855 = vunpack.c.h.b16 %v228
  %v1856 = vunpack.c.l.b16 %v229
  %v1857 = vunpack.c.h.b16 %v229
  %v1858 = vunpack.c.l.b16 %v230
  %v1859 = vunpack.c.h.b16 %v230
  %v1860 = vunpack.c.l.b16 %v231
  %v1861 = vunpack.c.h.b16 %v231
  %v1862 = vunpack.c.l.b16 %v232
  %v1863 = vunpack.c.h.b16 %v232
  %v1864 = vunpack.c.l.b16 %v233
  %v1865 = vunpack.c.h.b16 %v233
  %v1866 = vunpack.c.l.b16 %v234
  %v1867 = vunpack.c.h.b16 %v234
  %v1868 = vunpack.c.l.b16 %v235
  %v1869 = vunpack.c.h.b16 %v235
  %v1870 = vunpack.c.l.b16 %v236
  %v1871 = vunpack.c.h.b16 %v236
  %v1872 = vunpack.c.l.b16 %v237
  %v1873 = vunpack.c.h.b16 %v237
  %v1874 = vunpack.c.l.b16 %v238
  %v1875 = vunpack.c.h.b16 %v238
  %v1876 = vunpack.c.l.b16 %v239
  %v1877 = vunpack.c.h.b16 %v239
  %v1878 = vunpack.c.l.b16 %v240
  %v1879 = vunpack.c.h.b16 %v240
  %v1880 = vunpack.c.l.b16 %v241
  %v1881 = vunpack.c.h.b16 %v241
  %v1882 = vunpack.c.l.b16 %v242
  %v1883 = vunpack.c.h.b16 %v242
  %v1884 = vunpack.c.l.b16 %v243
  %v1885 = vunpack.c.h.b16 %v243
  %v1886 = vunpack.c.l.b16 %v244
  %v1887 = vunpack.c.h.b16 %v244
  %v1888 = vunpack.c.l.b16 %v245
  %v1889 = vunpack.c.h.b16 %v245
  %v1890 = vunpack.c.l.b16 %v246
  %v1891 = vunpack.c.h.b16 %v246
  %v1892 = vunpack.c.l.b16 %v247
  %v1893 = vunpack.c.h.b16 %v247
  %v1894 = vunpack.c.l.b16 %v248
  %v1895 = vunpack.c.h.b16 %v248
  %v1896 = vunpack.c.l.b16 %v249
  %v1897 = vunpack.c.h.b16 %v249
  %v1898 = vunpack.c.l.b16 %v250
  %v1899 = vunpack.c.h.b16 %v250
  %v1900 = vunpack.c.l.b16 %v251
  %v1901 = vunpack.c.h.b16 %v251
  %v1902 = vunpack.c.l.b16 %v252
  %v1903 = vunpack.c.h.b16 %v252
  %v1904 = vunpack.c.l.b16 %v253
  %v1905 = vunpack.c.h.b16 %v253
  %v1906 = vunpack.c.l.b16 %v254
  %v1907 = vunpack.c.h.b16 %v254
  %v1908 = vunpack.c.l.b16 %v255
  %v1909 = vunpack.c.h.b16 %v255
  %v1910 = vunpack.c.l.b16 %v256
  %v1911 = vunpack.c.h.b16 %v256
  %v1912 = vunpack.c.l.b16 %v257
  %v1913 = vunpack.c.h.b16 %v257
  %v1914 = vunpack.c.l.b16 %v258
  %v1915 = vunpack.c.h.b16 %v258
  %v1916 = vunpack.c.l.b16 %v259
  %v1917 = vunpack.c.h.b16 %v259
  %v1918 = vunpack.c.l.b16 %v260
  %v1919 = vunpack.c.h.b16 %v260
  %v1920 = vunpack.c.l.b16 %v261
  %v1921 = vunpack.c.h.b16 %v261
  %v1922 = vunpack.c.l.b16 %v262
  %v1923 = vunpack.c.h.b16 %v262
  %v1924 = vunpack.c.l.b16 %v263
  %v1925 = vunpack.c.h.b16 %v263
  %v1926 = vunpack.c.l.b16 %v264
  %v1927 = vunpack.c.h.b16 %v264
  %v1928 = vunpack.c.l.b16 %v265
  %v1929 = vunpack.c.h.b16 %v265
  %v1930 = vunpack.c.l.b16 %v266
  %v1931 = vunpack.c.h.b16 %v266
  %v1932 = vunpack.c.l.b16 %v267
  %v1933 = vunpack.c.h.b16 %v267
  %v1934 = vunpack.c.l.b16 %v268
  %v1935 = vunpack.c.h.b16 %v268
  %v1936 = vunpack.c.l.b16 %v269
  %v1937 = vunpack.c.h.b16 %v269
  %v1938 = vunpack.c.l.b16 %v270
  %v1939 = vunpack.c.h.b16 %v270
  %v1940 = vunpack.c.l.b16 %v271
  %v1941 = vunpack.c.h.b16 %v271
  %v1942 = vunpack.c.l.b16 %v272
  %v1943 = vunpack.c.h.b16 %v272
  %v1944 = vunpack.c.l.b16 %v273
  %v1945 = vunpack.c.h.b16 %v273
  %v1946 = vunpack.c.l.b16 %v274
  %v1947 = vunpack.c.h.b16 %v274
  %v1948 = vunpack.c.l.b16 %v275
  %v1949 = vunpack.c.h.b16 %v275
  %v1950 = vunpack.c.l.b16 %v276
  %v1951 = vunpack.c.h.b16 %v276
  %v1952 = vunpack.c.l.b16 %v277
  %v1953 = vunpack.c.h.b16 %v277
  %v1954 = vunpack.c.l.b16 %v278
  %v1955 = vunpack.c.h.b16 %v278
  %v1956 = vunpack.c.l.b16 %v279
  %v1957 = vunpack.c.h.b16 %v279
  %v1958 = vunpack.c.l.b16 %v280
  %v1959 = vunpack.c.h.b16 %v280
  %v1960 = vunpack.c.l.b16 %v281
  %v1961 = vunpack.c.h.b16 %v281
  %v1962 = vunpack.c.l.b16 %v282
  %v1963 = vunpack.c.h.b16 %v282
  %v1964 = vunpack.c.l.b16 %v283
  %v1965 = vunpack.c.h.b16 %v283
  %v1966 = vunpack.c.l.b16 %v284
  %v1967 = vunpack.c.h.b16 %v284
  %v1968 = vunpack.c.l.b16 %v285
  %v1969 = vunpack.c.h.b16 %v285
  %v1970 = vunpack.c.l.b16 %v286
  %v1971 = vunpack.c.h.b16 %v286
  %v1972 = vunpack.c.l.b16 %v287
  %v1973 = vunpack.c.h.b16 %v287
  %v1974 = vunpack.c.l.b16 %v288
  %v1975 = vunpack.c.h.b16 %v288
  %v1976 = vunpack.c.l.b16 %v289
  %v1977 = vunpack.c.h.b16 %v289
  %v1978 = vunpack.c.l.b16 %v290
  %v1979 = vunpack.c.h.b16 %v290
  %v1980 = vunpack.c.l.b16 %v291
  %v1981 = vunpack.c.h.b16 %v291
  %v1982 = vunpack.c.l.b16 %v292
  %v1983 = vunpack.c.h.b16 %v292
  %v1984 = vunpack.c.l.b16 %v293
  %v1985 = vunpack.c.h.b16 %v293
  %v1986 = vunpack.c.l.b16 %v294
  %v1987 = vunpack.c.h.b16 %v294
  %v1988 = vunpack.c.l.b16 %v295
  %v1989 = vunpack.c.h.b16 %v295
  %v1990 = vunpack.c.l.b16 %v296
  %v1991 = vunpack.c.h.b16 %v296
  %v1992 = vunpack.c.l.b16 %v297
  %v1993 = vunpack.c.h.b16 %v297
  %v1994 = vunpack.c.l.b16 %v298
  %v1995 = vunpack.c.h.b16 %v298
  %v1996 = vunpack.c.l.b16 %v299
  %v1997 = vunpack.c.h.b16 %v299
  %v1998 = vunpack.c.l.b16 %v300
  %v1999 = vunpack.c.h.b16 %v300
  %v2000 = vunpack.c.l.b16 %v301
  %v2001 = vunpack.c.h.b16 %v301
  %v2002 = vunpack.c.l.b16 %v302
  %v2003 = vunpack.c.h.b16 %v302
  %v2004 = vunpack.c.l.b16 %v303
  %v2005 = vunpack.c.h.b16 %v303
  %v2006 = vunpack.c.l.b16 %v304
  %v2007 = vunpack.c.h.b16 %v304
  %v2008 = vunpack.c.l.b16 %v305
  %v2009 = vunpack.c.h.b16 %v305
  %v2010 = vunpack.c.l.b16 %v306
  %v2011 = vunpack.c.h.b16 %v306
  %v2012 = vunpack.c.l.b16 %v307
  %v2013 = vunpack.c.h.b16 %v307
  %v2014 = vunpack.c.l.b16 %v308
  %v2015 = vunpack.c.h.b16 %v308
  %v2016 = vunpack.c.l.b16 %v309
  %v2017 = vunpack.c.h.b16 %v309
  %v2018 = vunpack.c.l.b16 %v310
  %v2019 = vunpack.c.h.b16 %v310
  %v2020 = vunpack.c.l.b16 %v311
  %v2021 = vunpack.c.h.b16 %v311
  %v2022 = vunpack.c.l.b16 %v312
  %v2023 = vunpack.c.h.b16 %v312
  %v2024 = vpack.c.b16 %v1772, %v1768
  %v2025 = vpack.c.b16 %v1773, %v1769
  %v2026 = vpack.c.b16 %v1774, %v1770
  %v2027 = vpack.c.b16 %v1775, %v1771
  %v2028 = vpack.c.b16 %v1780, %v1776
  %v2029 = vpack.c.b16 %v1781, %v1777
  %v2030 = vpack.c.b16 %v1782, %v1778
  %v2031 = vpack.c.b16 %v1783, %v1779
  %v2032 = vpack.c.b16 %v1788, %v1784
  %v2033 = vpack.c.b16 %v1789, %v1785
  %v2034 = vpack.c.b16 %v1790, %v1786
  %v2035 = vpack.c.b16 %v1791, %v1787
  %v2036 = vpack.c.b16 %v1796, %v1792
  %v2037 = vpack.c.b16 %v1797, %v1793
  %v2038 = vpack.c.b16 %v1798, %v1794
  %v2039 = vpack.c.b16 %v1799, %v1795
  %v2040 = vpack.c.b16 %v1804, %v1800
  %v2041 = vpack.c.b16 %v1805, %v1801
  %v2042 = vpack.c.b16 %v1806, %v1802
  %v2043 = vpack.c.b16 %v1807, %v1803
  %v2044 = vpack.c.b16 %v1812, %v1808
  %v2045 = vpack.c.b16 %v1813, %v1809
  %v2046 = vpack.c.b16 %v1814, %v1810
  %v2047 = vpack.c.b16 %v1815, %v1811
  %v2048 = vpack.c.b16 %v1820, %v1816
  %v2049 = vpack.c.b16 %v1821, %v1817
  %v2050 = vpack.c.b16 %v1822, %v1818
  %v2051 = vpack.c.b16 %v1823, %v1819
  %v2052 = vpack.c.b16 %v1828, %v1824
  %v2053 = vpack.c.b16 %v1829, %v1825
  %v2054 = vpack.c.b16 %v1830, %v1826
  %v2055 = vpack.c.b16 %v1831, %v1827
  %v2056 = vpack.c.b16 %v1836, %v1832
  %v2057 = vpack.c.b16 %v1837, %v1833
  %v2058 = vpack.c.b16 %v1838, %v1834
  %v2059 = vpack.c.b16 %v1839, %v1835
  %v2060 = vpack.c.b16 %v1844, %v1840
  %v2061 = vpack.c.b16 %v1845, %v1841
  %v2062 = vpack.c.b16 %v1846, %v1842
  %v2063 = vpack.c.b16 %v1847, %v1843
  %v2064 = vpack.c.b16 %v1852, %v1848
  %v2065 = vpack.c.b16 %v1853, %v1849
  %v2066 = vpack.c.b16 %v1854, %v1850
  %v2067 = vpack.c.b16 %v1855, %v1851
  %v2068 = vpack.c.b16 %v1860, %v1856
  %v2069 = vpack.c.b16 %v1861, %v1857
  %v2070 = vpack.c.b16 %v1862, %v1858
  %v2071 = vpack.c.b16 %v1863, %v1859
  %v2072 = vpack.c.b16 %v1868, %v1864
  %v2073 = vpack.c.b16 %v1869, %v1865
  %v2074 = vpack.c.b16 %v1870, %v1866
  %v2075 = vpack.c.b16 %v1871, %v1867
  %v2076 = vpack.c.b16 %v1876, %v1872
  %v2077 = vpack.c.b16 %v1877, %v1873
  %v2078 = vpack.c.b16 %v1878, %v1874
  %v2079 = vpack.c.b16 %v1879, %v1875
  %v2080 = vpack.c.b16 %v1884, %v1880
  %v2081 = vpack.c.b16 %v1885, %v1881
  %v2082 = vpack.c.b16 %v1886, %v1882
  %v2083 = vpack.c.b16 %v1887, %v1883
  %v2084 = vpack.c.b16 %v1892, %v1888
  %v2085 = vpack.c.b16 %v1893, %v1889
  %v2086 = vpack.c.b16 %v1894, %v1890
  %v2087 = vpack.c.b16 %v1895, %v1891
  %v2088 = vpack.c.b16 %v1900, %v1896
  %v2089 = vpack.c.b16 %v1901, %v1897
  %v2090 = vpack.c.b16 %v1902, %v1898
  %v2091 = vpack.c.b16 %v1903, %v1899
  %v2092 = vpack.c.b16 %v1908, %v1904
  %v2093 = vpack.c.b16 %v1909, %v1905
  %v2094 = vpack.c.b16 %v1910, %v1906
  %v2095 = vpack.c.b16 %v1911, %v1907
  %v2096 = vpack.c.b16 %v1916, %v1912
  %v2097 = vpack.c.b16 %v1917, %v1913
  %v2098 = vpack.c.b16 %v1918, %v1914
  %v2099 = vpack.c.b16 %v1919, %v1915
  %v2100 = vpack.c.b16 %v1924, %v1920
  %v2101 = vpack.c.b16 %v1925, %v1921
  %v2102 = vpack.c.b16 %v1926, %v1922
  %v2103 = vpack.c.b16 %v1927, %v1923
  %v2104 = vpack.c.b16 %v1932, %v1928
  %v2105 = vpack.c.b16 %v1933, %v1929
  %v2106 = vpack.c.b16 %v1934, %v1930
  %v2107 = vpack.c.b16 %v1935, %v1931
  %v2108 = vpack.c.b16 %v1940, %v1936
  %v2109 = vpack.c.b16 %v1941, %v1937
  %v2110 = vpack.c.b16 %v1942, %v1938
  %v2111 = vpack.c.b16 %v1943, %v1939
  %v2112 = vpack.c.b16 %v1948, %v1944
  %v2113 = vpack.c.b16 %v1949, %v1945
  %v2114 = vpack.c.b16 %v1950, %v1946
  %v2115 = vpack.c.b16 %v1951, %v1947
  %v2116 = vpack.c.b16 %v1956, %v1952
  %v2117 = vpack.c.b16 %v1957, %v1953
  %v2118 = vpack.c.b16 %v1958, %v1954
  %v2119 = vpack.c.b16 %v1959, %v1955
  %v2120 = vpack.c.b16 %v1964, %v1960
  %v2121 = vpack.c.b16 %v1965, %v1961
  %v2122 = vpack.c.b16 %v1966, %v1962
  %v2123 = vpack.c.b16 %v1967, %v1963
  %v2124 = vpack.c.b16 %v1972, %v1968
  %v2125 = vpack.c.b16 %v1973, %v1969
  %v2126 = vpack.c.b16 %v1974, %v1970
  %v2127 = vpack.c.b16 %v1975, %v1971
  %v2128 = vpack.c.b16 %v1980, %v1976
  %v2129 = vpack.c.b16 %v1981, %v1977
  %v2130 = vpack.c.b16 %v1982, %v1978
  %v2131 = vpack.c.b16 %v1983, %v1979
  %v2132 = vpack.c.b16 %v1988, %v1984
  %v2133 = vpack.c.b16 %v1989, %v1985
  %v2134 = vpack.c.b16 %v1990, %v1986
  %v2135 = vpack.c.b16 %v1991, %v1987
  %v2136 = vpack.c.b16 %v1996, %v1992
  %v2137 = vpack.c.b16 %v1997, %v1993
  %v2138 = vpack.c.b16 %v1998, %v1994
  %v2139 = vpack.c.b16 %v1999, %v1995
  %v2140 = vpack.c.b16 %v2004, %v2000
  %v2141 = vpack.c.b16 %v2005, %v2001
  %v2142 = vpack.c.b16 %v2006, %v2002
  %v2143 = vpack.c.b16 %v2007, %v2003
  %v2144 = vpack.c.b16 %v2012, %v2008
  %v2145 = vpack.c.b16 %v2013, %v2009
  %v2146 = vpack.c.b16 %v2014, %v2010
  %v2147 = vpack.c.b16 %v2015, %v2011
  %v2148 = vpack.c.b16 %v2020, %v2016
  %v2149 = vpack.c.b16 %v2021, %v2017
  %v2150 = vpack.c.b16 %v2022, %v2018
  %v2151 = vpack.c.b16 %v2023, %v2019
  %2280 = vmatprep.subr.bf16.mxu0 %v2025
  %2281 = vmatpush1.bf16.msra.mxu0 %v2024
  %2282 = vmatprep.subr.bf16.mxu0 %v2029
  %2283 = vmatpush1.bf16.msra.mxu0 %v2028
  %2284 = vmatprep.subr.bf16.mxu0 %v2033
  %2285 = vmatpush1.bf16.msra.mxu0 %v2032
  %2286 = vmatprep.subr.bf16.mxu0 %v2037
  %2287 = vmatpush1.bf16.msra.mxu0 %v2036
  %2288 = vmatprep.subr.bf16.mxu0 %v2041
  %2289 = vmatpush1.bf16.msra.mxu0 %v2040
  %2290 = vmatprep.subr.bf16.mxu0 %v2045
  %2291 = vmatpush1.bf16.msra.mxu0 %v2044
  %2292 = vmatprep.subr.bf16.mxu0 %v2049
  %2293 = vmatpush1.bf16.msra.mxu0 %v2048
  %2294 = vmatprep.subr.bf16.mxu0 %v2053
  %2295 = vmatpush1.bf16.msra.mxu0 %v2052
  %2296 = vmatprep.subr.bf16.mxu0 %v2057
  %2297 = vmatpush1.bf16.msra.mxu0 %v2056
  %2298 = vmatprep.subr.bf16.mxu0 %v2061
  %2299 = vmatpush1.bf16.msra.mxu0 %v2060
  %2300 = vmatprep.subr.bf16.mxu0 %v2065
  %2301 = vmatpush1.bf16.msra.mxu0 %v2064
  %2302 = vmatprep.subr.bf16.mxu0 %v2069
  %2303 = vmatpush1.bf16.msra.mxu0 %v2068
  %2304 = vmatprep.subr.bf16.mxu0 %v2073
  %2305 = vmatpush1.bf16.msra.mxu0 %v2072
  %2306 = vmatprep.subr.bf16.mxu0 %v2077
  %2307 = vmatpush1.bf16.msra.mxu0 %v2076
  %2308 = vmatprep.subr.bf16.mxu0 %v2081
  %2309 = vmatpush1.bf16.msra.mxu0 %v2080
  %2310 = vmatprep.subr.bf16.mxu0 %v2085
  %2311 = vmatpush1.bf16.msra.mxu0 %v2084
  %2312 = vmatprep.mubr.bf16.mxu0 %v1519
  %2313 = vmatmul.mubr.bf16.gmra.mrb[0].mxu0 %v1518
  %v2314 = vpop.f32.mrb[0].mxu0
  %v2315 = vadd.f32 %v1589, %v2314
  %v2316 = vpop.f32.mrb[0].mxu0
  %v2317 = vadd.f32 %v1591, %v2316
  %v2318 = vpop.f32.mrb[0].mxu0
  %v2319 = vadd.f32 %v1593, %v2318
  %v2320 = vpop.f32.mrb[0].mxu0
  %v2321 = vadd.f32 %v1595, %v2320
  %2322 = vdwg.mxu0
  %2323 = vmatprep.subr.bf16.mxu0 %v2089
  %2324 = vmatpush1.bf16.msra.mxu0 %v2088
  %2325 = vmatprep.subr.bf16.mxu0 %v2093
  %2326 = vmatpush1.bf16.msra.mxu0 %v2092
  %2327 = vmatprep.subr.bf16.mxu0 %v2097
  %2328 = vmatpush1.bf16.msra.mxu0 %v2096
  %2329 = vmatprep.subr.bf16.mxu0 %v2101
  %2330 = vmatpush1.bf16.msra.mxu0 %v2100
  %2331 = vmatprep.subr.bf16.mxu0 %v2105
  %2332 = vmatpush1.bf16.msra.mxu0 %v2104
  %2333 = vmatprep.subr.bf16.mxu0 %v2109
  %2334 = vmatpush1.bf16.msra.mxu0 %v2108
  %2335 = vmatprep.subr.bf16.mxu0 %v2113
  %2336 = vmatpush1.bf16.msra.mxu0 %v2112
  %2337 = vmatprep.subr.bf16.mxu0 %v2117
  %2338 = vmatpush1.bf16.msra.mxu0 %v2116
  %2339 = vmatprep.subr.bf16.mxu0 %v2121
  %2340 = vmatpush1.bf16.msra.mxu0 %v2120
  %2341 = vmatprep.subr.bf16.mxu0 %v2125
  %2342 = vmatpush1.bf16.msra.mxu0 %v2124
  %2343 = vmatprep.subr.bf16.mxu0 %v2129
  %2344 = vmatpush1.bf16.msra.mxu0 %v2128
  %2345 = vmatprep.subr.bf16.mxu0 %v2133
  %2346 = vmatpush1.bf16.msra.mxu0 %v2132
  %2347 = vmatprep.subr.bf16.mxu0 %v2137
  %2348 = vmatpush1.bf16.msra.mxu0 %v2136
  %2349 = vmatprep.subr.bf16.mxu0 %v2141
  %2350 = vmatpush1.bf16.msra.mxu0 %v2140
  %2351 = vmatprep.subr.bf16.mxu0 %v2145
  %2352 = vmatpush1.bf16.msra.mxu0 %v2144
  %2353 = vmatprep.subr.bf16.mxu0 %v2149
  %2354 = vmatpush1.bf16.msra.mxu0 %v2148
  %2355 = vmatprep.mubr.bf16.mxu0 %v1521
  %2356 = vmatmul.mubr.bf16.gmra.mrb[0].mxu0 %v1520
  %v2357 = vpop.f32.mrb[0].mxu0
  %v2358 = vadd.f32 %v2315, %v2357
  %v2359 = vpop.f32.mrb[0].mxu0
  %v2360 = vadd.f32 %v2317, %v2359
  %v2361 = vpop.f32.mrb[0].mxu0
  %v2362 = vadd.f32 %v2319, %v2361
  %v2363 = vpop.f32.mrb[0].mxu0
  %v2364 = vadd.f32 %v2321, %v2363
  %2365 = vdwg.mxu0
  %2366 = vmatprep.subr.bf16.mxu0 %v2027
  %2367 = vmatpush1.bf16.msra.mxu0 %v2026
  %2368 = vmatprep.subr.bf16.mxu0 %v2031
  %2369 = vmatpush1.bf16.msra.mxu0 %v2030
  %2370 = vmatprep.subr.bf16.mxu0 %v2035
  %2371 = vmatpush1.bf16.msra.mxu0 %v2034
  %2372 = vmatprep.subr.bf16.mxu0 %v2039
  %2373 = vmatpush1.bf16.msra.mxu0 %v2038
  %2374 = vmatprep.subr.bf16.mxu0 %v2043
  %2375 = vmatpush1.bf16.msra.mxu0 %v2042
  %2376 = vmatprep.subr.bf16.mxu0 %v2047
  %2377 = vmatpush1.bf16.msra.mxu0 %v2046
  %2378 = vmatprep.subr.bf16.mxu0 %v2051
  %2379 = vmatpush1.bf16.msra.mxu0 %v2050
  %2380 = vmatprep.subr.bf16.mxu0 %v2055
  %2381 = vmatpush1.bf16.msra.mxu0 %v2054
  %2382 = vmatprep.subr.bf16.mxu0 %v2059
  %2383 = vmatpush1.bf16.msra.mxu0 %v2058
  %2384 = vmatprep.subr.bf16.mxu0 %v2063
  %2385 = vmatpush1.bf16.msra.mxu0 %v2062
  %2386 = vmatprep.subr.bf16.mxu0 %v2067
  %2387 = vmatpush1.bf16.msra.mxu0 %v2066
  %2388 = vmatprep.subr.bf16.mxu0 %v2071
  %2389 = vmatpush1.bf16.msra.mxu0 %v2070
  %2390 = vmatprep.subr.bf16.mxu0 %v2075
  %2391 = vmatpush1.bf16.msra.mxu0 %v2074
  %2392 = vmatprep.subr.bf16.mxu0 %v2079
  %2393 = vmatpush1.bf16.msra.mxu0 %v2078
  %2394 = vmatprep.subr.bf16.mxu0 %v2083
  %2395 = vmatpush1.bf16.msra.mxu0 %v2082
  %2396 = vmatprep.subr.bf16.mxu0 %v2087
  %2397 = vmatpush1.bf16.msra.mxu0 %v2086
  %2398 = vmatprep.mubr.bf16.mxu0 %v1519
  %2399 = vmatmul.mubr.bf16.gmra.mrb[0].mxu0 %v1518
  %v2400 = vpop.f32.mrb[0].mxu0
  %v2401 = vadd.f32 %v1632, %v2400
  %v2402 = vpop.f32.mrb[0].mxu0
  %v2403 = vadd.f32 %v1634, %v2402
  %v2404 = vpop.f32.mrb[0].mxu0
  %v2405 = vadd.f32 %v1636, %v2404
  %v2406 = vpop.f32.mrb[0].mxu0
  %v2407 = vadd.f32 %v1638, %v2406
  %2408 = vdwg.mxu0
  %2409 = vmatprep.subr.bf16.mxu0 %v2091
  %2410 = vmatpush1.bf16.msra.mxu0 %v2090
  %2411 = vmatprep.subr.bf16.mxu0 %v2095
  %2412 = vmatpush1.bf16.msra.mxu0 %v2094
  %2413 = vmatprep.subr.bf16.mxu0 %v2099
  %2414 = vmatpush1.bf16.msra.mxu0 %v2098
  %2415 = vmatprep.subr.bf16.mxu0 %v2103
  %2416 = vmatpush1.bf16.msra.mxu0 %v2102
  %2417 = vmatprep.subr.bf16.mxu0 %v2107
  %2418 = vmatpush1.bf16.msra.mxu0 %v2106
  %2419 = vmatprep.subr.bf16.mxu0 %v2111
  %2420 = vmatpush1.bf16.msra.mxu0 %v2110
  %2421 = vmatprep.subr.bf16.mxu0 %v2115
  %2422 = vmatpush1.bf16.msra.mxu0 %v2114
  %2423 = vmatprep.subr.bf16.mxu0 %v2119
  %2424 = vmatpush1.bf16.msra.mxu0 %v2118
  %2425 = vmatprep.subr.bf16.mxu0 %v2123
  %2426 = vmatpush1.bf16.msra.mxu0 %v2122
  %2427 = vmatprep.subr.bf16.mxu0 %v2127
  %2428 = vmatpush1.bf16.msra.mxu0 %v2126
  %2429 = vmatprep.subr.bf16.mxu0 %v2131
  %2430 = vmatpush1.bf16.msra.mxu0 %v2130
  %2431 = vmatprep.subr.bf16.mxu0 %v2135
  %2432 = vmatpush1.bf16.msra.mxu0 %v2134
  %2433 = vmatprep.subr.bf16.mxu0 %v2139
  %2434 = vmatpush1.bf16.msra.mxu0 %v2138
  %2435 = vmatprep.subr.bf16.mxu0 %v2143
  %2436 = vmatpush1.bf16.msra.mxu0 %v2142
  %2437 = vmatprep.subr.bf16.mxu0 %v2147
  %2438 = vmatpush1.bf16.msra.mxu0 %v2146
  %2439 = vmatprep.subr.bf16.mxu0 %v2151
  %2440 = vmatpush1.bf16.msra.mxu0 %v2150
  %2441 = vmatprep.mubr.bf16.mxu0 %v1521
  %2442 = vmatmul.mubr.bf16.gmra.mrb[0].mxu0 %v1520
  %v2443 = vpop.f32.mrb[0].mxu0
  %v2444 = vadd.f32 %v2401, %v2443
  %v2445 = vpop.f32.mrb[0].mxu0
  %v2446 = vadd.f32 %v2403, %v2445
  %v2447 = vpop.f32.mrb[0].mxu0
  %v2448 = vadd.f32 %v2405, %v2447
  %v2449 = vpop.f32.mrb[0].mxu0
  %v2450 = vadd.f32 %v2407, %v2449
  %2451 = vdwg.mxu0
  %v2452 = vld [vmem:[%s8] sm:$0xf]
  %v2454 = vlaneseq
  %v2455 = vshrl.u32 %v2454, 7
  %v2456 = vsub.s32 0, %v2455
  %v2457 = vrot.slane %v2452, %v2456
  %v2458 = vlaneseq
  %v2459 = vshrl.u32 %v2458, 7
  %v2460 = vsub.s32 1, %v2459
  %v2461 = vrot.slane %v2452, %v2460
  %v2462 = vlaneseq
  %v2463 = vshrl.u32 %v2462, 7
  %v2464 = vsub.s32 2, %v2463
  %v2465 = vrot.slane %v2452, %v2464
  %v2466 = vlaneseq
  %v2467 = vshrl.u32 %v2466, 7
  %v2468 = vsub.s32 3, %v2467
  %v2469 = vrot.slane %v2452, %v2468
  %v2474 = vadd.f32 %v2358, %v2457
  %v2475 = vadd.f32 %v2360, %v2461
  %v2476 = vadd.f32 %v2444, %v2465
  %v2477 = vadd.f32 %v2446, %v2469
  %v2478 = vadd.f32 %v2362, %v2457
  %v2479 = vadd.f32 %v2364, %v2461
  %v2480 = vadd.f32 %v2448, %v2465
  %v2481 = vadd.f32 %v2450, %v2469
  %v2482 = vmax.f32 %v2474, 0.0
  %v2483 = vmax.f32 %v2475, 0.0
  %v2484 = vmax.f32 %v2476, 0.0
  %v2485 = vmax.f32 %v2477, 0.0
  %v2486 = vmax.f32 %v2478, 0.0
  %v2487 = vmax.f32 %v2479, 0.0
  %v2488 = vmax.f32 %v2480, 0.0
  %v2489 = vmax.f32 %v2481, 0.0
  %v2490 = vpack.c.bf16 %v2486, %v2482
  %v2491 = vpack.c.bf16 %v2487, %v2483
  %v2492 = vpack.c.bf16 %v2488, %v2484
  %v2493 = vpack.c.bf16 %v2489, %v2485
  %v2494 = vld [vmem:[%s10] sm:$0xf]
  %v2496 = vlaneseq
  %v2497 = vshrl.u32 %v2496, 7
  %v2498 = vsub.s32 0, %v2497
  %v2499 = vrot.slane %v2494, %v2498
  %v2500 = vlaneseq
  %v2501 = vshrl.u32 %v2500, 7
  %v2502 = vsub.s32 1, %v2501
  %v2503 = vrot.slane %v2494, %v2502
  %v2504 = vlaneseq
  %v2505 = vshrl.u32 %v2504, 7
  %v2506 = vsub.s32 2, %v2505
  %v2507 = vrot.slane %v2494, %v2506
  %v2508 = vlaneseq
  %v2509 = vshrl.u32 %v2508, 7
  %v2510 = vsub.s32 3, %v2509
  %v2511 = vrot.slane %v2494, %v2510
  %v2644 = vunpack.c.l.b16 %v315
  %v2645 = vunpack.c.h.b16 %v315
  %v2646 = vunpack.c.l.b16 %v316
  %v2647 = vunpack.c.h.b16 %v316
  %v2648 = vunpack.c.l.b16 %v317
  %v2649 = vunpack.c.h.b16 %v317
  %v2650 = vunpack.c.l.b16 %v318
  %v2651 = vunpack.c.h.b16 %v318
  %v2652 = vunpack.c.l.b16 %v319
  %v2653 = vunpack.c.h.b16 %v319
  %v2654 = vunpack.c.l.b16 %v320
  %v2655 = vunpack.c.h.b16 %v320
  %v2656 = vunpack.c.l.b16 %v321
  %v2657 = vunpack.c.h.b16 %v321
  %v2658 = vunpack.c.l.b16 %v322
  %v2659 = vunpack.c.h.b16 %v322
  %v2660 = vunpack.c.l.b16 %v323
  %v2661 = vunpack.c.h.b16 %v323
  %v2662 = vunpack.c.l.b16 %v324
  %v2663 = vunpack.c.h.b16 %v324
  %v2664 = vunpack.c.l.b16 %v325
  %v2665 = vunpack.c.h.b16 %v325
  %v2666 = vunpack.c.l.b16 %v326
  %v2667 = vunpack.c.h.b16 %v326
  %v2668 = vunpack.c.l.b16 %v327
  %v2669 = vunpack.c.h.b16 %v327
  %v2670 = vunpack.c.l.b16 %v328
  %v2671 = vunpack.c.h.b16 %v328
  %v2672 = vunpack.c.l.b16 %v329
  %v2673 = vunpack.c.h.b16 %v329
  %v2674 = vunpack.c.l.b16 %v330
  %v2675 = vunpack.c.h.b16 %v330
  %v2676 = vunpack.c.l.b16 %v331
  %v2677 = vunpack.c.h.b16 %v331
  %v2678 = vunpack.c.l.b16 %v332
  %v2679 = vunpack.c.h.b16 %v332
  %v2680 = vunpack.c.l.b16 %v333
  %v2681 = vunpack.c.h.b16 %v333
  %v2682 = vunpack.c.l.b16 %v334
  %v2683 = vunpack.c.h.b16 %v334
  %v2684 = vunpack.c.l.b16 %v335
  %v2685 = vunpack.c.h.b16 %v335
  %v2686 = vunpack.c.l.b16 %v336
  %v2687 = vunpack.c.h.b16 %v336
  %v2688 = vunpack.c.l.b16 %v337
  %v2689 = vunpack.c.h.b16 %v337
  %v2690 = vunpack.c.l.b16 %v338
  %v2691 = vunpack.c.h.b16 %v338
  %v2692 = vunpack.c.l.b16 %v339
  %v2693 = vunpack.c.h.b16 %v339
  %v2694 = vunpack.c.l.b16 %v340
  %v2695 = vunpack.c.h.b16 %v340
  %v2696 = vunpack.c.l.b16 %v341
  %v2697 = vunpack.c.h.b16 %v341
  %v2698 = vunpack.c.l.b16 %v342
  %v2699 = vunpack.c.h.b16 %v342
  %v2700 = vunpack.c.l.b16 %v343
  %v2701 = vunpack.c.h.b16 %v343
  %v2702 = vunpack.c.l.b16 %v344
  %v2703 = vunpack.c.h.b16 %v344
  %v2704 = vunpack.c.l.b16 %v345
  %v2705 = vunpack.c.h.b16 %v345
  %v2706 = vunpack.c.l.b16 %v346
  %v2707 = vunpack.c.h.b16 %v346
  %v2708 = vunpack.c.l.b16 %v347
  %v2709 = vunpack.c.h.b16 %v347
  %v2710 = vunpack.c.l.b16 %v348
  %v2711 = vunpack.c.h.b16 %v348
  %v2712 = vunpack.c.l.b16 %v349
  %v2713 = vunpack.c.h.b16 %v349
  %v2714 = vunpack.c.l.b16 %v350
  %v2715 = vunpack.c.h.b16 %v350
  %v2716 = vunpack.c.l.b16 %v351
  %v2717 = vunpack.c.h.b16 %v351
  %v2718 = vunpack.c.l.b16 %v352
  %v2719 = vunpack.c.h.b16 %v352
  %v2720 = vunpack.c.l.b16 %v353
  %v2721 = vunpack.c.h.b16 %v353
  %v2722 = vunpack.c.l.b16 %v354
  %v2723 = vunpack.c.h.b16 %v354
  %v2724 = vunpack.c.l.b16 %v355
  %v2725 = vunpack.c.h.b16 %v355
  %v2726 = vunpack.c.l.b16 %v356
  %v2727 = vunpack.c.h.b16 %v356
  %v2728 = vunpack.c.l.b16 %v357
  %v2729 = vunpack.c.h.b16 %v357
  %v2730 = vunpack.c.l.b16 %v358
  %v2731 = vunpack.c.h.b16 %v358
  %v2732 = vunpack.c.l.b16 %v359
  %v2733 = vunpack.c.h.b16 %v359
  %v2734 = vunpack.c.l.b16 %v360
  %v2735 = vunpack.c.h.b16 %v360
  %v2736 = vunpack.c.l.b16 %v361
  %v2737 = vunpack.c.h.b16 %v361
  %v2738 = vunpack.c.l.b16 %v362
  %v2739 = vunpack.c.h.b16 %v362
  %v2740 = vunpack.c.l.b16 %v363
  %v2741 = vunpack.c.h.b16 %v363
  %v2742 = vunpack.c.l.b16 %v364
  %v2743 = vunpack.c.h.b16 %v364
  %v2744 = vunpack.c.l.b16 %v365
  %v2745 = vunpack.c.h.b16 %v365
  %v2746 = vunpack.c.l.b16 %v366
  %v2747 = vunpack.c.h.b16 %v366
  %v2748 = vunpack.c.l.b16 %v367
  %v2749 = vunpack.c.h.b16 %v367
  %v2750 = vunpack.c.l.b16 %v368
  %v2751 = vunpack.c.h.b16 %v368
  %v2752 = vunpack.c.l.b16 %v369
  %v2753 = vunpack.c.h.b16 %v369
  %v2754 = vunpack.c.l.b16 %v370
  %v2755 = vunpack.c.h.b16 %v370
  %v2756 = vunpack.c.l.b16 %v371
  %v2757 = vunpack.c.h.b16 %v371
  %v2758 = vunpack.c.l.b16 %v372
  %v2759 = vunpack.c.h.b16 %v372
  %v2760 = vunpack.c.l.b16 %v373
  %v2761 = vunpack.c.h.b16 %v373
  %v2762 = vunpack.c.l.b16 %v374
  %v2763 = vunpack.c.h.b16 %v374
  %v2764 = vunpack.c.l.b16 %v375
  %v2765 = vunpack.c.h.b16 %v375
  %v2766 = vunpack.c.l.b16 %v376
  %v2767 = vunpack.c.h.b16 %v376
  %v2768 = vunpack.c.l.b16 %v377
  %v2769 = vunpack.c.h.b16 %v377
  %v2770 = vunpack.c.l.b16 %v378
  %v2771 = vunpack.c.h.b16 %v378
  %v2772 = vunpack.c.l.b16 %v379
  %v2773 = vunpack.c.h.b16 %v379
  %v2774 = vunpack.c.l.b16 %v380
  %v2775 = vunpack.c.h.b16 %v380
  %v2776 = vunpack.c.l.b16 %v381
  %v2777 = vunpack.c.h.b16 %v381
  %v2778 = vunpack.c.l.b16 %v382
  %v2779 = vunpack.c.h.b16 %v382
  %v2780 = vunpack.c.l.b16 %v383
  %v2781 = vunpack.c.h.b16 %v383
  %v2782 = vunpack.c.l.b16 %v384
  %v2783 = vunpack.c.h.b16 %v384
  %v2784 = vunpack.c.l.b16 %v385
  %v2785 = vunpack.c.h.b16 %v385
  %v2786 = vunpack.c.l.b16 %v386
  %v2787 = vunpack.c.h.b16 %v386
  %v2788 = vunpack.c.l.b16 %v387
  %v2789 = vunpack.c.h.b16 %v387
  %v2790 = vunpack.c.l.b16 %v388
  %v2791 = vunpack.c.h.b16 %v388
  %v2792 = vunpack.c.l.b16 %v389
  %v2793 = vunpack.c.h.b16 %v389
  %v2794 = vunpack.c.l.b16 %v390
  %v2795 = vunpack.c.h.b16 %v390
  %v2796 = vunpack.c.l.b16 %v391
  %v2797 = vunpack.c.h.b16 %v391
  %v2798 = vunpack.c.l.b16 %v392
  %v2799 = vunpack.c.h.b16 %v392
  %v2800 = vunpack.c.l.b16 %v393
  %v2801 = vunpack.c.h.b16 %v393
  %v2802 = vunpack.c.l.b16 %v394
  %v2803 = vunpack.c.h.b16 %v394
  %v2804 = vunpack.c.l.b16 %v395
  %v2805 = vunpack.c.h.b16 %v395
  %v2806 = vunpack.c.l.b16 %v396
  %v2807 = vunpack.c.h.b16 %v396
  %v2808 = vunpack.c.l.b16 %v397
  %v2809 = vunpack.c.h.b16 %v397
  %v2810 = vunpack.c.l.b16 %v398
  %v2811 = vunpack.c.h.b16 %v398
  %v2812 = vunpack.c.l.b16 %v399
  %v2813 = vunpack.c.h.b16 %v399
  %v2814 = vunpack.c.l.b16 %v400
  %v2815 = vunpack.c.h.b16 %v400
  %v2816 = vunpack.c.l.b16 %v401
  %v2817 = vunpack.c.h.b16 %v401
  %v2818 = vunpack.c.l.b16 %v402
  %v2819 = vunpack.c.h.b16 %v402
  %v2820 = vunpack.c.l.b16 %v403
  %v2821 = vunpack.c.h.b16 %v403
  %v2822 = vunpack.c.l.b16 %v404
  %v2823 = vunpack.c.h.b16 %v404
  %v2824 = vunpack.c.l.b16 %v405
  %v2825 = vunpack.c.h.b16 %v405
  %v2826 = vunpack.c.l.b16 %v406
  %v2827 = vunpack.c.h.b16 %v406
  %v2828 = vunpack.c.l.b16 %v407
  %v2829 = vunpack.c.h.b16 %v407
  %v2830 = vunpack.c.l.b16 %v408
  %v2831 = vunpack.c.h.b16 %v408
  %v2832 = vunpack.c.l.b16 %v409
  %v2833 = vunpack.c.h.b16 %v409
  %v2834 = vunpack.c.l.b16 %v410
  %v2835 = vunpack.c.h.b16 %v410
  %v2836 = vunpack.c.l.b16 %v411
  %v2837 = vunpack.c.h.b16 %v411
  %v2838 = vunpack.c.l.b16 %v412
  %v2839 = vunpack.c.h.b16 %v412
  %v2840 = vunpack.c.l.b16 %v413
  %v2841 = vunpack.c.h.b16 %v413
  %v2842 = vunpack.c.l.b16 %v414
  %v2843 = vunpack.c.h.b16 %v414
  %v2844 = vunpack.c.l.b16 %v415
  %v2845 = vunpack.c.h.b16 %v415
  %v2846 = vunpack.c.l.b16 %v416
  %v2847 = vunpack.c.h.b16 %v416
  %v2848 = vunpack.c.l.b16 %v417
  %v2849 = vunpack.c.h.b16 %v417
  %v2850 = vunpack.c.l.b16 %v418
  %v2851 = vunpack.c.h.b16 %v418
  %v2852 = vunpack.c.l.b16 %v419
  %v2853 = vunpack.c.h.b16 %v419
  %v2854 = vunpack.c.l.b16 %v420
  %v2855 = vunpack.c.h.b16 %v420
  %v2856 = vunpack.c.l.b16 %v421
  %v2857 = vunpack.c.h.b16 %v421
  %v2858 = vunpack.c.l.b16 %v422
  %v2859 = vunpack.c.h.b16 %v422
  %v2860 = vunpack.c.l.b16 %v423
  %v2861 = vunpack.c.h.b16 %v423
  %v2862 = vunpack.c.l.b16 %v424
  %v2863 = vunpack.c.h.b16 %v424
  %v2864 = vunpack.c.l.b16 %v425
  %v2865 = vunpack.c.h.b16 %v425
  %v2866 = vunpack.c.l.b16 %v426
  %v2867 = vunpack.c.h.b16 %v426
  %v2868 = vunpack.c.l.b16 %v427
  %v2869 = vunpack.c.h.b16 %v427
  %v2870 = vunpack.c.l.b16 %v428
  %v2871 = vunpack.c.h.b16 %v428
  %v2872 = vunpack.c.l.b16 %v429
  %v2873 = vunpack.c.h.b16 %v429
  %v2874 = vunpack.c.l.b16 %v430
  %v2875 = vunpack.c.h.b16 %v430
  %v2876 = vunpack.c.l.b16 %v431
  %v2877 = vunpack.c.h.b16 %v431
  %v2878 = vunpack.c.l.b16 %v432
  %v2879 = vunpack.c.h.b16 %v432
  %v2880 = vunpack.c.l.b16 %v433
  %v2881 = vunpack.c.h.b16 %v433
  %v2882 = vunpack.c.l.b16 %v434
  %v2883 = vunpack.c.h.b16 %v434
  %v2884 = vunpack.c.l.b16 %v435
  %v2885 = vunpack.c.h.b16 %v435
  %v2886 = vunpack.c.l.b16 %v436
  %v2887 = vunpack.c.h.b16 %v436
  %v2888 = vunpack.c.l.b16 %v437
  %v2889 = vunpack.c.h.b16 %v437
  %v2890 = vunpack.c.l.b16 %v438
  %v2891 = vunpack.c.h.b16 %v438
  %v2892 = vunpack.c.l.b16 %v439
  %v2893 = vunpack.c.h.b16 %v439
  %v2894 = vunpack.c.l.b16 %v440
  %v2895 = vunpack.c.h.b16 %v440
  %v2896 = vunpack.c.l.b16 %v441
  %v2897 = vunpack.c.h.b16 %v441
  %v2898 = vunpack.c.l.b16 %v442
  %v2899 = vunpack.c.h.b16 %v442
  %v2900 = vpack.c.b16 %v2648, %v2644
  %v2901 = vpack.c.b16 %v2649, %v2645
  %v2902 = vpack.c.b16 %v2650, %v2646
  %v2903 = vpack.c.b16 %v2651, %v2647
  %v2904 = vpack.c.b16 %v2656, %v2652
  %v2905 = vpack.c.b16 %v2657, %v2653
  %v2906 = vpack.c.b16 %v2658, %v2654
  %v2907 = vpack.c.b16 %v2659, %v2655
  %v2908 = vpack.c.b16 %v2664, %v2660
  %v2909 = vpack.c.b16 %v2665, %v2661
  %v2910 = vpack.c.b16 %v2666, %v2662
  %v2911 = vpack.c.b16 %v2667, %v2663
  %v2912 = vpack.c.b16 %v2672, %v2668
  %v2913 = vpack.c.b16 %v2673, %v2669
  %v2914 = vpack.c.b16 %v2674, %v2670
  %v2915 = vpack.c.b16 %v2675, %v2671
  %v2916 = vpack.c.b16 %v2680, %v2676
  %v2917 = vpack.c.b16 %v2681, %v2677
  %v2918 = vpack.c.b16 %v2682, %v2678
  %v2919 = vpack.c.b16 %v2683, %v2679
  %v2920 = vpack.c.b16 %v2688, %v2684
  %v2921 = vpack.c.b16 %v2689, %v2685
  %v2922 = vpack.c.b16 %v2690, %v2686
  %v2923 = vpack.c.b16 %v2691, %v2687
  %v2924 = vpack.c.b16 %v2696, %v2692
  %v2925 = vpack.c.b16 %v2697, %v2693
  %v2926 = vpack.c.b16 %v2698, %v2694
  %v2927 = vpack.c.b16 %v2699, %v2695
  %v2928 = vpack.c.b16 %v2704, %v2700
  %v2929 = vpack.c.b16 %v2705, %v2701
  %v2930 = vpack.c.b16 %v2706, %v2702
  %v2931 = vpack.c.b16 %v2707, %v2703
  %v2932 = vpack.c.b16 %v2712, %v2708
  %v2933 = vpack.c.b16 %v2713, %v2709
  %v2934 = vpack.c.b16 %v2714, %v2710
  %v2935 = vpack.c.b16 %v2715, %v2711
  %v2936 = vpack.c.b16 %v2720, %v2716
  %v2937 = vpack.c.b16 %v2721, %v2717
  %v2938 = vpack.c.b16 %v2722, %v2718
  %v2939 = vpack.c.b16 %v2723, %v2719
  %v2940 = vpack.c.b16 %v2728, %v2724
  %v2941 = vpack.c.b16 %v2729, %v2725
  %v2942 = vpack.c.b16 %v2730, %v2726
  %v2943 = vpack.c.b16 %v2731, %v2727
  %v2944 = vpack.c.b16 %v2736, %v2732
  %v2945 = vpack.c.b16 %v2737, %v2733
  %v2946 = vpack.c.b16 %v2738, %v2734
  %v2947 = vpack.c.b16 %v2739, %v2735
  %v2948 = vpack.c.b16 %v2744, %v2740
  %v2949 = vpack.c.b16 %v2745, %v2741
  %v2950 = vpack.c.b16 %v2746, %v2742
  %v2951 = vpack.c.b16 %v2747, %v2743
  %v2952 = vpack.c.b16 %v2752, %v2748
  %v2953 = vpack.c.b16 %v2753, %v2749
  %v2954 = vpack.c.b16 %v2754, %v2750
  %v2955 = vpack.c.b16 %v2755, %v2751
  %v2956 = vpack.c.b16 %v2760, %v2756
  %v2957 = vpack.c.b16 %v2761, %v2757
  %v2958 = vpack.c.b16 %v2762, %v2758
  %v2959 = vpack.c.b16 %v2763, %v2759
  %v2960 = vpack.c.b16 %v2768, %v2764
  %v2961 = vpack.c.b16 %v2769, %v2765
  %v2962 = vpack.c.b16 %v2770, %v2766
  %v2963 = vpack.c.b16 %v2771, %v2767
  %v2964 = vpack.c.b16 %v2776, %v2772
  %v2965 = vpack.c.b16 %v2777, %v2773
  %v2966 = vpack.c.b16 %v2778, %v2774
  %v2967 = vpack.c.b16 %v2779, %v2775
  %v2968 = vpack.c.b16 %v2784, %v2780
  %v2969 = vpack.c.b16 %v2785, %v2781
  %v2970 = vpack.c.b16 %v2786, %v2782
  %v2971 = vpack.c.b16 %v2787, %v2783
  %v2972 = vpack.c.b16 %v2792, %v2788
  %v2973 = vpack.c.b16 %v2793, %v2789
  %v2974 = vpack.c.b16 %v2794, %v2790
  %v2975 = vpack.c.b16 %v2795, %v2791
  %v2976 = vpack.c.b16 %v2800, %v2796
  %v2977 = vpack.c.b16 %v2801, %v2797
  %v2978 = vpack.c.b16 %v2802, %v2798
  %v2979 = vpack.c.b16 %v2803, %v2799
  %v2980 = vpack.c.b16 %v2808, %v2804
  %v2981 = vpack.c.b16 %v2809, %v2805
  %v2982 = vpack.c.b16 %v2810, %v2806
  %v2983 = vpack.c.b16 %v2811, %v2807
  %v2984 = vpack.c.b16 %v2816, %v2812
  %v2985 = vpack.c.b16 %v2817, %v2813
  %v2986 = vpack.c.b16 %v2818, %v2814
  %v2987 = vpack.c.b16 %v2819, %v2815
  %v2988 = vpack.c.b16 %v2824, %v2820
  %v2989 = vpack.c.b16 %v2825, %v2821
  %v2990 = vpack.c.b16 %v2826, %v2822
  %v2991 = vpack.c.b16 %v2827, %v2823
  %v2992 = vpack.c.b16 %v2832, %v2828
  %v2993 = vpack.c.b16 %v2833, %v2829
  %v2994 = vpack.c.b16 %v2834, %v2830
  %v2995 = vpack.c.b16 %v2835, %v2831
  %v2996 = vpack.c.b16 %v2840, %v2836
  %v2997 = vpack.c.b16 %v2841, %v2837
  %v2998 = vpack.c.b16 %v2842, %v2838
  %v2999 = vpack.c.b16 %v2843, %v2839
  %v3000 = vpack.c.b16 %v2848, %v2844
  %v3001 = vpack.c.b16 %v2849, %v2845
  %v3002 = vpack.c.b16 %v2850, %v2846
  %v3003 = vpack.c.b16 %v2851, %v2847
  %v3004 = vpack.c.b16 %v2856, %v2852
  %v3005 = vpack.c.b16 %v2857, %v2853
  %v3006 = vpack.c.b16 %v2858, %v2854
  %v3007 = vpack.c.b16 %v2859, %v2855
  %v3008 = vpack.c.b16 %v2864, %v2860
  %v3009 = vpack.c.b16 %v2865, %v2861
  %v3010 = vpack.c.b16 %v2866, %v2862
  %v3011 = vpack.c.b16 %v2867, %v2863
  %v3012 = vpack.c.b16 %v2872, %v2868
  %v3013 = vpack.c.b16 %v2873, %v2869
  %v3014 = vpack.c.b16 %v2874, %v2870
  %v3015 = vpack.c.b16 %v2875, %v2871
  %v3016 = vpack.c.b16 %v2880, %v2876
  %v3017 = vpack.c.b16 %v2881, %v2877
  %v3018 = vpack.c.b16 %v2882, %v2878
  %v3019 = vpack.c.b16 %v2883, %v2879
  %v3020 = vpack.c.b16 %v2888, %v2884
  %v3021 = vpack.c.b16 %v2889, %v2885
  %v3022 = vpack.c.b16 %v2890, %v2886
  %v3023 = vpack.c.b16 %v2891, %v2887
  %v3024 = vpack.c.b16 %v2896, %v2892
  %v3025 = vpack.c.b16 %v2897, %v2893
  %v3026 = vpack.c.b16 %v2898, %v2894
  %v3027 = vpack.c.b16 %v2899, %v2895
  %3156 = vmatprep.subr.bf16.mxu0 %v2901
  %3157 = vmatpush1.bf16.msra.mxu0 %v2900
  %3158 = vmatprep.subr.bf16.mxu0 %v2905
  %3159 = vmatpush1.bf16.msra.mxu0 %v2904
  %3160 = vmatprep.subr.bf16.mxu0 %v2909
  %3161 = vmatpush1.bf16.msra.mxu0 %v2908
  %3162 = vmatprep.subr.bf16.mxu0 %v2913
  %3163 = vmatpush1.bf16.msra.mxu0 %v2912
  %3164 = vmatprep.subr.bf16.mxu0 %v2917
  %3165 = vmatpush1.bf16.msra.mxu0 %v2916
  %3166 = vmatprep.subr.bf16.mxu0 %v2921
  %3167 = vmatpush1.bf16.msra.mxu0 %v2920
  %3168 = vmatprep.subr.bf16.mxu0 %v2925
  %3169 = vmatpush1.bf16.msra.mxu0 %v2924
  %3170 = vmatprep.subr.bf16.mxu0 %v2929
  %3171 = vmatpush1.bf16.msra.mxu0 %v2928
  %3172 = vmatprep.subr.bf16.mxu0 %v2933
  %3173 = vmatpush1.bf16.msra.mxu0 %v2932
  %3174 = vmatprep.subr.bf16.mxu0 %v2937
  %3175 = vmatpush1.bf16.msra.mxu0 %v2936
  %3176 = vmatprep.subr.bf16.mxu0 %v2941
  %3177 = vmatpush1.bf16.msra.mxu0 %v2940
  %3178 = vmatprep.subr.bf16.mxu0 %v2945
  %3179 = vmatpush1.bf16.msra.mxu0 %v2944
  %3180 = vmatprep.subr.bf16.mxu0 %v2949
  %3181 = vmatpush1.bf16.msra.mxu0 %v2948
  %3182 = vmatprep.subr.bf16.mxu0 %v2953
  %3183 = vmatpush1.bf16.msra.mxu0 %v2952
  %3184 = vmatprep.subr.bf16.mxu0 %v2957
  %3185 = vmatpush1.bf16.msra.mxu0 %v2956
  %3186 = vmatprep.subr.bf16.mxu0 %v2961
  %3187 = vmatpush1.bf16.msra.mxu0 %v2960
  %3188 = vmatprep.mubr.bf16.mxu0 %v2491
  %3189 = vmatmul.mubr.bf16.gmra.mrb[0].mxu0 %v2490
  %v3190 = vpop.f32.mrb[0].mxu0
  %v3191 = vadd.f32 %v2499, %v3190
  %v3192 = vpop.f32.mrb[0].mxu0
  %v3193 = vadd.f32 %v2503, %v3192
  %v3194 = vpop.f32.mrb[0].mxu0
  %v3195 = vadd.f32 %v2499, %v3194
  %v3196 = vpop.f32.mrb[0].mxu0
  %v3197 = vadd.f32 %v2503, %v3196
  %3198 = vdwg.mxu0
  %3199 = vmatprep.subr.bf16.mxu0 %v2965
  %3200 = vmatpush1.bf16.msra.mxu0 %v2964
  %3201 = vmatprep.subr.bf16.mxu0 %v2969
  %3202 = vmatpush1.bf16.msra.mxu0 %v2968
  %3203 = vmatprep.subr.bf16.mxu0 %v2973
  %3204 = vmatpush1.bf16.msra.mxu0 %v2972
  %3205 = vmatprep.subr.bf16.mxu0 %v2977
  %3206 = vmatpush1.bf16.msra.mxu0 %v2976
  %3207 = vmatprep.subr.bf16.mxu0 %v2981
  %3208 = vmatpush1.bf16.msra.mxu0 %v2980
  %3209 = vmatprep.subr.bf16.mxu0 %v2985
  %3210 = vmatpush1.bf16.msra.mxu0 %v2984
  %3211 = vmatprep.subr.bf16.mxu0 %v2989
  %3212 = vmatpush1.bf16.msra.mxu0 %v2988
  %3213 = vmatprep.subr.bf16.mxu0 %v2993
  %3214 = vmatpush1.bf16.msra.mxu0 %v2992
  %3215 = vmatprep.subr.bf16.mxu0 %v2997
  %3216 = vmatpush1.bf16.msra.mxu0 %v2996
  %3217 = vmatprep.subr.bf16.mxu0 %v3001
  %3218 = vmatpush1.bf16.msra.mxu0 %v3000
  %3219 = vmatprep.subr.bf16.mxu0 %v3005
  %3220 = vmatpush1.bf16.msra.mxu0 %v3004
  %3221 = vmatprep.subr.bf16.mxu0 %v3009
  %3222 = vmatpush1.bf16.msra.mxu0 %v3008
  %3223 = vmatprep.subr.bf16.mxu0 %v3013
  %3224 = vmatpush1.bf16.msra.mxu0 %v3012
  %3225 = vmatprep.subr.bf16.mxu0 %v3017
  %3226 = vmatpush1.bf16.msra.mxu0 %v3016
  %3227 = vmatprep.subr.bf16.mxu0 %v3021
  %3228 = vmatpush1.bf16.msra.mxu0 %v3020
  %3229 = vmatprep.subr.bf16.mxu0 %v3025
  %3230 = vmatpush1.bf16.msra.mxu0 %v3024
  %3231 = vmatprep.mubr.bf16.mxu0 %v2493
  %3232 = vmatmul.mubr.bf16.gmra.mrb[0].mxu0 %v2492
  %v3233 = vpop.f32.mrb[0].mxu0
  %v3234 = vadd.f32 %v3191, %v3233
  %v3235 = vpop.f32.mrb[0].mxu0
  %v3236 = vadd.f32 %v3193, %v3235
  %v3237 = vpop.f32.mrb[0].mxu0
  %v3238 = vadd.f32 %v3195, %v3237
  %v3239 = vpop.f32.mrb[0].mxu0
  %v3240 = vadd.f32 %v3197, %v3239
  %3241 = vdwg.mxu0
  %3242 = vmatprep.subr.bf16.mxu0 %v2903
  %3243 = vmatpush1.bf16.msra.mxu0 %v2902
  %3244 = vmatprep.subr.bf16.mxu0 %v2907
  %3245 = vmatpush1.bf16.msra.mxu0 %v2906
  %3246 = vmatprep.subr.bf16.mxu0 %v2911
  %3247 = vmatpush1.bf16.msra.mxu0 %v2910
  %3248 = vmatprep.subr.bf16.mxu0 %v2915
  %3249 = vmatpush1.bf16.msra.mxu0 %v2914
  %3250 = vmatprep.subr.bf16.mxu0 %v2919
  %3251 = vmatpush1.bf16.msra.mxu0 %v2918
  %3252 = vmatprep.subr.bf16.mxu0 %v2923
  %3253 = vmatpush1.bf16.msra.mxu0 %v2922
  %3254 = vmatprep.subr.bf16.mxu0 %v2927
  %3255 = vmatpush1.bf16.msra.mxu0 %v2926
  %3256 = vmatprep.subr.bf16.mxu0 %v2931
  %3257 = vmatpush1.bf16.msra.mxu0 %v2930
  %3258 = vmatprep.subr.bf16.mxu0 %v2935
  %3259 = vmatpush1.bf16.msra.mxu0 %v2934
  %3260 = vmatprep.subr.bf16.mxu0 %v2939
  %3261 = vmatpush1.bf16.msra.mxu0 %v2938
  %3262 = vmatprep.subr.bf16.mxu0 %v2943
  %3263 = vmatpush1.bf16.msra.mxu0 %v2942
  %3264 = vmatprep.subr.bf16.mxu0 %v2947
  %3265 = vmatpush1.bf16.msra.mxu0 %v2946
  %3266 = vmatprep.subr.bf16.mxu0 %v2951
  %3267 = vmatpush1.bf16.msra.mxu0 %v2950
  %3268 = vmatprep.subr.bf16.mxu0 %v2955
  %3269 = vmatpush1.bf16.msra.mxu0 %v2954
  %3270 = vmatprep.subr.bf16.mxu0 %v2959
  %3271 = vmatpush1.bf16.msra.mxu0 %v2958
  %3272 = vmatprep.subr.bf16.mxu0 %v2963
  %3273 = vmatpush1.bf16.msra.mxu0 %v2962
  %3274 = vmatprep.mubr.bf16.mxu0 %v2491
  %3275 = vmatmul.mubr.bf16.gmra.mrb[0].mxu0 %v2490
  %v3276 = vpop.f32.mrb[0].mxu0
  %v3277 = vadd.f32 %v2507, %v3276
  %v3278 = vpop.f32.mrb[0].mxu0
  %v3279 = vadd.f32 %v2511, %v3278
  %v3280 = vpop.f32.mrb[0].mxu0
  %v3281 = vadd.f32 %v2507, %v3280
  %v3282 = vpop.f32.mrb[0].mxu0
  %v3283 = vadd.f32 %v2511, %v3282
  %3284 = vdwg.mxu0
  %3285 = vmatprep.subr.bf16.mxu0 %v2967
  %3286 = vmatpush1.bf16.msra.mxu0 %v2966
  %3287 = vmatprep.subr.bf16.mxu0 %v2971
  %3288 = vmatpush1.bf16.msra.mxu0 %v2970
  %3289 = vmatprep.subr.bf16.mxu0 %v2975
  %3290 = vmatpush1.bf16.msra.mxu0 %v2974
  %3291 = vmatprep.subr.bf16.mxu0 %v2979
  %3292 = vmatpush1.bf16.msra.mxu0 %v2978
  %3293 = vmatprep.subr.bf16.mxu0 %v2983
  %3294 = vmatpush1.bf16.msra.mxu0 %v2982
  %3295 = vmatprep.subr.bf16.mxu0 %v2987
  %3296 = vmatpush1.bf16.msra.mxu0 %v2986
  %3297 = vmatprep.subr.bf16.mxu0 %v2991
  %3298 = vmatpush1.bf16.msra.mxu0 %v2990
  %3299 = vmatprep.subr.bf16.mxu0 %v2995
  %3300 = vmatpush1.bf16.msra.mxu0 %v2994
  %3301 = vmatprep.subr.bf16.mxu0 %v2999
  %3302 = vmatpush1.bf16.msra.mxu0 %v2998
  %3303 = vmatprep.subr.bf16.mxu0 %v3003
  %3304 = vmatpush1.bf16.msra.mxu0 %v3002
  %3305 = vmatprep.subr.bf16.mxu0 %v3007
  %3306 = vmatpush1.bf16.msra.mxu0 %v3006
  %3307 = vmatprep.subr.bf16.mxu0 %v3011
  %3308 = vmatpush1.bf16.msra.mxu0 %v3010
  %3309 = vmatprep.subr.bf16.mxu0 %v3015
  %3310 = vmatpush1.bf16.msra.mxu0 %v3014
  %3311 = vmatprep.subr.bf16.mxu0 %v3019
  %3312 = vmatpush1.bf16.msra.mxu0 %v3018
  %3313 = vmatprep.subr.bf16.mxu0 %v3023
  %3314 = vmatpush1.bf16.msra.mxu0 %v3022
  %3315 = vmatprep.subr.bf16.mxu0 %v3027
  %3316 = vmatpush1.bf16.msra.mxu0 %v3026
  %3317 = vmatprep.mubr.bf16.mxu0 %v2493
  %3318 = vmatmul.mubr.bf16.gmra.mrb[0].mxu0 %v2492
  %v3319 = vpop.f32.mrb[0].mxu0
  %v3320 = vadd.f32 %v3277, %v3319
  %v3321 = vpop.f32.mrb[0].mxu0
  %v3322 = vadd.f32 %v3279, %v3321
  %v3323 = vpop.f32.mrb[0].mxu0
  %v3324 = vadd.f32 %v3281, %v3323
  %v3325 = vpop.f32.mrb[0].mxu0
  %v3326 = vadd.f32 %v3283, %v3325
  %3327 = vdwg.mxu0
  %v3328 = vmax.f32 %v3234, 0.0
  %v3329 = vmax.f32 %v3236, 0.0
  %v3330 = vmax.f32 %v3320, 0.0
  %v3331 = vmax.f32 %v3322, 0.0
  %v3332 = vmax.f32 %v3238, 0.0
  %v3333 = vmax.f32 %v3240, 0.0
  %v3334 = vmax.f32 %v3324, 0.0
  %v3335 = vmax.f32 %v3326, 0.0
  %v3336 = vpack.c.bf16 %v3332, %v3328
  %v3337 = vpack.c.bf16 %v3333, %v3329
  %v3338 = vpack.c.bf16 %v3334, %v3330
  %v3339 = vpack.c.bf16 %v3335, %v3331
  %v3340 = vld [vmem:[%s12] sm:$0x1]
  %v3342 = vlaneseq
  %v3343 = vshrl.u32 %v3342, 7
  %v3344 = vsub.s32 0, %v3343
  %v3345 = vrot.slane %v3340, %v3344
  %v3411 = vunpack.c.l.b16 %v443
  %v3412 = vunpack.c.l.b16 %v444
  %v3413 = vunpack.c.l.b16 %v445
  %v3414 = vunpack.c.l.b16 %v446
  %v3415 = vunpack.c.l.b16 %v447
  %v3416 = vunpack.c.l.b16 %v448
  %v3417 = vunpack.c.l.b16 %v449
  %v3418 = vunpack.c.l.b16 %v450
  %v3419 = vunpack.c.l.b16 %v451
  %v3420 = vunpack.c.l.b16 %v452
  %v3421 = vunpack.c.l.b16 %v453
  %v3422 = vunpack.c.l.b16 %v454
  %v3423 = vunpack.c.l.b16 %v455
  %v3424 = vunpack.c.l.b16 %v456
  %v3425 = vunpack.c.l.b16 %v457
  %v3426 = vunpack.c.l.b16 %v458
  %v3427 = vunpack.c.l.b16 %v459
  %v3428 = vunpack.c.l.b16 %v460
  %v3429 = vunpack.c.l.b16 %v461
  %v3430 = vunpack.c.l.b16 %v462
  %v3431 = vunpack.c.l.b16 %v463
  %v3432 = vunpack.c.l.b16 %v464
  %v3433 = vunpack.c.l.b16 %v465
  %v3434 = vunpack.c.l.b16 %v466
  %v3435 = vunpack.c.l.b16 %v467
  %v3436 = vunpack.c.l.b16 %v468
  %v3437 = vunpack.c.l.b16 %v469
  %v3438 = vunpack.c.l.b16 %v470
  %v3439 = vunpack.c.l.b16 %v471
  %v3440 = vunpack.c.l.b16 %v472
  %v3441 = vunpack.c.l.b16 %v473
  %v3442 = vunpack.c.l.b16 %v474
  %v3443 = vunpack.c.l.b16 %v475
  %v3444 = vunpack.c.l.b16 %v476
  %v3445 = vunpack.c.l.b16 %v477
  %v3446 = vunpack.c.l.b16 %v478
  %v3447 = vunpack.c.l.b16 %v479
  %v3448 = vunpack.c.l.b16 %v480
  %v3449 = vunpack.c.l.b16 %v481
  %v3450 = vunpack.c.l.b16 %v482
  %v3451 = vunpack.c.l.b16 %v483
  %v3452 = vunpack.c.l.b16 %v484
  %v3453 = vunpack.c.l.b16 %v485
  %v3454 = vunpack.c.l.b16 %v486
  %v3455 = vunpack.c.l.b16 %v487
  %v3456 = vunpack.c.l.b16 %v488
  %v3457 = vunpack.c.l.b16 %v489
  %v3458 = vunpack.c.l.b16 %v490
  %v3459 = vunpack.c.l.b16 %v491
  %v3460 = vunpack.c.l.b16 %v492
  %v3461 = vunpack.c.l.b16 %v493
  %v3462 = vunpack.c.l.b16 %v494
  %v3463 = vunpack.c.l.b16 %v495
  %v3464 = vunpack.c.l.b16 %v496
  %v3465 = vunpack.c.l.b16 %v497
  %v3466 = vunpack.c.l.b16 %v498
  %v3467 = vunpack.c.l.b16 %v499
  %v3468 = vunpack.c.l.b16 %v500
  %v3469 = vunpack.c.l.b16 %v501
  %v3470 = vunpack.c.l.b16 %v502
  %v3471 = vunpack.c.l.b16 %v503
  %v3472 = vunpack.c.l.b16 %v504
  %v3473 = vunpack.c.l.b16 %v505
  %v3474 = vunpack.c.l.b16 %v506
  %v3475 = vpack.c.b16 %v3412, %v3411
  %v3476 = vpack.c.b16 %v3414, %v3413
  %v3477 = vpack.c.b16 %v3416, %v3415
  %v3478 = vpack.c.b16 %v3418, %v3417
  %v3479 = vpack.c.b16 %v3420, %v3419
  %v3480 = vpack.c.b16 %v3422, %v3421
  %v3481 = vpack.c.b16 %v3424, %v3423
  %v3482 = vpack.c.b16 %v3426, %v3425
  %v3483 = vpack.c.b16 %v3428, %v3427
  %v3484 = vpack.c.b16 %v3430, %v3429
  %v3485 = vpack.c.b16 %v3432, %v3431
  %v3486 = vpack.c.b16 %v3434, %v3433
  %v3487 = vpack.c.b16 %v3436, %v3435
  %v3488 = vpack.c.b16 %v3438, %v3437
  %v3489 = vpack.c.b16 %v3440, %v3439
  %v3490 = vpack.c.b16 %v3442, %v3441
  %v3491 = vpack.c.b16 %v3444, %v3443
  %v3492 = vpack.c.b16 %v3446, %v3445
  %v3493 = vpack.c.b16 %v3448, %v3447
  %v3494 = vpack.c.b16 %v3450, %v3449
  %v3495 = vpack.c.b16 %v3452, %v3451
  %v3496 = vpack.c.b16 %v3454, %v3453
  %v3497 = vpack.c.b16 %v3456, %v3455
  %v3498 = vpack.c.b16 %v3458, %v3457
  %v3499 = vpack.c.b16 %v3460, %v3459
  %v3500 = vpack.c.b16 %v3462, %v3461
  %v3501 = vpack.c.b16 %v3464, %v3463
  %v3502 = vpack.c.b16 %v3466, %v3465
  %v3503 = vpack.c.b16 %v3468, %v3467
  %v3504 = vpack.c.b16 %v3470, %v3469
  %v3505 = vpack.c.b16 %v3472, %v3471
  %v3506 = vpack.c.b16 %v3474, %v3473
  %3539 = vmatprep.subr.bf16.mxu0 0
  %3540 = vmatpush1.bf16.msra.mxu0 %v3475
  %3541 = vmatprep.subr.bf16.mxu0 0
  %3542 = vmatpush1.bf16.msra.mxu0 %v3476
  %3543 = vmatprep.subr.bf16.mxu0 0
  %3544 = vmatpush1.bf16.msra.mxu0 %v3477
  %3545 = vmatprep.subr.bf16.mxu0 0
  %3546 = vmatpush1.bf16.msra.mxu0 %v3478
  %3547 = vmatprep.subr.bf16.mxu0 0
  %3548 = vmatpush1.bf16.msra.mxu0 %v3479
  %3549 = vmatprep.subr.bf16.mxu0 0
  %3550 = vmatpush1.bf16.msra.mxu0 %v3480
  %3551 = vmatprep.subr.bf16.mxu0 0
  %3552 = vmatpush1.bf16.msra.mxu0 %v3481
  %3553 = vmatprep.subr.bf16.mxu0 0
  %3554 = vmatpush1.bf16.msra.mxu0 %v3482
  %3555 = vmatprep.subr.bf16.mxu0 0
  %3556 = vmatpush1.bf16.msra.mxu0 %v3483
  %3557 = vmatprep.subr.bf16.mxu0 0
  %3558 = vmatpush1.bf16.msra.mxu0 %v3484
  %3559 = vmatprep.subr.bf16.mxu0 0
  %3560 = vmatpush1.bf16.msra.mxu0 %v3485
  %3561 = vmatprep.subr.bf16.mxu0 0
  %3562 = vmatpush1.bf16.msra.mxu0 %v3486
  %3563 = vmatprep.subr.bf16.mxu0 0
  %3564 = vmatpush1.bf16.msra.mxu0 %v3487
  %3565 = vmatprep.subr.bf16.mxu0 0
  %3566 = vmatpush1.bf16.msra.mxu0 %v3488
  %3567 = vmatprep.subr.bf16.mxu0 0
  %3568 = vmatpush1.bf16.msra.mxu0 %v3489
  %3569 = vmatprep.subr.bf16.mxu0 0
  %3570 = vmatpush1.bf16.msra.mxu0 %v3490
  %3571 = vmatprep.mubr.bf16.mxu0 %v3337
  %3572 = vmatmul.mubr.bf16.gmra.mrb[0].mxu0 %v3336
  %v3573 = vpop.f32.mrb[0].mxu0
  %v3574 = vadd.f32 %v3345, %v3573
  %v3575 = vpop.f32.mrb[0].mxu0
  %v3576 = vpop.f32.mrb[0].mxu0
  %v3577 = vadd.f32 %v3345, %v3576
  %v3578 = vpop.f32.mrb[0].mxu0
  %3579 = vdwg.mxu0
  %3580 = vmatprep.subr.bf16.mxu0 0
  %3581 = vmatpush1.bf16.msra.mxu0 %v3491
  %3582 = vmatprep.subr.bf16.mxu0 0
  %3583 = vmatpush1.bf16.msra.mxu0 %v3492
  %3584 = vmatprep.subr.bf16.mxu0 0
  %3585 = vmatpush1.bf16.msra.mxu0 %v3493
  %3586 = vmatprep.subr.bf16.mxu0 0
  %3587 = vmatpush1.bf16.msra.mxu0 %v3494
  %3588 = vmatprep.subr.bf16.mxu0 0
  %3589 = vmatpush1.bf16.msra.mxu0 %v3495
  %3590 = vmatprep.subr.bf16.mxu0 0
  %3591 = vmatpush1.bf16.msra.mxu0 %v3496
  %3592 = vmatprep.subr.bf16.mxu0 0
  %3593 = vmatpush1.bf16.msra.mxu0 %v3497
  %3594 = vmatprep.subr.bf16.mxu0 0
  %3595 = vmatpush1.bf16.msra.mxu0 %v3498
  %3596 = vmatprep.subr.bf16.mxu0 0
  %3597 = vmatpush1.bf16.msra.mxu0 %v3499
  %3598 = vmatprep.subr.bf16.mxu0 0
  %3599 = vmatpush1.bf16.msra.mxu0 %v3500
  %3600 = vmatprep.subr.bf16.mxu0 0
  %3601 = vmatpush1.bf16.msra.mxu0 %v3501
  %3602 = vmatprep.subr.bf16.mxu0 0
  %3603 = vmatpush1.bf16.msra.mxu0 %v3502
  %3604 = vmatprep.subr.bf16.mxu0 0
  %3605 = vmatpush1.bf16.msra.mxu0 %v3503
  %3606 = vmatprep.subr.bf16.mxu0 0
  %3607 = vmatpush1.bf16.msra.mxu0 %v3504
  %3608 = vmatprep.subr.bf16.mxu0 0
  %3609 = vmatpush1.bf16.msra.mxu0 %v3505
  %3610 = vmatprep.subr.bf16.mxu0 0
  %3611 = vmatpush1.bf16.msra.mxu0 %v3506
  %3612 = vmatprep.mubr.bf16.mxu0 %v3339
  %3613 = vmatmul.mubr.bf16.gmra.mrb[0].mxu0 %v3338
  %v3614 = vpop.f32.mrb[0].mxu0
  %v3615 = vadd.f32 %v3574, %v3614
  %v3616 = vpop.f32.mrb[0].mxu0
  %v3617 = vpop.f32.mrb[0].mxu0
  %v3618 = vadd.f32 %v3577, %v3617
  %v3619 = vpop.f32.mrb[0].mxu0
  %3620 = vdwg.mxu0
  %3621 = vst [vmem:[%s13] sm:$0xff] %v3615
  %3622 = vst [vmem:[%s13 + $0x8] sm:$0xff] %v3618
  // Predicated region
  $region54: #{_critic_forward.1} parent=0 // pred_check
    _
  $region55: #{_critic_forward.1} parent=0 // pred_check_branch
    %3624 = sbr.rel (0) target = $region57
  $region56: #{_critic_forward.1} parent=0 // pred_region
    _
  $region57: #{_critic_forward.1} parent=0 // pred_fallthru
    _
  // Predicated region
  $region58: #{_critic_forward.1} parent=0 // pred_check
    _
  $region59: #{_critic_forward.1} parent=0 // pred_check_branch
    %3626 = sbr.rel (0) target = $region61
  $region60: #{_critic_forward.1} parent=0 // pred_region
    _
  $region61: #{_critic_forward.1} parent=0 // pred_fallthru
    _

</llo_original>
